<compile_context>
chip_gen: v7x
topology: tpu7x:2x2x1
jax: 0.10.0
libtpu: 0.0.40
codegen_flags: <defaults>
</compile_context>

<pallas_src>
import functools

import jax
import jax.numpy as jnp
from jax.experimental import pallas as pl
from jax.experimental.pallas import tpu as pltpu


# ----------------------------- Pallas kernel -----------------------------
def _distil_heads_kernel(x_ref,
                         w1_ref, b1_ref,
                         sw2_ref, sb2_ref,
                         tw2_ref, tb2_ref,
                         s_out_ref, t_out_ref,
                         *, s_inner):
    """Fused student+teacher MLP heads on one row-tile of x.

      h = gelu_tanh(x @ [Ws1 | Wt1] + [bs1 | bt1])   # one wide dot, one GELU pass
      s = h[:, :s_inner] @ Ws2 + bs2
      t = h[:, s_inner:] @ Wt2 + bt2
    """
    x_bf16 = x_ref[...].astype(jnp.bfloat16)  # no-op when x is already bf16

    # Layer 1: single wide MXU matmul (N = s_inner + t_inner), f32 accumulation.
    h = jnp.dot(x_bf16, w1_ref[...], preferred_element_type=jnp.float32)
    h = h + b1_ref[...]
    # tanh-approx GELU: transcendental routed to the otherwise-idle EUP slot.
    h = jax.nn.gelu(h, approximate=True)
    # NOTE: elementwise math kept in f32 so the kernel stays fast/correct on v5e
    # (no bf16 VPU/EUP); on v6e/v7x this region could run in bf16 for 2x VALU packing.
    h_bf16 = h.astype(jnp.bfloat16)

    # Layer 2: slice the shared hidden activation (slice point is a 128 multiple, so
    # the slices are lane-tile aligned — no layout copy).
    h_s = h_bf16[:, :s_inner]
    h_t = h_bf16[:, s_inner:]
    s = jnp.dot(h_s, sw2_ref[...], preferred_element_type=jnp.float32) + sb2_ref[...]
    t = jnp.dot(h_t, tw2_ref[...], preferred_element_type=jnp.float32) + tb2_ref[...]
    s_out_ref[...] = s.astype(s_out_ref.dtype)
    t_out_ref[...] = t.astype(t_out_ref.dtype)


def _vmem_limit_bytes(tm, H, inner_total, s_inner, vs, t_inner, vt,
                      x_itemsize, out_itemsize):
    """Per-call VMEM budget derived from the actual footprint (review item)."""
    f32, bf16 = 4, 2
    streamed = tm * H * x_itemsize + tm * (vs + vt) * out_itemsize
    resident = ((H * inner_total + s_inner * vs + t_inner * vt) * bf16
                + (inner_total + vs + vt) * f32)
    # Every BlockSpec operand is double-buffered by default; extra 2x margin for
    # compiler scratch/spills.  Clamp so it stays well under v7x's 64 MiB physical
    # VMEM while never artificially constraining tm on v5e/v6e (128 MiB).
    need = 2 * (streamed + resident)
    return int(min(40 * 2 ** 20, max(16 * 2 ** 20, 2 * need)))


def pack_distil_params(student_params, teacher_params):
    """One-time packing (done at model init, not per forward): concat first layers."""
    return {
        "w1": jnp.concatenate([student_params["w1"], teacher_params["w1"]], axis=1),
        "b1": jnp.concatenate([student_params["b1"], teacher_params["b1"]], axis=1),
        "s_inner": int(student_params["w1"].shape[1]),
        "sw2": student_params["w2"], "sb2": student_params["b2"],
        "tw2": teacher_params["w2"], "tb2": teacher_params["b2"],
    }


def distil_heads(x2d, packed, *, tm=256, out_dtype=jnp.float32):
    """x2d: [M, H] -> (student_logits [M, Vs], teacher_logits [M, Vt])."""
    M, H = x2d.shape
    s_inner = packed["s_inner"]
    inner_total = packed["w1"].shape[1]
    t_inner = inner_total - s_inner
    vs = packed["sw2"].shape[1]
    vt = packed["tw2"].shape[1]

    # Pad rows up to a multiple of the row tile so the grid tiles cleanly.
    m_padded = pl.cdiv(M, tm) * tm
    if m_padded != M:
        # TODO(synk): at scale, handle a ragged last tile instead of materializing a
        # padded copy of x (padded rows compute gelu(b1) garbage that is sliced off).
        x2d = jnp.pad(x2d, ((0, m_padded - M), (0, 0)))
    grid = (m_padded // tm,)

    def resident(shape):
        # Constant (0,0) index map -> block stays VMEM-resident across the grid
        # (no re-DMA per row tile).
        return pl.BlockSpec(shape, lambda i: (0, 0))

    in_specs = [
        pl.BlockSpec((tm, H), lambda i: (i, 0)),              # x row tile (streamed)
        resident((H, inner_total)), resident((1, inner_total)),  # packed W1 | b1
        resident((s_inner, vs)), resident((1, vs)),              # student W2 | b2
        resident((t_inner, vt)), resident((1, vt)),              # teacher W2 | b2
    ]
    out_specs = (
        pl.BlockSpec((tm, vs), lambda i: (i, 0)),
        pl.BlockSpec((tm, vt), lambda i: (i, 0)),
    )
    out_shape = (
        jax.ShapeDtypeStruct((m_padded, vs), out_dtype),
        jax.ShapeDtypeStruct((m_padded, vt), out_dtype),
    )

    vmem_limit = _vmem_limit_bytes(
        tm, H, inner_total, s_inner, vs, t_inner, vt,
        jnp.dtype(x2d.dtype).itemsize, jnp.dtype(out_dtype).itemsize)

    s_out, t_out = pl.pallas_call(
        functools.partial(_distil_heads_kernel, s_inner=s_inner),
        grid=grid,
        in_specs=in_specs,
        out_specs=out_specs,
        out_shape=out_shape,
        compiler_params=pltpu.CompilerParams(
            # Row axis is independent -> shards across v7x's two TensorCores.
            dimension_semantics=("parallel",),
            vmem_limit_bytes=vmem_limit,
        ),
    )(x2d, packed["w1"], packed["b1"],
      packed["sw2"], packed["sb2"], packed["tw2"], packed["tb2"])

    return s_out[:M], t_out[:M]


# ----------------------------- Sub-models -----------------------------
def make_mlp_params(key, hidden, inner, vocab,
                    weight_dtype=jnp.bfloat16, bias_dtype=jnp.float32):
    """2-layer MLP head params. Weights bf16 (MXU inputs), biases f32."""
    k1, k2, k3, k4 = jax.random.split(key, 4)
    return {
        "w1": (jax.random.normal(k1, (hidden, inner), jnp.float32)
               / jnp.sqrt(hidden)).astype(weight_dtype),
        "b1": (jax.random.normal(k2, (1, inner), jnp.float32) * 0.01
               ).astype(bias_dtype),
        "w2": (jax.random.normal(k3, (inner, vocab), jnp.float32)
               / jnp.sqrt(inner)).astype(weight_dtype),
        "b2": (jax.random.normal(k4, (1, vocab), jnp.float32) * 0.01
               ).astype(bias_dtype),
    }


# ----------------------------- DistilModel wrapper -----------------------------
class DistilModelJAX:
    """JAX/Pallas port of DistilModel.forward semantics (fused student+teacher)."""

    def __init__(self, student_params, teacher_params, *, tm=256):
        self.student_params = student_params
        # Teacher is frozen (eval + requires_grad_(False) in torch) -> stop_gradient.
        self.teacher_params = jax.tree_util.tree_map(jax.lax.stop_gradient,
                                                     teacher_params)
        self._packed = pack_distil_params(self.student_params, self.teacher_params)
        self._tm = tm

    def forward(self, x, **kwargs):
        x = dict(x)
        if "return_loss" in x:
            del x["return_loss"]
        x.update(kwargs)
        inputs_embeds = x["inputs_embeds"]
        B, S, H = inputs_embeds.shape
        x2d = inputs_embeds.reshape(B * S, H)

        # Single fused kernel: reads x once, writes both logits.
        s2d, t2d = distil_heads(x2d, self._packed, tm=self._tm)

        student_output = s2d.reshape(B, S, -1)
        teacher_output = jax.lax.stop_gradient(t2d.reshape(B, S, -1))
        # TODO(synk): training through this fused forward needs a custom_vjp with a
        # backward Pallas kernel (only the student path requires gradients).
        return (student_output, teacher_output)

    # Optimizer-facing API mirrors: only the student's params are trainable.
    def parameters(self):
        return jax.tree_util.tree_leaves(self.student_params)

    def named_parameters(self, prefix=""):
        flat = jax.tree_util.tree_flatten_with_path(self.student_params)[0]
        return [(prefix + jax.tree_util.keystr(k), v) for k, v in flat]

    # TODO(synk): train()/eval() mode switching and _keys_to_ignore_on_save checkpoint
    # filtering are torch-framework concerns with no Pallas equivalent.


# ----------------------------- Reference (pure JAX) -----------------------------
def _mlp_head_ref(params, x2d):
    """Mirrors the kernel math (bf16 MXU inputs, f32 accumulate, tanh GELU)."""
    xf = x2d.astype(jnp.float32)
    h = xf @ params["w1"].astype(jnp.float32) + params["b1"]
    h = jax.nn.gelu(h, approximate=True)
    hb = h.astype(jnp.bfloat16).astype(jnp.float32)
    return hb @ params["w2"].astype(jnp.float32) + params["b2"]


# ----------------------------- Main -----------------------------
if __name__ == "__main__":
    key = jax.random.PRNGKey(0)
    k_in, k_student, k_teacher = jax.random.split(key, 3)

    # Lane-aligned (multiples of 128) small shapes; M = B*S = 512 -> grid of 2 row
    # tiles of 256 (keeps both v7x TensorCores busy while amortizing per-step cost).
    B, S, H = 4, 128, 128
    VOCAB = 128
    STUDENT_INNER = 256
    TEACHER_INNER = 512       # teacher is larger

    # Upstream embedding producer emits bf16 directly -> half the x DMA bytes and no
    # in-kernel cast (the kernel still accepts f32 and casts on the fly).
    inputs_embeds = jax.random.normal(k_in, (B, S, H), jnp.float32).astype(jnp.bfloat16)

    student_params = make_mlp_params(k_student, H, STUDENT_INNER, VOCAB)
    teacher_params = make_mlp_params(k_teacher, H, TEACHER_INNER, VOCAB)

    model = DistilModelJAX(student_params, teacher_params, tm=256)

    # HF-style dict input, including the 'return_loss' key the wrapper strips.
    x = {"inputs_embeds": inputs_embeds, "return_loss": True}

    student_out, teacher_out = model.forward(x)
    jax.block_until_ready(student_out)
    jax.block_until_ready(teacher_out)

    assert student_out.shape == (B, S, VOCAB)
    assert teacher_out.shape == (B, S, VOCAB)
    assert student_out.dtype == jnp.float32 and teacher_out.dtype == jnp.float32

    # Numerical sanity check against a pure-JAX reference (bf16-weight tolerance).
    x2d = inputs_embeds.reshape(B * S, H)
    s_ref = _mlp_head_ref(student_params, x2d).reshape(B, S, -1)
    t_ref = _mlp_head_ref(teacher_params, x2d).reshape(B, S, -1)
    assert jnp.allclose(student_out, s_ref, atol=2e-2, rtol=2e-2)
    assert jnp.allclose(teacher_out, t_ref, atol=2e-2, rtol=2e-2)

    print("KERNEL_OK")
</pallas_src>

<mosaic_0001>
module attributes {stable_mosaic.version = 11 : i64} {
  func.func @_distil_heads_kernel(%arg0: i32, %arg1: memref<256x128xbf16, #tpu.memory_space<vmem>>, %arg2: memref<128x768xbf16, #tpu.memory_space<vmem>>, %arg3: memref<1x768xf32, #tpu.memory_space<vmem>>, %arg4: memref<256x128xbf16, #tpu.memory_space<vmem>>, %arg5: memref<1x128xf32, #tpu.memory_space<vmem>>, %arg6: memref<512x128xbf16, #tpu.memory_space<vmem>>, %arg7: memref<1x128xf32, #tpu.memory_space<vmem>>, %arg8: memref<256x128xf32, #tpu.memory_space<vmem>>, %arg9: memref<256x128xf32, #tpu.memory_space<vmem>>) attributes {dimension_semantics = [#tpu.dimension_semantics<parallel>], iteration_bounds = array<i64: 2>, scalar_prefetch = 0 : i64, scratch_operands = 0 : i64, tpu.core_type = #tpu.core_type<tc>, window_params = [{transform_indices = @transform_0, window_bounds = array<i64: 256, 128>}, {pipeline_mode = #tpu.pipeline_mode<synchronous>, transform_indices = @transform_1, window_bounds = array<i64: 128, 768>}, {pipeline_mode = #tpu.pipeline_mode<synchronous>, transform_indices = @transform_2, window_bounds = array<i64: 1, 768>}, {pipeline_mode = #tpu.pipeline_mode<synchronous>, transform_indices = @transform_3, window_bounds = array<i64: 256, 128>}, {pipeline_mode = #tpu.pipeline_mode<synchronous>, transform_indices = @transform_4, window_bounds = array<i64: 1, 128>}, {pipeline_mode = #tpu.pipeline_mode<synchronous>, transform_indices = @transform_5, window_bounds = array<i64: 512, 128>}, {pipeline_mode = #tpu.pipeline_mode<synchronous>, transform_indices = @transform_6, window_bounds = array<i64: 1, 128>}, {transform_indices = @transform_7, window_bounds = array<i64: 256, 128>}, {transform_indices = @transform_8, window_bounds = array<i64: 256, 128>}]} {
    %c0 = arith.constant 0 : index
    %c0_0 = arith.constant 0 : index
    %0 = vector.load %arg1[%c0, %c0_0] : memref<256x128xbf16, #tpu.memory_space<vmem>>, vector<256x128xbf16>
    %c0_1 = arith.constant 0 : index
    %c0_2 = arith.constant 0 : index
    %1 = vector.load %arg2[%c0_1, %c0_2] : memref<128x768xbf16, #tpu.memory_space<vmem>>, vector<128x768xbf16>
    %cst = arith.constant dense<0.000000e+00> : vector<256x768xf32>
    %2 = tpu.matmul %0, %1, %cst {dimension_numbers = #tpu.dot_dimension_numbers<[1], [0], [0], [1], [0, 0, 1, 1], [], []>} : vector<256x128xbf16>, vector<128x768xbf16>, vector<256x768xf32> -> vector<256x768xf32>
    %c0_3 = arith.constant 0 : index
    %c0_4 = arith.constant 0 : index
    %3 = vector.load %arg3[%c0_3, %c0_4] : memref<1x768xf32, #tpu.memory_space<vmem>>, vector<1x768xf32>
    %4 = vector.broadcast %3 : vector<1x768xf32> to vector<256x768xf32>
    %5 = arith.addf %2, %4 : vector<256x768xf32>
    %6 = arith.mulf %5, %5 : vector<256x768xf32>
    %7 = arith.mulf %5, %6 : vector<256x768xf32>
    %cst_5 = arith.constant 4.471500e-02 : f32
    %8 = vector.broadcast %cst_5 : f32 to vector<256x768xf32>
    %9 = arith.mulf %8, %7 : vector<256x768xf32>
    %10 = arith.addf %5, %9 : vector<256x768xf32>
    %cst_6 = arith.constant 0.797884583 : f32
    %11 = vector.broadcast %cst_6 : f32 to vector<256x768xf32>
    %12 = arith.mulf %11, %10 : vector<256x768xf32>
    %13 = math.tanh %12 : vector<256x768xf32>
    %cst_7 = arith.constant 1.000000e+00 : f32
    %14 = vector.broadcast %cst_7 : f32 to vector<256x768xf32>
    %15 = arith.addf %14, %13 : vector<256x768xf32>
    %cst_8 = arith.constant 5.000000e-01 : f32
    %16 = vector.broadcast %cst_8 : f32 to vector<256x768xf32>
    %17 = arith.mulf %16, %15 : vector<256x768xf32>
    %18 = arith.mulf %5, %17 : vector<256x768xf32>
    %19 = arith.truncf %18 : vector<256x768xf32> to vector<256x768xbf16>
    %20 = vector.extract_strided_slice %19 {offsets = [0, 0], sizes = [256, 256], strides = [1, 1]} : vector<256x768xbf16> to vector<256x256xbf16>
    %21 = vector.extract_strided_slice %19 {offsets = [0, 256], sizes = [256, 512], strides = [1, 1]} : vector<256x768xbf16> to vector<256x512xbf16>
    %c0_9 = arith.constant 0 : index
    %c0_10 = arith.constant 0 : index
    %22 = vector.load %arg4[%c0_9, %c0_10] : memref<256x128xbf16, #tpu.memory_space<vmem>>, vector<256x128xbf16>
    %cst_11 = arith.constant dense<0.000000e+00> : vector<256x128xf32>
    %23 = tpu.matmul %20, %22, %cst_11 {dimension_numbers = #tpu.dot_dimension_numbers<[1], [0], [0], [1], [0, 0, 1, 1], [], []>} : vector<256x256xbf16>, vector<256x128xbf16>, vector<256x128xf32> -> vector<256x128xf32>
    %c0_12 = arith.constant 0 : index
    %c0_13 = arith.constant 0 : index
    %24 = vector.load %arg5[%c0_12, %c0_13] : memref<1x128xf32, #tpu.memory_space<vmem>>, vector<1x128xf32>
    %25 = vector.broadcast %24 : vector<1x128xf32> to vector<256x128xf32>
    %26 = arith.addf %23, %25 : vector<256x128xf32>
    %c0_14 = arith.constant 0 : index
    %c0_15 = arith.constant 0 : index
    %27 = vector.load %arg6[%c0_14, %c0_15] : memref<512x128xbf16, #tpu.memory_space<vmem>>, vector<512x128xbf16>
    %cst_16 = arith.constant dense<0.000000e+00> : vector<256x128xf32>
    %28 = tpu.matmul %21, %27, %cst_16 {dimension_numbers = #tpu.dot_dimension_numbers<[1], [0], [0], [1], [0, 0, 1, 1], [], []>} : vector<256x512xbf16>, vector<512x128xbf16>, vector<256x128xf32> -> vector<256x128xf32>
    %c0_17 = arith.constant 0 : index
    %c0_18 = arith.constant 0 : index
    %29 = vector.load %arg7[%c0_17, %c0_18] : memref<1x128xf32, #tpu.memory_space<vmem>>, vector<1x128xf32>
    %30 = vector.broadcast %29 : vector<1x128xf32> to vector<256x128xf32>
    %31 = arith.addf %28, %30 : vector<256x128xf32>
    %c0_19 = arith.constant 0 : index
    %c0_20 = arith.constant 0 : index
    %32 = vector.load %arg8[%c0_19, %c0_20] : memref<256x128xf32, #tpu.memory_space<vmem>>, vector<256x128xf32>
    tpu.vector_store %arg8[%c0_19, %c0_20], %26 {strides = array<i32>} : memref<256x128xf32, #tpu.memory_space<vmem>>, vector<256x128xf32>,
    %c0_21 = arith.constant 0 : index
    %c0_22 = arith.constant 0 : index
    %33 = vector.load %arg9[%c0_21, %c0_22] : memref<256x128xf32, #tpu.memory_space<vmem>>, vector<256x128xf32>
    tpu.vector_store %arg9[%c0_21, %c0_22], %31 {strides = array<i32>} : memref<256x128xf32, #tpu.memory_space<vmem>>, vector<256x128xf32>,
    return
  }
  func.func @transform_0(%arg0: i32) -> (i32, i32) {
    %c0_i32 = arith.constant 0 : i32
    %c0_i32_0 = arith.constant 0 : i32
    return %arg0, %c0_i32 : i32, i32
  }
  func.func @transform_1(%arg0: i32) -> (i32, i32) {
    %c0_i32 = arith.constant 0 : i32
    %c0_i32_0 = arith.constant 0 : i32
    %c0_i32_1 = arith.constant 0 : i32
    return %c0_i32, %c0_i32_0 : i32, i32
  }
  func.func @transform_2(%arg0: i32) -> (i32, i32) {
    %c0_i32 = arith.constant 0 : i32
    %c0_i32_0 = arith.constant 0 : i32
    %c0_i32_1 = arith.constant 0 : i32
    return %c0_i32, %c0_i32_0 : i32, i32
  }
  func.func @transform_3(%arg0: i32) -> (i32, i32) {
    %c0_i32 = arith.constant 0 : i32
    %c0_i32_0 = arith.constant 0 : i32
    %c0_i32_1 = arith.constant 0 : i32
    return %c0_i32, %c0_i32_0 : i32, i32
  }
  func.func @transform_4(%arg0: i32) -> (i32, i32) {
    %c0_i32 = arith.constant 0 : i32
    %c0_i32_0 = arith.constant 0 : i32
    %c0_i32_1 = arith.constant 0 : i32
    return %c0_i32, %c0_i32_0 : i32, i32
  }
  func.func @transform_5(%arg0: i32) -> (i32, i32) {
    %c0_i32 = arith.constant 0 : i32
    %c0_i32_0 = arith.constant 0 : i32
    %c0_i32_1 = arith.constant 0 : i32
    return %c0_i32, %c0_i32_0 : i32, i32
  }
  func.func @transform_6(%arg0: i32) -> (i32, i32) {
    %c0_i32 = arith.constant 0 : i32
    %c0_i32_0 = arith.constant 0 : i32
    %c0_i32_1 = arith.constant 0 : i32
    return %c0_i32, %c0_i32_0 : i32, i32
  }
  func.func @transform_7(%arg0: i32) -> (i32, i32) {
    %c0_i32 = arith.constant 0 : i32
    %c0_i32_0 = arith.constant 0 : i32
    return %arg0, %c0_i32 : i32, i32
  }
  func.func @transform_8(%arg0: i32) -> (i32, i32) {
    %c0_i32 = arith.constant 0 : i32
    %c0_i32_0 = arith.constant 0 : i32
    return %arg0, %c0_i32 : i32, i32
  }
}

</mosaic_0001>

<llo_original>
// kernel: tpu_custom_call.1
$region0: #{tpu_custom_call.1}
  #allocation0 [shape = 'u32[]', space=smem, size = 0x4, offset = 0x4, fixed_abs, tag = 'smem constant byte address 0x4 - core index']
  #allocation1 [shape = 'u32[144,128]{1,0:T(1,128)}', space=vmem, size = 0x12000, scoped, tag = 'internal scratch']
  %s0 = inlined_call_operand.hbm [shape: bf16[512,128], index: 0, kind: input, shape index: {}]
  %s1 = inlined_call_operand.hbm [shape: bf16[128,768], index: 1, kind: input, shape index: {}]
  %s2 = inlined_call_operand.vmem [shape: f32[1,768], index: 2, kind: input, shape index: {}]
  %s3 = inlined_call_operand.hbm [shape: bf16[256,128], index: 3, kind: input, shape index: {}]
  %s4 = inlined_call_operand.vmem [shape: f32[1,128], index: 4, kind: input, shape index: {}]
  %s5 = inlined_call_operand.hbm [shape: bf16[512,128], index: 5, kind: input, shape index: {}]
  %s6 = inlined_call_operand.vmem [shape: f32[1,128], index: 6, kind: input, shape index: {}]
  %s7 = inlined_call_operand.hbm [shape: f32[512,128], index: 7, kind: output, shape index: {0}]
  %s8 = inlined_call_operand.hbm [shape: f32[512,128], index: 8, kind: output, shape index: {1}]
  %9 = xla_tuple %s7, %s8
  %s10 = sld [smem:[#allocation0]]
  $region85: #{tpu_custom_call.1} parent=0
    _
  %s12 = ssub.s32 1, %s10
  %s13 = scalar_select 0, %s12, %s10
  $region1: #{tpu_custom_call.1} parent=0
    #allocation2 [shape = 'u8[131072]{0}', space=vmem, size = 0x20000, scoped, tag = 'input window, operand 0']
    #allocation3 [shape = 's32[2]{0}', space=sflag, size = 0x8, scoped, tag = 'scoped memory for tpu_custom_call.1']
    #allocation4 [shape = 's32[2]{0}', space=sflag, size = 0x8, scoped, tag = 'scoped memory for tpu_custom_call.1']
    #allocation5 [shape = 'u8[196608]{0}', space=vmem, size = 0x30000, scoped, tag = 'input window, operand 1, single buffered']
    #allocation6 [shape = 's32[1]{0}', space=sflag, size = 0x4, scoped, tag = 'scoped memory for tpu_custom_call.1']
    #allocation7 [shape = 'u8[65536]{0}', space=vmem, size = 0x10000, scoped, tag = 'input window, operand 3, single buffered']
    #allocation8 [shape = 'u8[131072]{0}', space=vmem, size = 0x20000, scoped, tag = 'input window, operand 5, single buffered']
    #allocation9 [shape = 's32[1]{0}', space=sflag, size = 0x4, scoped, tag = 'scoped memory for tpu_custom_call.1']
    #allocation10 [shape = 'u8[262144]{0}', space=vmem, size = 0x40000, scoped, tag = 'output window, operand 0']
    #allocation11 [shape = 'u8[262144]{0}', space=vmem, size = 0x40000, scoped, tag = 'output window, operand 1']
    #allocation12 [shape = 's32[2]{0}', space=sflag, size = 0x8, scoped, tag = 'scoped memory for tpu_custom_call.1']
    %14 = vsyncpa [#allocation3], 0
    %s15 = scalar_lea.sflag [#allocation3], 1
    %16 = vsyncpa %s15, 0
    %17 = vsyncpa [#allocation6], 0
    %18 = vsyncpa [#allocation9], 0
    %19 = vsyncpa [#allocation4], 0
    %s20 = scalar_lea.sflag [#allocation4], 1
    %21 = vsyncpa %s20, 0
    %22 = vsyncpa [#allocation12], 0
    %s23 = scalar_lea.sflag [#allocation12], 1
    %24 = vsyncpa %s23, 0
    loop: start=0, step=1, limit=4
    $region2: #{tpu_custom_call.1} parent=1 // loop_pre_header
      _
    $region3: #{tpu_custom_call.1} parent=1 // loop_header
      %s26 = sphi 0, %s30
      %p27 = scmp.ge.s32.totalorder %s26, 4
      %s36 = sphi 0, %s38
      %s39 = sphi 0, %s36
      %s40 = sphi 0, %s39
      %s56 = sphi 0, %s40
      %s60 = sphi 0, %s60
      %s62 = sphi 0, %s60
      %s63 = sphi 0, %s62
      %s77 = sphi 0, %s63
      %s81 = sphi 0, %s81
      %s83 = sphi 0, %s81
      %s84 = sphi 0, %s83
      %s98 = sphi 0, %s84
      %s102 = sphi 0, %s102
      %s104 = sphi 0, %s102
      %s105 = sphi 0, %s104
      %s119 = sphi 0, %s105
      %s123 = sphi 0, %s123
      %s125 = sphi 0, %s123
      %s126 = sphi 0, %s125
      %s140 = sphi 0, %s126
      %s144 = sphi 0, %s144
      %s146 = sphi 0, %s144
      %s147 = sphi 0, %s146
      %s161 = sphi 0, %s147
      %s165 = sphi 0, %s165
      %s167 = sphi 0, %s165
      %s168 = sphi 0, %s167
      %s182 = sphi 0, %s168
      %s188 = sphi 0, %s190
      %s191 = sphi 0, %s188
      %s192 = sphi 0, %s191
      %s208 = sphi 0, %s192
      %s214 = sphi 0, %s216
      %s217 = sphi 0, %s214
      %s218 = sphi 0, %s217
      %s234 = sphi 0, %s218
    $region4: #{tpu_custom_call.1} parent=1 // loop_header_branch
      %29 = sbr.rel (%p27) target = $region8
    $region5: #{tpu_custom_call.1} parent=1 // loop_body
      %s31 = ssub.s32 %s26, 1
      %s32 = ssub.s32 %s26, 2
      %s33 = sadd.s32 %s26, 1
      %s34 = ssub.s32 %s26, %s33
      %p35 = scmp.eq.s32.totalorder %s34, 0
      %s37 = sadd.s32 %s36, 1
      %s38 = scalar_select %p35, %s36, %s37
      %p41 = pneg %p35
      %p42 = scmp.eq.s32.totalorder %s26, 1
      %p43 = por %p41, %p42
      %p44 = scmp.ne.s32.totalorder %s36, %s39
      %p45 = scmp.eq.s32.totalorder %s26, 0
      %p46 = por %p44, %p45
      %p47 = scmp.ne.s32.totalorder %s36, %s39
      %p48 = scmp.eq.s32.totalorder %s31, 1
      %p49 = por %p47, %p48
      %p50 = scmp.ne.s32.totalorder %s39, %s40
      %p51 = scmp.eq.s32.totalorder %s31, 0
      %p52 = por %p50, %p51
      %p53 = scmp.ne.s32.totalorder %s39, %s40
      %p54 = scmp.eq.s32.totalorder %s32, 1
      %p55 = por %p53, %p54
      %p57 = scmp.ne.s32.totalorder %s40, %s56
      %p58 = scmp.eq.s32.totalorder %s32, 0
      %p59 = por %p57, %p58
      %s61 = sadd.s32 %s60, 1
      %p64 = scmp.eq.s32.totalorder %s26, 1
      %p65 = scmp.ne.s32.totalorder %s60, %s62
      %p66 = scmp.eq.s32.totalorder %s26, 0
      %p67 = por %p65, %p66
      %p68 = scmp.ne.s32.totalorder %s60, %s62
      %p69 = scmp.eq.s32.totalorder %s31, 1
      %p70 = por %p68, %p69
      %p71 = scmp.ne.s32.totalorder %s62, %s63
      %p72 = scmp.eq.s32.totalorder %s31, 0
      %p73 = por %p71, %p72
      %p74 = scmp.ne.s32.totalorder %s62, %s63
      %p75 = scmp.eq.s32.totalorder %s32, 1
      %p76 = por %p74, %p75
      %p78 = scmp.ne.s32.totalorder %s63, %s77
      %p79 = scmp.eq.s32.totalorder %s32, 0
      %p80 = por %p78, %p79
      %s82 = sadd.s32 %s81, 1
      %p85 = scmp.eq.s32.totalorder %s26, 1
      %p86 = scmp.ne.s32.totalorder %s81, %s83
      %p87 = scmp.eq.s32.totalorder %s26, 0
      %p88 = por %p86, %p87
      %p89 = scmp.ne.s32.totalorder %s81, %s83
      %p90 = scmp.eq.s32.totalorder %s31, 1
      %p91 = por %p89, %p90
      %p92 = scmp.ne.s32.totalorder %s83, %s84
      %p93 = scmp.eq.s32.totalorder %s31, 0
      %p94 = por %p92, %p93
      %p95 = scmp.ne.s32.totalorder %s83, %s84
      %p96 = scmp.eq.s32.totalorder %s32, 1
      %p97 = por %p95, %p96
      %p99 = scmp.ne.s32.totalorder %s84, %s98
      %p100 = scmp.eq.s32.totalorder %s32, 0
      %p101 = por %p99, %p100
      %s103 = sadd.s32 %s102, 1
      %p106 = scmp.eq.s32.totalorder %s26, 1
      %p107 = scmp.ne.s32.totalorder %s102, %s104
      %p108 = scmp.eq.s32.totalorder %s26, 0
      %p109 = por %p107, %p108
      %p110 = scmp.ne.s32.totalorder %s102, %s104
      %p111 = scmp.eq.s32.totalorder %s31, 1
      %p112 = por %p110, %p111
      %p113 = scmp.ne.s32.totalorder %s104, %s105
      %p114 = scmp.eq.s32.totalorder %s31, 0
      %p115 = por %p113, %p114
      %p116 = scmp.ne.s32.totalorder %s104, %s105
      %p117 = scmp.eq.s32.totalorder %s32, 1
      %p118 = por %p116, %p117
      %p120 = scmp.ne.s32.totalorder %s105, %s119
      %p121 = scmp.eq.s32.totalorder %s32, 0
      %p122 = por %p120, %p121
      %s124 = sadd.s32 %s123, 1
      %p127 = scmp.eq.s32.totalorder %s26, 1
      %p128 = scmp.ne.s32.totalorder %s123, %s125
      %p129 = scmp.eq.s32.totalorder %s26, 0
      %p130 = por %p128, %p129
      %p131 = scmp.ne.s32.totalorder %s123, %s125
      %p132 = scmp.eq.s32.totalorder %s31, 1
      %p133 = por %p131, %p132
      %p134 = scmp.ne.s32.totalorder %s125, %s126
      %p135 = scmp.eq.s32.totalorder %s31, 0
      %p136 = por %p134, %p135
      %p137 = scmp.ne.s32.totalorder %s125, %s126
      %p138 = scmp.eq.s32.totalorder %s32, 1
      %p139 = por %p137, %p138
      %p141 = scmp.ne.s32.totalorder %s126, %s140
      %p142 = scmp.eq.s32.totalorder %s32, 0
      %p143 = por %p141, %p142
      %s145 = sadd.s32 %s144, 1
      %p148 = scmp.eq.s32.totalorder %s26, 1
      %p149 = scmp.ne.s32.totalorder %s144, %s146
      %p150 = scmp.eq.s32.totalorder %s26, 0
      %p151 = por %p149, %p150
      %p152 = scmp.ne.s32.totalorder %s144, %s146
      %p153 = scmp.eq.s32.totalorder %s31, 1
      %p154 = por %p152, %p153
      %p155 = scmp.ne.s32.totalorder %s146, %s147
      %p156 = scmp.eq.s32.totalorder %s31, 0
      %p157 = por %p155, %p156
      %p158 = scmp.ne.s32.totalorder %s146, %s147
      %p159 = scmp.eq.s32.totalorder %s32, 1
      %p160 = por %p158, %p159
      %p162 = scmp.ne.s32.totalorder %s147, %s161
      %p163 = scmp.eq.s32.totalorder %s32, 0
      %p164 = por %p162, %p163
      %s166 = sadd.s32 %s165, 1
      %p169 = scmp.eq.s32.totalorder %s26, 1
      %p170 = scmp.ne.s32.totalorder %s165, %s167
      %p171 = scmp.eq.s32.totalorder %s26, 0
      %p172 = por %p170, %p171
      %p173 = scmp.ne.s32.totalorder %s165, %s167
      %p174 = scmp.eq.s32.totalorder %s31, 1
      %p175 = por %p173, %p174
      %p176 = scmp.ne.s32.totalorder %s167, %s168
      %p177 = scmp.eq.s32.totalorder %s31, 0
      %p178 = por %p176, %p177
      %p179 = scmp.ne.s32.totalorder %s167, %s168
      %p180 = scmp.eq.s32.totalorder %s32, 1
      %p181 = por %p179, %p180
      %p183 = scmp.ne.s32.totalorder %s168, %s182
      %p184 = scmp.eq.s32.totalorder %s32, 0
      %p185 = por %p183, %p184
      %s186 = ssub.s32 %s26, %s33
      %p187 = scmp.eq.s32.totalorder %s186, 0
      %s189 = sadd.s32 %s188, 1
      %s190 = scalar_select %p187, %s188, %s189
      %p193 = pneg %p187
      %p194 = scmp.eq.s32.totalorder %s26, 1
      %p195 = por %p193, %p194
      %p196 = scmp.ne.s32.totalorder %s188, %s191
      %p197 = scmp.eq.s32.totalorder %s26, 0
      %p198 = por %p196, %p197
      %p199 = scmp.ne.s32.totalorder %s188, %s191
      %p200 = scmp.eq.s32.totalorder %s31, 1
      %p201 = por %p199, %p200
      %p202 = scmp.ne.s32.totalorder %s191, %s192
      %p203 = scmp.eq.s32.totalorder %s31, 0
      %p204 = por %p202, %p203
      %p205 = scmp.ne.s32.totalorder %s191, %s192
      %p206 = scmp.eq.s32.totalorder %s32, 1
      %p207 = por %p205, %p206
      %p209 = scmp.ne.s32.totalorder %s192, %s208
      %p210 = scmp.eq.s32.totalorder %s32, 0
      %p211 = por %p209, %p210
      %s212 = ssub.s32 %s26, %s33
      %p213 = scmp.eq.s32.totalorder %s212, 0
      %s215 = sadd.s32 %s214, 1
      %s216 = scalar_select %p213, %s214, %s215
      %p219 = pneg %p213
      %p220 = scmp.eq.s32.totalorder %s26, 1
      %p221 = por %p219, %p220
      %p222 = scmp.ne.s32.totalorder %s214, %s217
      %p223 = scmp.eq.s32.totalorder %s26, 0
      %p224 = por %p222, %p223
      %p225 = scmp.ne.s32.totalorder %s214, %s217
      %p226 = scmp.eq.s32.totalorder %s31, 1
      %p227 = por %p225, %p226
      %p228 = scmp.ne.s32.totalorder %s217, %s218
      %p229 = scmp.eq.s32.totalorder %s31, 0
      %p230 = por %p228, %p229
      %p231 = scmp.ne.s32.totalorder %s217, %s218
      %p232 = scmp.eq.s32.totalorder %s32, 1
      %p233 = por %p231, %p232
      %p235 = scmp.ne.s32.totalorder %s218, %s234
      %p236 = scmp.eq.s32.totalorder %s32, 0
      %p237 = por %p235, %p236
      %p238 = scmp.le.s32.totalorder 1, %s26
      %p239 = scmp.lt.s32.totalorder %s26, 3
      %p240 = pnand %p238, %p239
      %p241 = pneg %p240
      // Predicated region
      $region9: #{tpu_custom_call.1} parent=5 // pred_check
        _
      $region10: #{tpu_custom_call.1} parent=5 // pred_check_branch
        %243 = sbr.rel (%p240) target = $region12
      $region11: #{tpu_custom_call.1} parent=5 // pred_region
        %s244 = ssub.s32 %s26, 1
        // Predicated region
        $region13: #{tpu_custom_call.1} parent=11 // pred_check
          %p245 = pneg %p73
        $region14: #{tpu_custom_call.1} parent=11 // pred_check_branch
          %247 = sbr.rel (%p245) target = $region16
        $region15: #{tpu_custom_call.1} parent=11 // pred_region
          %s249 = ssub.s32 6144, 6144
          %250 = vsyncadd [#allocation6], %s249
          %s251 = sshll.u32 [#allocation5], 4
          %s252 = int_to_ptr.vmem [resolvable:$true] %s251
          %257 = dma.hbm_to_vmem [thread:$0]  %s1, 6144, %s252, [#allocation6], 384, 384, 24
        $region16: #{tpu_custom_call.1} parent=11 // pred_fallthru
          _
        // Predicated region
        $region17: #{tpu_custom_call.1} parent=11 // pred_check
          %p258 = pneg %p94
        $region18: #{tpu_custom_call.1} parent=11 // pred_check_branch
          %260 = sbr.rel (%p258) target = $region20
        $region19: #{tpu_custom_call.1} parent=11 // pred_region
          _
        $region20: #{tpu_custom_call.1} parent=11 // pred_fallthru
          _
        // Predicated region
        $region21: #{tpu_custom_call.1} parent=11 // pred_check
          %p261 = pneg %p115
        $region22: #{tpu_custom_call.1} parent=11 // pred_check_branch
          %263 = sbr.rel (%p261) target = $region24
        $region23: #{tpu_custom_call.1} parent=11 // pred_region
          %s265 = ssub.s32 2048, 2048
          %266 = vsyncadd [#allocation6], %s265
          %s267 = sshll.u32 [#allocation7], 4
          %s268 = int_to_ptr.vmem [resolvable:$true] %s267
          %273 = dma.hbm_to_vmem [thread:$0]  %s3, 2048, %s268, [#allocation6], 64, 64, 4
        $region24: #{tpu_custom_call.1} parent=11 // pred_fallthru
          _
        // Predicated region
        $region25: #{tpu_custom_call.1} parent=11 // pred_check
          %p274 = pneg %p136
        $region26: #{tpu_custom_call.1} parent=11 // pred_check_branch
          %276 = sbr.rel (%p274) target = $region28
        $region27: #{tpu_custom_call.1} parent=11 // pred_region
          _
        $region28: #{tpu_custom_call.1} parent=11 // pred_fallthru
          _
        // Predicated region
        $region29: #{tpu_custom_call.1} parent=11 // pred_check
          %p277 = pneg %p157
        $region30: #{tpu_custom_call.1} parent=11 // pred_check_branch
          %279 = sbr.rel (%p277) target = $region32
        $region31: #{tpu_custom_call.1} parent=11 // pred_region
          %s281 = ssub.s32 4096, 4096
          %282 = vsyncadd [#allocation9], %s281
          %s283 = sshll.u32 [#allocation8], 4
          %s284 = int_to_ptr.vmem [resolvable:$true] %s283
          %289 = dma.hbm_to_vmem [thread:$0]  %s5, 4096, %s284, [#allocation9], 64, 64, 4
        $region32: #{tpu_custom_call.1} parent=11 // pred_fallthru
          _
        // Predicated region
        $region33: #{tpu_custom_call.1} parent=11 // pred_check
          %p290 = pneg %p178
        $region34: #{tpu_custom_call.1} parent=11 // pred_check_branch
          %292 = sbr.rel (%p290) target = $region36
        $region35: #{tpu_custom_call.1} parent=11 // pred_region
          _
        $region36: #{tpu_custom_call.1} parent=11 // pred_fallthru
          _
      $region12: #{tpu_custom_call.1} parent=5 // pred_fallthru
        _
      %p293 = scmp.lt.s32.totalorder %s26, 2
      // Predicated region
      $region37: #{tpu_custom_call.1} parent=5 // pred_check
        %p294 = pneg %p293
      $region38: #{tpu_custom_call.1} parent=5 // pred_check_branch
        %296 = sbr.rel (%p294) target = $region40
      $region39: #{tpu_custom_call.1} parent=5 // pred_region
        // Predicated region
        $region41: #{tpu_custom_call.1} parent=39 // pred_check
          %p297 = pneg %p46
        $region42: #{tpu_custom_call.1} parent=39 // pred_check_branch
          %299 = sbr.rel (%p297) target = $region44
        $region43: #{tpu_custom_call.1} parent=39 // pred_region
          %s300 = sand.u32 %s36, 1
          %s301 = scalar_lea.sflag [#allocation3], %s300
          %s302 = sand.u32 %s36, 1
          %s303 = smul.addr %s302, 128
          %s304 = scalar_lea.vmem [#allocation2], %s303
          %s305 = smul.u32 32, %s26
          %s307 = ssub.s32 2048, 2048
          %308 = vsyncadd %s301, %s307
          %s309 = smul.addr %s305, 64
          %s310 = scalar_lea.hbm %s0, %s309
          %s311 = sshll.u32 %s304, 4
          %s312 = int_to_ptr.vmem [resolvable:$true] %s311
          %317 = dma.hbm_to_vmem [thread:$0]  %s310, 2048, %s312, %s301, 64, 64, 4
        $region44: #{tpu_custom_call.1} parent=39 // pred_fallthru
          _
      $region40: #{tpu_custom_call.1} parent=5 // pred_fallthru
        _
      %p318 = scmp.le.s32.totalorder 1, %s26
      %p319 = scmp.lt.s32.totalorder %s26, 3
      %p320 = pnand %p318, %p319
      %p321 = pneg %p320
      // Predicated region
      $region45: #{tpu_custom_call.1} parent=5 // pred_check
        _
      $region46: #{tpu_custom_call.1} parent=5 // pred_check_branch
        %323 = sbr.rel (%p320) target = $region48
      $region47: #{tpu_custom_call.1} parent=5 // pred_region
        %s324 = ssub.s32 %s26, 1
        %s325 = sand.u32 %s39, 1
        %s326 = scalar_lea.sflag [#allocation3], %s325
        %s327 = sand.u32 %s39, 1
        %s328 = smul.addr %s327, 128
        %s329 = scalar_lea.vmem [#allocation2], %s328
        // Predicated region
        $region49: #{tpu_custom_call.1} parent=47 // pred_check
          %p330 = pneg %p52
        $region50: #{tpu_custom_call.1} parent=47 // pred_check_branch
          %332 = sbr.rel (%p330) target = $region52
        $region51: #{tpu_custom_call.1} parent=47 // pred_region
          %333 = dma.done %s326, 2048
        $region52: #{tpu_custom_call.1} parent=47 // pred_fallthru
          _
        // Predicated region
        $region53: #{tpu_custom_call.1} parent=47 // pred_check
          %p334 = pneg %p73
        $region54: #{tpu_custom_call.1} parent=47 // pred_check_branch
          %336 = sbr.rel (%p334) target = $region56
        $region55: #{tpu_custom_call.1} parent=47 // pred_region
          %337 = dma.done [#allocation6], 6144
        $region56: #{tpu_custom_call.1} parent=47 // pred_fallthru
          _
        // Predicated region
        $region57: #{tpu_custom_call.1} parent=47 // pred_check
          %p338 = pneg %p115
        $region58: #{tpu_custom_call.1} parent=47 // pred_check_branch
          %340 = sbr.rel (%p338) target = $region60
        $region59: #{tpu_custom_call.1} parent=47 // pred_region
          %341 = dma.done [#allocation6], 2048
        $region60: #{tpu_custom_call.1} parent=47 // pred_fallthru
          _
        // Predicated region
        $region61: #{tpu_custom_call.1} parent=47 // pred_check
          %p342 = pneg %p157
        $region62: #{tpu_custom_call.1} parent=47 // pred_check_branch
          %344 = sbr.rel (%p342) target = $region64
        $region63: #{tpu_custom_call.1} parent=47 // pred_region
          %345 = dma.done [#allocation9], 4096
        $region64: #{tpu_custom_call.1} parent=47 // pred_fallthru
          _
        %s346 = sand.u32 %s39, 1
        %s347 = scalar_lea.sflag [#allocation3], %s346
        %s348 = sand.u32 %s39, 1
        %s349 = smul.addr %s348, 128
        %s350 = scalar_lea.vmem [#allocation2], %s349
        %p351 = pneg %p52
        %p352 = pneg %p49
        %p353 = pneg %p73
        %p354 = pneg %p70
        %p355 = pneg %p94
        %p356 = pneg %p91
        %p357 = pneg %p115
        %p358 = pneg %p112
        %p359 = pneg %p136
        %p360 = pneg %p133
        %p361 = pneg %p157
        %p362 = pneg %p154
        %p363 = pneg %p178
        %p364 = pneg %p175
        %p365 = pneg %p204
        %p366 = pneg %p201
        %s367 = sand.u32 %s191, 1
        %s368 = scalar_lea.sflag [#allocation4], %s367
        %s369 = sand.u32 %s191, 1
        %s370 = smul.addr %s369, 256
        %s371 = scalar_lea.vmem [#allocation10], %s370
        %p372 = pneg %p230
        %p373 = pneg %p227
        %s374 = sand.u32 %s217, 1
        %s375 = scalar_lea.sflag [#allocation12], %s374
        %s376 = sand.u32 %s217, 1
        %s377 = smul.addr %s376, 256
        %s378 = scalar_lea.vmem [#allocation11], %s377
        %s379 = smul.u32 32, %s31
        %s380 = smul.u32 32, %s31
        %s381 = smul.u32 32, %s31
        %v383 = vld [vmem:[%s329] sm:$0xf]
        %v384 = vld [vmem:[%s329 + $0x4] sm:$0xf]
        %v385 = vld [vmem:[%s329 + $0x8] sm:$0xf]
        %v386 = vld [vmem:[%s329 + $0xc] sm:$0xf]
        %v387 = vld [vmem:[%s329 + $0x10] sm:$0xf]
        %v388 = vld [vmem:[%s329 + $0x14] sm:$0xf]
        %v389 = vld [vmem:[%s329 + $0x18] sm:$0xf]
        %v390 = vld [vmem:[%s329 + $0x1c] sm:$0xf]
        %v391 = vld [vmem:[%s329 + $0x20] sm:$0xf]
        %v392 = vld [vmem:[%s329 + $0x24] sm:$0xf]
        %v393 = vld [vmem:[%s329 + $0x28] sm:$0xf]
        %v394 = vld [vmem:[%s329 + $0x2c] sm:$0xf]
        %v395 = vld [vmem:[%s329 + $0x30] sm:$0xf]
        %v396 = vld [vmem:[%s329 + $0x34] sm:$0xf]
        %v397 = vld [vmem:[%s329 + $0x38] sm:$0xf]
        %v398 = vld [vmem:[%s329 + $0x3c] sm:$0xf]
        %v399 = vld [vmem:[%s329 + $0x40] sm:$0xf]
        %v400 = vld [vmem:[%s329 + $0x44] sm:$0xf]
        %v401 = vld [vmem:[%s329 + $0x48] sm:$0xf]
        %v402 = vld [vmem:[%s329 + $0x4c] sm:$0xf]
        %v403 = vld [vmem:[%s329 + $0x50] sm:$0xf]
        %v404 = vld [vmem:[%s329 + $0x54] sm:$0xf]
        %v405 = vld [vmem:[%s329 + $0x58] sm:$0xf]
        %v406 = vld [vmem:[%s329 + $0x5c] sm:$0xf]
        %v407 = vld [vmem:[%s329 + $0x60] sm:$0xf]
        %v408 = vld [vmem:[%s329 + $0x64] sm:$0xf]
        %v409 = vld [vmem:[%s329 + $0x68] sm:$0xf]
        %v410 = vld [vmem:[%s329 + $0x6c] sm:$0xf]
        %v411 = vld [vmem:[%s329 + $0x70] sm:$0xf]
        %v412 = vld [vmem:[%s329 + $0x74] sm:$0xf]
        %v413 = vld [vmem:[%s329 + $0x78] sm:$0xf]
        %v414 = vld [vmem:[%s329 + $0x7c] sm:$0xf]
        %v415 = vld [vmem:[#allocation5] sm:$0xff]
        %v416 = vld [vmem:[#allocation5 + $0x8] sm:$0xff]
        %v417 = vld [vmem:[#allocation5 + $0x10] sm:$0xff]
        %v418 = vld [vmem:[#allocation5 + $0x18] sm:$0xff]
        %v419 = vld [vmem:[#allocation5 + $0x20] sm:$0xff]
        %v420 = vld [vmem:[#allocation5 + $0x28] sm:$0xff]
        %v421 = vld [vmem:[#allocation5 + $0x30] sm:$0xff]
        %v422 = vld [vmem:[#allocation5 + $0x38] sm:$0xff]
        %v423 = vld [vmem:[#allocation5 + $0x40] sm:$0xff]
        %v424 = vld [vmem:[#allocation5 + $0x48] sm:$0xff]
        %v425 = vld [vmem:[#allocation5 + $0x50] sm:$0xff]
        %v426 = vld [vmem:[#allocation5 + $0x58] sm:$0xff]
        %v427 = vld [vmem:[#allocation5 + $0x60] sm:$0xff]
        %v428 = vld [vmem:[#allocation5 + $0x68] sm:$0xff]
        %v429 = vld [vmem:[#allocation5 + $0x70] sm:$0xff]
        %v430 = vld [vmem:[#allocation5 + $0x78] sm:$0xff]
        %v431 = vld [vmem:[#allocation5 + $0x80] sm:$0xff]
        %v432 = vld [vmem:[#allocation5 + $0x88] sm:$0xff]
        %v433 = vld [vmem:[#allocation5 + $0x90] sm:$0xff]
        %v434 = vld [vmem:[#allocation5 + $0x98] sm:$0xff]
        %v435 = vld [vmem:[#allocation5 + $0xa0] sm:$0xff]
        %v436 = vld [vmem:[#allocation5 + $0xa8] sm:$0xff]
        %v437 = vld [vmem:[#allocation5 + $0xb0] sm:$0xff]
        %v438 = vld [vmem:[#allocation5 + $0xb8] sm:$0xff]
        %v439 = vld [vmem:[#allocation5 + $0xc0] sm:$0xff]
        %v440 = vld [vmem:[#allocation5 + $0xc8] sm:$0xff]
        %v441 = vld [vmem:[#allocation5 + $0xd0] sm:$0xff]
        %v442 = vld [vmem:[#allocation5 + $0xd8] sm:$0xff]
        %v443 = vld [vmem:[#allocation5 + $0xe0] sm:$0xff]
        %v444 = vld [vmem:[#allocation5 + $0xe8] sm:$0xff]
        %v445 = vld [vmem:[#allocation5 + $0xf0] sm:$0xff]
        %v446 = vld [vmem:[#allocation5 + $0xf8] sm:$0xff]
        %v447 = vld [vmem:[#allocation5 + $0x100] sm:$0xff]
        %v448 = vld [vmem:[#allocation5 + $0x108] sm:$0xff]
        %v449 = vld [vmem:[#allocation5 + $0x110] sm:$0xff]
        %v450 = vld [vmem:[#allocation5 + $0x118] sm:$0xff]
        %v451 = vld [vmem:[#allocation5 + $0x120] sm:$0xff]
        %v452 = vld [vmem:[#allocation5 + $0x128] sm:$0xff]
        %v453 = vld [vmem:[#allocation5 + $0x130] sm:$0xff]
        %v454 = vld [vmem:[#allocation5 + $0x138] sm:$0xff]
        %v455 = vld [vmem:[#allocation5 + $0x140] sm:$0xff]
        %v456 = vld [vmem:[#allocation5 + $0x148] sm:$0xff]
        %v457 = vld [vmem:[#allocation5 + $0x150] sm:$0xff]
        %v458 = vld [vmem:[#allocation5 + $0x158] sm:$0xff]
        %v459 = vld [vmem:[#allocation5 + $0x160] sm:$0xff]
        %v460 = vld [vmem:[#allocation5 + $0x168] sm:$0xff]
        %v461 = vld [vmem:[#allocation5 + $0x170] sm:$0xff]
        %v462 = vld [vmem:[#allocation5 + $0x178] sm:$0xff]
        %v463 = vld [vmem:[%s2] sm:$0x3f]
        %v465 = vlaneseq
        %v466 = vshrl.u32 %v465, 7
        %v467 = vsub.s32 0, %v466
        %v468 = vrot.slane %v463, %v467
        %v469 = vlaneseq
        %v470 = vshrl.u32 %v469, 7
        %v471 = vsub.s32 1, %v470
        %v472 = vrot.slane %v463, %v471
        %v473 = vlaneseq
        %v474 = vshrl.u32 %v473, 7
        %v475 = vsub.s32 2, %v474
        %v476 = vrot.slane %v463, %v475
        %v477 = vlaneseq
        %v478 = vshrl.u32 %v477, 7
        %v479 = vsub.s32 3, %v478
        %v480 = vrot.slane %v463, %v479
        %v481 = vlaneseq
        %v482 = vshrl.u32 %v481, 7
        %v483 = vsub.s32 4, %v482
        %v484 = vrot.slane %v463, %v483
        %v485 = vlaneseq
        %v486 = vshrl.u32 %v485, 7
        %v487 = vsub.s32 5, %v486
        %v488 = vrot.slane %v463, %v487
        %v527 = vunpack.c.l.b16 %v383
        %v528 = vunpack.c.l.b16 %v384
        %v529 = vunpack.c.l.b16 %v385
        %v530 = vunpack.c.l.b16 %v386
        %v531 = vunpack.c.l.b16 %v387
        %v532 = vunpack.c.l.b16 %v388
        %v533 = vunpack.c.l.b16 %v389
        %v534 = vunpack.c.l.b16 %v390
        %v535 = vunpack.c.l.b16 %v391
        %v536 = vunpack.c.l.b16 %v392
        %v537 = vunpack.c.l.b16 %v393
        %v538 = vunpack.c.l.b16 %v394
        %v539 = vunpack.c.l.b16 %v395
        %v540 = vunpack.c.l.b16 %v396
        %v541 = vunpack.c.l.b16 %v397
        %v542 = vunpack.c.l.b16 %v398
        %v543 = vunpack.c.l.b16 %v399
        %v544 = vunpack.c.l.b16 %v400
        %v545 = vunpack.c.l.b16 %v401
        %v546 = vunpack.c.l.b16 %v402
        %v547 = vunpack.c.l.b16 %v403
        %v548 = vunpack.c.l.b16 %v404
        %v549 = vunpack.c.l.b16 %v405
        %v550 = vunpack.c.l.b16 %v406
        %v551 = vunpack.c.l.b16 %v407
        %v552 = vunpack.c.l.b16 %v408
        %v553 = vunpack.c.l.b16 %v409
        %v554 = vunpack.c.l.b16 %v410
        %v555 = vunpack.c.l.b16 %v411
        %v556 = vunpack.c.l.b16 %v412
        %v557 = vunpack.c.l.b16 %v413
        %v558 = vunpack.c.l.b16 %v414
        %v559 = vpack.c.b16 %v528, %v527
        %v560 = vpack.c.b16 %v530, %v529
        %v561 = vpack.c.b16 %v532, %v531
        %v562 = vpack.c.b16 %v534, %v533
        %v563 = vpack.c.b16 %v536, %v535
        %v564 = vpack.c.b16 %v538, %v537
        %v565 = vpack.c.b16 %v540, %v539
        %v566 = vpack.c.b16 %v542, %v541
        %v567 = vpack.c.b16 %v544, %v543
        %v568 = vpack.c.b16 %v546, %v545
        %v569 = vpack.c.b16 %v548, %v547
        %v570 = vpack.c.b16 %v550, %v549
        %v571 = vpack.c.b16 %v552, %v551
        %v572 = vpack.c.b16 %v554, %v553
        %v573 = vpack.c.b16 %v556, %v555
        %v574 = vpack.c.b16 %v558, %v557
        %v639 = vunpack.c.l.b16 %v415
        %v640 = vunpack.c.h.b16 %v415
        %v641 = vunpack.c.l.b16 %v416
        %v642 = vunpack.c.h.b16 %v416
        %v643 = vunpack.c.l.b16 %v417
        %v644 = vunpack.c.h.b16 %v417
        %v645 = vunpack.c.l.b16 %v418
        %v646 = vunpack.c.h.b16 %v418
        %v647 = vunpack.c.l.b16 %v419
        %v648 = vunpack.c.h.b16 %v419
        %v649 = vunpack.c.l.b16 %v420
        %v650 = vunpack.c.h.b16 %v420
        %v651 = vunpack.c.l.b16 %v421
        %v652 = vunpack.c.h.b16 %v421
        %v653 = vunpack.c.l.b16 %v422
        %v654 = vunpack.c.h.b16 %v422
        %v655 = vunpack.c.l.b16 %v423
        %v656 = vunpack.c.h.b16 %v423
        %v657 = vunpack.c.l.b16 %v424
        %v658 = vunpack.c.h.b16 %v424
        %v659 = vunpack.c.l.b16 %v425
        %v660 = vunpack.c.h.b16 %v425
        %v661 = vunpack.c.l.b16 %v426
        %v662 = vunpack.c.h.b16 %v426
        %v663 = vunpack.c.l.b16 %v427
        %v664 = vunpack.c.h.b16 %v427
        %v665 = vunpack.c.l.b16 %v428
        %v666 = vunpack.c.h.b16 %v428
        %v667 = vunpack.c.l.b16 %v429
        %v668 = vunpack.c.h.b16 %v429
        %v669 = vunpack.c.l.b16 %v430
        %v670 = vunpack.c.h.b16 %v430
        %v671 = vunpack.c.l.b16 %v431
        %v672 = vunpack.c.h.b16 %v431
        %v673 = vunpack.c.l.b16 %v432
        %v674 = vunpack.c.h.b16 %v432
        %v675 = vunpack.c.l.b16 %v433
        %v676 = vunpack.c.h.b16 %v433
        %v677 = vunpack.c.l.b16 %v434
        %v678 = vunpack.c.h.b16 %v434
        %v679 = vunpack.c.l.b16 %v435
        %v680 = vunpack.c.h.b16 %v435
        %v681 = vunpack.c.l.b16 %v436
        %v682 = vunpack.c.h.b16 %v436
        %v683 = vunpack.c.l.b16 %v437
        %v684 = vunpack.c.h.b16 %v437
        %v685 = vunpack.c.l.b16 %v438
        %v686 = vunpack.c.h.b16 %v438
        %v687 = vunpack.c.l.b16 %v439
        %v688 = vunpack.c.h.b16 %v439
        %v689 = vunpack.c.l.b16 %v440
        %v690 = vunpack.c.h.b16 %v440
        %v691 = vunpack.c.l.b16 %v441
        %v692 = vunpack.c.h.b16 %v441
        %v693 = vunpack.c.l.b16 %v442
        %v694 = vunpack.c.h.b16 %v442
        %v695 = vunpack.c.l.b16 %v443
        %v696 = vunpack.c.h.b16 %v443
        %v697 = vunpack.c.l.b16 %v444
        %v698 = vunpack.c.h.b16 %v444
        %v699 = vunpack.c.l.b16 %v445
        %v700 = vunpack.c.h.b16 %v445
        %v701 = vunpack.c.l.b16 %v446
        %v702 = vunpack.c.h.b16 %v446
        %v703 = vunpack.c.l.b16 %v447
        %v704 = vunpack.c.h.b16 %v447
        %v705 = vunpack.c.l.b16 %v448
        %v706 = vunpack.c.h.b16 %v448
        %v707 = vunpack.c.l.b16 %v449
        %v708 = vunpack.c.h.b16 %v449
        %v709 = vunpack.c.l.b16 %v450
        %v710 = vunpack.c.h.b16 %v450
        %v711 = vunpack.c.l.b16 %v451
        %v712 = vunpack.c.h.b16 %v451
        %v713 = vunpack.c.l.b16 %v452
        %v714 = vunpack.c.h.b16 %v452
        %v715 = vunpack.c.l.b16 %v453
        %v716 = vunpack.c.h.b16 %v453
        %v717 = vunpack.c.l.b16 %v454
        %v718 = vunpack.c.h.b16 %v454
        %v719 = vunpack.c.l.b16 %v455
        %v720 = vunpack.c.h.b16 %v455
        %v721 = vunpack.c.l.b16 %v456
        %v722 = vunpack.c.h.b16 %v456
        %v723 = vunpack.c.l.b16 %v457
        %v724 = vunpack.c.h.b16 %v457
        %v725 = vunpack.c.l.b16 %v458
        %v726 = vunpack.c.h.b16 %v458
        %v727 = vunpack.c.l.b16 %v459
        %v728 = vunpack.c.h.b16 %v459
        %v729 = vunpack.c.l.b16 %v460
        %v730 = vunpack.c.h.b16 %v460
        %v731 = vunpack.c.l.b16 %v461
        %v732 = vunpack.c.h.b16 %v461
        %v733 = vunpack.c.l.b16 %v462
        %v734 = vunpack.c.h.b16 %v462
        %v735 = vpack.c.b16 %v645, %v639
        %v736 = vpack.c.b16 %v646, %v640
        %v737 = vpack.c.b16 %v647, %v641
        %v738 = vpack.c.b16 %v648, %v642
        %v739 = vpack.c.b16 %v649, %v643
        %v740 = vpack.c.b16 %v650, %v644
        %v741 = vpack.c.b16 %v657, %v651
        %v742 = vpack.c.b16 %v658, %v652
        %v743 = vpack.c.b16 %v659, %v653
        %v744 = vpack.c.b16 %v660, %v654
        %v745 = vpack.c.b16 %v661, %v655
        %v746 = vpack.c.b16 %v662, %v656
        %v747 = vpack.c.b16 %v669, %v663
        %v748 = vpack.c.b16 %v670, %v664
        %v749 = vpack.c.b16 %v671, %v665
        %v750 = vpack.c.b16 %v672, %v666
        %v751 = vpack.c.b16 %v673, %v667
        %v752 = vpack.c.b16 %v674, %v668
        %v753 = vpack.c.b16 %v681, %v675
        %v754 = vpack.c.b16 %v682, %v676
        %v755 = vpack.c.b16 %v683, %v677
        %v756 = vpack.c.b16 %v684, %v678
        %v757 = vpack.c.b16 %v685, %v679
        %v758 = vpack.c.b16 %v686, %v680
        %v759 = vpack.c.b16 %v693, %v687
        %v760 = vpack.c.b16 %v694, %v688
        %v761 = vpack.c.b16 %v695, %v689
        %v762 = vpack.c.b16 %v696, %v690
        %v763 = vpack.c.b16 %v697, %v691
        %v764 = vpack.c.b16 %v698, %v692
        %v765 = vpack.c.b16 %v705, %v699
        %v766 = vpack.c.b16 %v706, %v700
        %v767 = vpack.c.b16 %v707, %v701
        %v768 = vpack.c.b16 %v708, %v702
        %v769 = vpack.c.b16 %v709, %v703
        %v770 = vpack.c.b16 %v710, %v704
        %v771 = vpack.c.b16 %v717, %v711
        %v772 = vpack.c.b16 %v718, %v712
        %v773 = vpack.c.b16 %v719, %v713
        %v774 = vpack.c.b16 %v720, %v714
        %v775 = vpack.c.b16 %v721, %v715
        %v776 = vpack.c.b16 %v722, %v716
        %v777 = vpack.c.b16 %v729, %v723
        %v778 = vpack.c.b16 %v730, %v724
        %v779 = vpack.c.b16 %v731, %v725
        %v780 = vpack.c.b16 %v732, %v726
        %v781 = vpack.c.b16 %v733, %v727
        %v782 = vpack.c.b16 %v734, %v728
        %831 = vmatprep.subr.bf16.mxu0 %v736
        %832 = vmatpush1.bf16.msra.mxu0 %v735
        %833 = vmatprep.subr.bf16.mxu0 %v742
        %834 = vmatpush1.bf16.msra.mxu0 %v741
        %835 = vmatprep.subr.bf16.mxu0 %v748
        %836 = vmatpush1.bf16.msra.mxu0 %v747
        %837 = vmatprep.subr.bf16.mxu0 %v754
        %838 = vmatpush1.bf16.msra.mxu0 %v753
        %839 = vmatprep.subr.bf16.mxu0 %v760
        %840 = vmatpush1.bf16.msra.mxu0 %v759
        %841 = vmatprep.subr.bf16.mxu0 %v766
        %842 = vmatpush1.bf16.msra.mxu0 %v765
        %843 = vmatprep.subr.bf16.mxu0 %v772
        %844 = vmatpush1.bf16.msra.mxu0 %v771
        %845 = vmatprep.subr.bf16.mxu0 %v778
        %846 = vmatpush1.bf16.msra.mxu0 %v777
        %847 = vmatprep.subr.bf16.mxu0 0
        %848 = vmatpush1.bf16.msra.mxu0 0
        %849 = vmatprep.subr.bf16.mxu0 0
        %850 = vmatpush1.bf16.msra.mxu0 0
        %851 = vmatprep.subr.bf16.mxu0 0
        %852 = vmatpush1.bf16.msra.mxu0 0
        %853 = vmatprep.subr.bf16.mxu0 0
        %854 = vmatpush1.bf16.msra.mxu0 0
        %855 = vmatprep.subr.bf16.mxu0 0
        %856 = vmatpush1.bf16.msra.mxu0 0
        %857 = vmatprep.subr.bf16.mxu0 0
        %858 = vmatpush1.bf16.msra.mxu0 0
        %859 = vmatprep.subr.bf16.mxu0 0
        %860 = vmatpush1.bf16.msra.mxu0 0
        %861 = vmatprep.subr.bf16.mxu0 0
        %862 = vmatpush1.bf16.msra.mxu0 0
        %863 = vmatprep.mubr.bf16.mxu0 0
        %864 = vmatmul.mubr.bf16.gmra.mrb[0].mxu0 %v559
        %v865 = vpop.f32.mrb[0].mxu0
        %v866 = vadd.f32 %v468, %v865
        %v867 = vpop.f32.mrb[0].mxu0
        %v868 = vadd.f32 %v472, %v867
        %v869 = vpop.f32.mrb[0].mxu0
        %v870 = vadd.f32 %v468, %v869
        %v871 = vpop.f32.mrb[0].mxu0
        %v872 = vadd.f32 %v472, %v871
        %873 = vmatprep.mubr.bf16.mxu0 0
        %874 = vmatmul.mubr.bf16.gmra.mrb[0].mxu0 %v560
        %v875 = vpop.f32.mrb[0].mxu0
        %v876 = vadd.f32 %v468, %v875
        %v877 = vpop.f32.mrb[0].mxu0
        %v878 = vadd.f32 %v472, %v877
        %v879 = vpop.f32.mrb[0].mxu0
        %v880 = vadd.f32 %v468, %v879
        %v881 = vpop.f32.mrb[0].mxu0
        %v882 = vadd.f32 %v472, %v881
        %883 = vmatprep.mubr.bf16.mxu0 0
        %884 = vmatmul.mubr.bf16.gmra.mrb[0].mxu0 %v561
        %v885 = vpop.f32.mrb[0].mxu0
        %v886 = vadd.f32 %v468, %v885
        %v887 = vpop.f32.mrb[0].mxu0
        %v888 = vadd.f32 %v472, %v887
        %v889 = vpop.f32.mrb[0].mxu0
        %v890 = vadd.f32 %v468, %v889
        %v891 = vpop.f32.mrb[0].mxu0
        %v892 = vadd.f32 %v472, %v891
        %893 = vmatprep.mubr.bf16.mxu0 0
        %894 = vmatmul.mubr.bf16.gmra.mrb[0].mxu0 %v562
        %v895 = vpop.f32.mrb[0].mxu0
        %v896 = vadd.f32 %v468, %v895
        %v897 = vpop.f32.mrb[0].mxu0
        %v898 = vadd.f32 %v472, %v897
        %v899 = vpop.f32.mrb[0].mxu0
        %v900 = vadd.f32 %v468, %v899
        %v901 = vpop.f32.mrb[0].mxu0
        %v902 = vadd.f32 %v472, %v901
        %903 = vmatprep.mubr.bf16.mxu0 0
        %904 = vmatmul.mubr.bf16.gmra.mrb[0].mxu0 %v563
        %v905 = vpop.f32.mrb[0].mxu0
        %v906 = vadd.f32 %v468, %v905
        %v907 = vpop.f32.mrb[0].mxu0
        %v908 = vadd.f32 %v472, %v907
        %v909 = vpop.f32.mrb[0].mxu0
        %v910 = vadd.f32 %v468, %v909
        %v911 = vpop.f32.mrb[0].mxu0
        %v912 = vadd.f32 %v472, %v911
        %913 = vmatprep.mubr.bf16.mxu0 0
        %914 = vmatmul.mubr.bf16.gmra.mrb[0].mxu0 %v564
        %v915 = vpop.f32.mrb[0].mxu0
        %v916 = vadd.f32 %v468, %v915
        %v917 = vpop.f32.mrb[0].mxu0
        %v918 = vadd.f32 %v472, %v917
        %v919 = vpop.f32.mrb[0].mxu0
        %v920 = vadd.f32 %v468, %v919
        %v921 = vpop.f32.mrb[0].mxu0
        %v922 = vadd.f32 %v472, %v921
        %923 = vmatprep.mubr.bf16.mxu0 0
        %924 = vmatmul.mubr.bf16.gmra.mrb[0].mxu0 %v565
        %v925 = vpop.f32.mrb[0].mxu0
        %v926 = vadd.f32 %v468, %v925
        %v927 = vpop.f32.mrb[0].mxu0
        %v928 = vadd.f32 %v472, %v927
        %v929 = vpop.f32.mrb[0].mxu0
        %v930 = vadd.f32 %v468, %v929
        %v931 = vpop.f32.mrb[0].mxu0
        %v932 = vadd.f32 %v472, %v931
        %933 = vmatprep.mubr.bf16.mxu0 0
        %934 = vmatmul.mubr.bf16.gmra.mrb[0].mxu0 %v566
        %v935 = vpop.f32.mrb[0].mxu0
        %v936 = vadd.f32 %v468, %v935
        %v937 = vpop.f32.mrb[0].mxu0
        %v938 = vadd.f32 %v472, %v937
        %v939 = vpop.f32.mrb[0].mxu0
        %v940 = vadd.f32 %v468, %v939
        %v941 = vpop.f32.mrb[0].mxu0
        %v942 = vadd.f32 %v472, %v941
        %943 = vmatprep.mubr.bf16.mxu0 0
        %944 = vmatmul.mubr.bf16.gmra.mrb[0].mxu0 %v567
        %v945 = vpop.f32.mrb[0].mxu0
        %v946 = vadd.f32 %v468, %v945
        %v947 = vpop.f32.mrb[0].mxu0
        %v948 = vadd.f32 %v472, %v947
        %v949 = vpop.f32.mrb[0].mxu0
        %v950 = vadd.f32 %v468, %v949
        %v951 = vpop.f32.mrb[0].mxu0
        %v952 = vadd.f32 %v472, %v951
        %953 = vmatprep.mubr.bf16.mxu0 0
        %954 = vmatmul.mubr.bf16.gmra.mrb[0].mxu0 %v568
        %v955 = vpop.f32.mrb[0].mxu0
        %v956 = vadd.f32 %v468, %v955
        %v957 = vpop.f32.mrb[0].mxu0
        %v958 = vadd.f32 %v472, %v957
        %v959 = vpop.f32.mrb[0].mxu0
        %v960 = vadd.f32 %v468, %v959
        %v961 = vpop.f32.mrb[0].mxu0
        %v962 = vadd.f32 %v472, %v961
        %963 = vmatprep.mubr.bf16.mxu0 0
        %964 = vmatmul.mubr.bf16.gmra.mrb[0].mxu0 %v569
        %v965 = vpop.f32.mrb[0].mxu0
        %v966 = vadd.f32 %v468, %v965
        %v967 = vpop.f32.mrb[0].mxu0
        %v968 = vadd.f32 %v472, %v967
        %v969 = vpop.f32.mrb[0].mxu0
        %v970 = vadd.f32 %v468, %v969
        %v971 = vpop.f32.mrb[0].mxu0
        %v972 = vadd.f32 %v472, %v971
        %973 = vmatprep.mubr.bf16.mxu0 0
        %974 = vmatmul.mubr.bf16.gmra.mrb[0].mxu0 %v570
        %v975 = vpop.f32.mrb[0].mxu0
        %v976 = vadd.f32 %v468, %v975
        %v977 = vpop.f32.mrb[0].mxu0
        %v978 = vadd.f32 %v472, %v977
        %v979 = vpop.f32.mrb[0].mxu0
        %v980 = vadd.f32 %v468, %v979
        %v981 = vpop.f32.mrb[0].mxu0
        %v982 = vadd.f32 %v472, %v981
        %983 = vmatprep.mubr.bf16.mxu0 0
        %984 = vmatmul.mubr.bf16.gmra.mrb[0].mxu0 %v571
        %v985 = vpop.f32.mrb[0].mxu0
        %v986 = vadd.f32 %v468, %v985
        %v987 = vpop.f32.mrb[0].mxu0
        %v988 = vadd.f32 %v472, %v987
        %v989 = vpop.f32.mrb[0].mxu0
        %v990 = vadd.f32 %v468, %v989
        %v991 = vpop.f32.mrb[0].mxu0
        %v992 = vadd.f32 %v472, %v991
        %993 = vmatprep.mubr.bf16.mxu0 0
        %994 = vmatmul.mubr.bf16.gmra.mrb[0].mxu0 %v572
        %v995 = vpop.f32.mrb[0].mxu0
        %v996 = vadd.f32 %v468, %v995
        %v997 = vpop.f32.mrb[0].mxu0
        %v998 = vadd.f32 %v472, %v997
        %v999 = vpop.f32.mrb[0].mxu0
        %v1000 = vadd.f32 %v468, %v999
        %v1001 = vpop.f32.mrb[0].mxu0
        %v1002 = vadd.f32 %v472, %v1001
        %1003 = vmatprep.mubr.bf16.mxu0 0
        %1004 = vmatmul.mubr.bf16.gmra.mrb[0].mxu0 %v573
        %v1005 = vpop.f32.mrb[0].mxu0
        %v1006 = vadd.f32 %v468, %v1005
        %v1007 = vpop.f32.mrb[0].mxu0
        %v1008 = vadd.f32 %v472, %v1007
        %v1009 = vpop.f32.mrb[0].mxu0
        %v1010 = vadd.f32 %v468, %v1009
        %v1011 = vpop.f32.mrb[0].mxu0
        %v1012 = vadd.f32 %v472, %v1011
        %1013 = vmatprep.mubr.bf16.mxu0 0
        %1014 = vmatmul.mubr.bf16.gmra.mrb[0].mxu0 %v574
        %v1015 = vpop.f32.mrb[0].mxu0
        %v1016 = vadd.f32 %v468, %v1015
        %v1017 = vpop.f32.mrb[0].mxu0
        %v1018 = vadd.f32 %v472, %v1017
        %v1019 = vpop.f32.mrb[0].mxu0
        %v1020 = vadd.f32 %v468, %v1019
        %v1021 = vpop.f32.mrb[0].mxu0
        %v1022 = vadd.f32 %v472, %v1021
        %1023 = vdwg.mxu0
        %1024 = vmatprep.subr.bf16.mxu0 %v738
        %1025 = vmatpush1.bf16.msra.mxu0 %v737
        %1026 = vmatprep.subr.bf16.mxu0 %v744
        %1027 = vmatpush1.bf16.msra.mxu0 %v743
        %1028 = vmatprep.subr.bf16.mxu0 %v750
        %1029 = vmatpush1.bf16.msra.mxu0 %v749
        %1030 = vmatprep.subr.bf16.mxu0 %v756
        %1031 = vmatpush1.bf16.msra.mxu0 %v755
        %1032 = vmatprep.subr.bf16.mxu0 %v762
        %1033 = vmatpush1.bf16.msra.mxu0 %v761
        %1034 = vmatprep.subr.bf16.mxu0 %v768
        %1035 = vmatpush1.bf16.msra.mxu0 %v767
        %1036 = vmatprep.subr.bf16.mxu0 %v774
        %1037 = vmatpush1.bf16.msra.mxu0 %v773
        %1038 = vmatprep.subr.bf16.mxu0 %v780
        %1039 = vmatpush1.bf16.msra.mxu0 %v779
        %1040 = vmatprep.subr.bf16.mxu0 0
        %1041 = vmatpush1.bf16.msra.mxu0 0
        %1042 = vmatprep.subr.bf16.mxu0 0
        %1043 = vmatpush1.bf16.msra.mxu0 0
        %1044 = vmatprep.subr.bf16.mxu0 0
        %1045 = vmatpush1.bf16.msra.mxu0 0
        %1046 = vmatprep.subr.bf16.mxu0 0
        %1047 = vmatpush1.bf16.msra.mxu0 0
        %1048 = vmatprep.subr.bf16.mxu0 0
        %1049 = vmatpush1.bf16.msra.mxu0 0
        %1050 = vmatprep.subr.bf16.mxu0 0
        %1051 = vmatpush1.bf16.msra.mxu0 0
        %1052 = vmatprep.subr.bf16.mxu0 0
        %1053 = vmatpush1.bf16.msra.mxu0 0
        %1054 = vmatprep.subr.bf16.mxu0 0
        %1055 = vmatpush1.bf16.msra.mxu0 0
        %1056 = vmatprep.mubr.bf16.mxu0 0
        %1057 = vmatmul.mubr.bf16.gmra.mrb[0].mxu0 %v559
        %v1058 = vpop.f32.mrb[0].mxu0
        %v1059 = vadd.f32 %v476, %v1058
        %v1060 = vpop.f32.mrb[0].mxu0
        %v1061 = vadd.f32 %v480, %v1060
        %v1062 = vpop.f32.mrb[0].mxu0
        %v1063 = vadd.f32 %v476, %v1062
        %v1064 = vpop.f32.mrb[0].mxu0
        %v1065 = vadd.f32 %v480, %v1064
        %1066 = vmatprep.mubr.bf16.mxu0 0
        %1067 = vmatmul.mubr.bf16.gmra.mrb[0].mxu0 %v560
        %v1068 = vpop.f32.mrb[0].mxu0
        %v1069 = vadd.f32 %v476, %v1068
        %v1070 = vpop.f32.mrb[0].mxu0
        %v1071 = vadd.f32 %v480, %v1070
        %v1072 = vpop.f32.mrb[0].mxu0
        %v1073 = vadd.f32 %v476, %v1072
        %v1074 = vpop.f32.mrb[0].mxu0
        %v1075 = vadd.f32 %v480, %v1074
        %1076 = vmatprep.mubr.bf16.mxu0 0
        %1077 = vmatmul.mubr.bf16.gmra.mrb[0].mxu0 %v561
        %v1078 = vpop.f32.mrb[0].mxu0
        %v1079 = vadd.f32 %v476, %v1078
        %v1080 = vpop.f32.mrb[0].mxu0
        %v1081 = vadd.f32 %v480, %v1080
        %v1082 = vpop.f32.mrb[0].mxu0
        %v1083 = vadd.f32 %v476, %v1082
        %v1084 = vpop.f32.mrb[0].mxu0
        %v1085 = vadd.f32 %v480, %v1084
        %1086 = vmatprep.mubr.bf16.mxu0 0
        %1087 = vmatmul.mubr.bf16.gmra.mrb[0].mxu0 %v562
        %v1088 = vpop.f32.mrb[0].mxu0
        %v1089 = vadd.f32 %v476, %v1088
        %v1090 = vpop.f32.mrb[0].mxu0
        %v1091 = vadd.f32 %v480, %v1090
        %v1092 = vpop.f32.mrb[0].mxu0
        %v1093 = vadd.f32 %v476, %v1092
        %v1094 = vpop.f32.mrb[0].mxu0
        %v1095 = vadd.f32 %v480, %v1094
        %1096 = vmatprep.mubr.bf16.mxu0 0
        %1097 = vmatmul.mubr.bf16.gmra.mrb[0].mxu0 %v563
        %v1098 = vpop.f32.mrb[0].mxu0
        %v1099 = vadd.f32 %v476, %v1098
        %v1100 = vpop.f32.mrb[0].mxu0
        %v1101 = vadd.f32 %v480, %v1100
        %v1102 = vpop.f32.mrb[0].mxu0
        %v1103 = vadd.f32 %v476, %v1102
        %v1104 = vpop.f32.mrb[0].mxu0
        %v1105 = vadd.f32 %v480, %v1104
        %1106 = vmatprep.mubr.bf16.mxu0 0
        %1107 = vmatmul.mubr.bf16.gmra.mrb[0].mxu0 %v564
        %v1108 = vpop.f32.mrb[0].mxu0
        %v1109 = vadd.f32 %v476, %v1108
        %v1110 = vpop.f32.mrb[0].mxu0
        %v1111 = vadd.f32 %v480, %v1110
        %v1112 = vpop.f32.mrb[0].mxu0
        %v1113 = vadd.f32 %v476, %v1112
        %v1114 = vpop.f32.mrb[0].mxu0
        %v1115 = vadd.f32 %v480, %v1114
        %1116 = vmatprep.mubr.bf16.mxu0 0
        %1117 = vmatmul.mubr.bf16.gmra.mrb[0].mxu0 %v565
        %v1118 = vpop.f32.mrb[0].mxu0
        %v1119 = vadd.f32 %v476, %v1118
        %v1120 = vpop.f32.mrb[0].mxu0
        %v1121 = vadd.f32 %v480, %v1120
        %v1122 = vpop.f32.mrb[0].mxu0
        %v1123 = vadd.f32 %v476, %v1122
        %v1124 = vpop.f32.mrb[0].mxu0
        %v1125 = vadd.f32 %v480, %v1124
        %1126 = vmatprep.mubr.bf16.mxu0 0
        %1127 = vmatmul.mubr.bf16.gmra.mrb[0].mxu0 %v566
        %v1128 = vpop.f32.mrb[0].mxu0
        %v1129 = vadd.f32 %v476, %v1128
        %v1130 = vpop.f32.mrb[0].mxu0
        %v1131 = vadd.f32 %v480, %v1130
        %v1132 = vpop.f32.mrb[0].mxu0
        %v1133 = vadd.f32 %v476, %v1132
        %v1134 = vpop.f32.mrb[0].mxu0
        %v1135 = vadd.f32 %v480, %v1134
        %1136 = vmatprep.mubr.bf16.mxu0 0
        %1137 = vmatmul.mubr.bf16.gmra.mrb[0].mxu0 %v567
        %v1138 = vpop.f32.mrb[0].mxu0
        %v1139 = vadd.f32 %v476, %v1138
        %v1140 = vpop.f32.mrb[0].mxu0
        %v1141 = vadd.f32 %v480, %v1140
        %v1142 = vpop.f32.mrb[0].mxu0
        %v1143 = vadd.f32 %v476, %v1142
        %v1144 = vpop.f32.mrb[0].mxu0
        %v1145 = vadd.f32 %v480, %v1144
        %1146 = vmatprep.mubr.bf16.mxu0 0
        %1147 = vmatmul.mubr.bf16.gmra.mrb[0].mxu0 %v568
        %v1148 = vpop.f32.mrb[0].mxu0
        %v1149 = vadd.f32 %v476, %v1148
        %v1150 = vpop.f32.mrb[0].mxu0
        %v1151 = vadd.f32 %v480, %v1150
        %v1152 = vpop.f32.mrb[0].mxu0
        %v1153 = vadd.f32 %v476, %v1152
        %v1154 = vpop.f32.mrb[0].mxu0
        %v1155 = vadd.f32 %v480, %v1154
        %1156 = vmatprep.mubr.bf16.mxu0 0
        %1157 = vmatmul.mubr.bf16.gmra.mrb[0].mxu0 %v569
        %v1158 = vpop.f32.mrb[0].mxu0
        %v1159 = vadd.f32 %v476, %v1158
        %v1160 = vpop.f32.mrb[0].mxu0
        %v1161 = vadd.f32 %v480, %v1160
        %v1162 = vpop.f32.mrb[0].mxu0
        %v1163 = vadd.f32 %v476, %v1162
        %v1164 = vpop.f32.mrb[0].mxu0
        %v1165 = vadd.f32 %v480, %v1164
        %1166 = vmatprep.mubr.bf16.mxu0 0
        %1167 = vmatmul.mubr.bf16.gmra.mrb[0].mxu0 %v570
        %v1168 = vpop.f32.mrb[0].mxu0
        %v1169 = vadd.f32 %v476, %v1168
        %v1170 = vpop.f32.mrb[0].mxu0
        %v1171 = vadd.f32 %v480, %v1170
        %v1172 = vpop.f32.mrb[0].mxu0
        %v1173 = vadd.f32 %v476, %v1172
        %v1174 = vpop.f32.mrb[0].mxu0
        %v1175 = vadd.f32 %v480, %v1174
        %1176 = vmatprep.mubr.bf16.mxu0 0
        %1177 = vmatmul.mubr.bf16.gmra.mrb[0].mxu0 %v571
        %v1178 = vpop.f32.mrb[0].mxu0
        %v1179 = vadd.f32 %v476, %v1178
        %v1180 = vpop.f32.mrb[0].mxu0
        %v1181 = vadd.f32 %v480, %v1180
        %v1182 = vpop.f32.mrb[0].mxu0
        %v1183 = vadd.f32 %v476, %v1182
        %v1184 = vpop.f32.mrb[0].mxu0
        %v1185 = vadd.f32 %v480, %v1184
        %1186 = vmatprep.mubr.bf16.mxu0 0
        %1187 = vmatmul.mubr.bf16.gmra.mrb[0].mxu0 %v572
        %v1188 = vpop.f32.mrb[0].mxu0
        %v1189 = vadd.f32 %v476, %v1188
        %v1190 = vpop.f32.mrb[0].mxu0
        %v1191 = vadd.f32 %v480, %v1190
        %v1192 = vpop.f32.mrb[0].mxu0
        %v1193 = vadd.f32 %v476, %v1192
        %v1194 = vpop.f32.mrb[0].mxu0
        %v1195 = vadd.f32 %v480, %v1194
        %1196 = vmatprep.mubr.bf16.mxu0 0
        %1197 = vmatmul.mubr.bf16.gmra.mrb[0].mxu0 %v573
        %v1198 = vpop.f32.mrb[0].mxu0
        %v1199 = vadd.f32 %v476, %v1198
        %v1200 = vpop.f32.mrb[0].mxu0
        %v1201 = vadd.f32 %v480, %v1200
        %v1202 = vpop.f32.mrb[0].mxu0
        %v1203 = vadd.f32 %v476, %v1202
        %v1204 = vpop.f32.mrb[0].mxu0
        %v1205 = vadd.f32 %v480, %v1204
        %1206 = vmatprep.mubr.bf16.mxu0 0
        %1207 = vmatmul.mubr.bf16.gmra.mrb[0].mxu0 %v574
        %v1208 = vpop.f32.mrb[0].mxu0
        %v1209 = vadd.f32 %v476, %v1208
        %v1210 = vpop.f32.mrb[0].mxu0
        %v1211 = vadd.f32 %v480, %v1210
        %v1212 = vpop.f32.mrb[0].mxu0
        %v1213 = vadd.f32 %v476, %v1212
        %v1214 = vpop.f32.mrb[0].mxu0
        %v1215 = vadd.f32 %v480, %v1214
        %1216 = vdwg.mxu0
        %1217 = vmatprep.subr.bf16.mxu0 %v740
        %1218 = vmatpush1.bf16.msra.mxu0 %v739
        %1219 = vmatprep.subr.bf16.mxu0 %v746
        %1220 = vmatpush1.bf16.msra.mxu0 %v745
        %1221 = vmatprep.subr.bf16.mxu0 %v752
        %1222 = vmatpush1.bf16.msra.mxu0 %v751
        %1223 = vmatprep.subr.bf16.mxu0 %v758
        %1224 = vmatpush1.bf16.msra.mxu0 %v757
        %1225 = vmatprep.subr.bf16.mxu0 %v764
        %1226 = vmatpush1.bf16.msra.mxu0 %v763
        %1227 = vmatprep.subr.bf16.mxu0 %v770
        %1228 = vmatpush1.bf16.msra.mxu0 %v769
        %1229 = vmatprep.subr.bf16.mxu0 %v776
        %1230 = vmatpush1.bf16.msra.mxu0 %v775
        %1231 = vmatprep.subr.bf16.mxu0 %v782
        %1232 = vmatpush1.bf16.msra.mxu0 %v781
        %1233 = vmatprep.subr.bf16.mxu0 0
        %1234 = vmatpush1.bf16.msra.mxu0 0
        %1235 = vmatprep.subr.bf16.mxu0 0
        %1236 = vmatpush1.bf16.msra.mxu0 0
        %1237 = vmatprep.subr.bf16.mxu0 0
        %1238 = vmatpush1.bf16.msra.mxu0 0
        %1239 = vmatprep.subr.bf16.mxu0 0
        %1240 = vmatpush1.bf16.msra.mxu0 0
        %1241 = vmatprep.subr.bf16.mxu0 0
        %1242 = vmatpush1.bf16.msra.mxu0 0
        %1243 = vmatprep.subr.bf16.mxu0 0
        %1244 = vmatpush1.bf16.msra.mxu0 0
        %1245 = vmatprep.subr.bf16.mxu0 0
        %1246 = vmatpush1.bf16.msra.mxu0 0
        %1247 = vmatprep.subr.bf16.mxu0 0
        %1248 = vmatpush1.bf16.msra.mxu0 0
        %1249 = vmatprep.mubr.bf16.mxu0 0
        %1250 = vmatmul.mubr.bf16.gmra.mrb[0].mxu0 %v559
        %v1251 = vpop.f32.mrb[0].mxu0
        %v1252 = vadd.f32 %v484, %v1251
        %v1253 = vpop.f32.mrb[0].mxu0
        %v1254 = vadd.f32 %v488, %v1253
        %v1255 = vpop.f32.mrb[0].mxu0
        %v1256 = vadd.f32 %v484, %v1255
        %v1257 = vpop.f32.mrb[0].mxu0
        %v1258 = vadd.f32 %v488, %v1257
        %1259 = vmatprep.mubr.bf16.mxu0 0
        %1260 = vmatmul.mubr.bf16.gmra.mrb[0].mxu0 %v560
        %v1261 = vpop.f32.mrb[0].mxu0
        %v1262 = vadd.f32 %v484, %v1261
        %v1263 = vpop.f32.mrb[0].mxu0
        %v1264 = vadd.f32 %v488, %v1263
        %v1265 = vpop.f32.mrb[0].mxu0
        %v1266 = vadd.f32 %v484, %v1265
        %v1267 = vpop.f32.mrb[0].mxu0
        %v1268 = vadd.f32 %v488, %v1267
        %1269 = vmatprep.mubr.bf16.mxu0 0
        %1270 = vmatmul.mubr.bf16.gmra.mrb[0].mxu0 %v561
        %v1271 = vpop.f32.mrb[0].mxu0
        %v1272 = vadd.f32 %v484, %v1271
        %v1273 = vpop.f32.mrb[0].mxu0
        %v1274 = vadd.f32 %v488, %v1273
        %v1275 = vpop.f32.mrb[0].mxu0
        %v1276 = vadd.f32 %v484, %v1275
        %v1277 = vpop.f32.mrb[0].mxu0
        %v1278 = vadd.f32 %v488, %v1277
        %1279 = vmatprep.mubr.bf16.mxu0 0
        %1280 = vmatmul.mubr.bf16.gmra.mrb[0].mxu0 %v562
        %v1281 = vpop.f32.mrb[0].mxu0
        %v1282 = vadd.f32 %v484, %v1281
        %v1283 = vpop.f32.mrb[0].mxu0
        %v1284 = vadd.f32 %v488, %v1283
        %v1285 = vpop.f32.mrb[0].mxu0
        %v1286 = vadd.f32 %v484, %v1285
        %v1287 = vpop.f32.mrb[0].mxu0
        %v1288 = vadd.f32 %v488, %v1287
        %1289 = vmatprep.mubr.bf16.mxu0 0
        %1290 = vmatmul.mubr.bf16.gmra.mrb[0].mxu0 %v563
        %v1291 = vpop.f32.mrb[0].mxu0
        %v1292 = vadd.f32 %v484, %v1291
        %v1293 = vpop.f32.mrb[0].mxu0
        %v1294 = vadd.f32 %v488, %v1293
        %v1295 = vpop.f32.mrb[0].mxu0
        %v1296 = vadd.f32 %v484, %v1295
        %v1297 = vpop.f32.mrb[0].mxu0
        %v1298 = vadd.f32 %v488, %v1297
        %1299 = vmatprep.mubr.bf16.mxu0 0
        %1300 = vmatmul.mubr.bf16.gmra.mrb[0].mxu0 %v564
        %v1301 = vpop.f32.mrb[0].mxu0
        %v1302 = vadd.f32 %v484, %v1301
        %v1303 = vpop.f32.mrb[0].mxu0
        %v1304 = vadd.f32 %v488, %v1303
        %v1305 = vpop.f32.mrb[0].mxu0
        %v1306 = vadd.f32 %v484, %v1305
        %v1307 = vpop.f32.mrb[0].mxu0
        %v1308 = vadd.f32 %v488, %v1307
        %1309 = vmatprep.mubr.bf16.mxu0 0
        %1310 = vmatmul.mubr.bf16.gmra.mrb[0].mxu0 %v565
        %v1311 = vpop.f32.mrb[0].mxu0
        %v1312 = vadd.f32 %v484, %v1311
        %v1313 = vpop.f32.mrb[0].mxu0
        %v1314 = vadd.f32 %v488, %v1313
        %v1315 = vpop.f32.mrb[0].mxu0
        %v1316 = vadd.f32 %v484, %v1315
        %v1317 = vpop.f32.mrb[0].mxu0
        %v1318 = vadd.f32 %v488, %v1317
        %1319 = vmatprep.mubr.bf16.mxu0 0
        %1320 = vmatmul.mubr.bf16.gmra.mrb[0].mxu0 %v566
        %v1321 = vpop.f32.mrb[0].mxu0
        %v1322 = vadd.f32 %v484, %v1321
        %v1323 = vpop.f32.mrb[0].mxu0
        %v1324 = vadd.f32 %v488, %v1323
        %v1325 = vpop.f32.mrb[0].mxu0
        %v1326 = vadd.f32 %v484, %v1325
        %v1327 = vpop.f32.mrb[0].mxu0
        %v1328 = vadd.f32 %v488, %v1327
        %1329 = vmatprep.mubr.bf16.mxu0 0
        %1330 = vmatmul.mubr.bf16.gmra.mrb[0].mxu0 %v567
        %v1331 = vpop.f32.mrb[0].mxu0
        %v1332 = vadd.f32 %v484, %v1331
        %v1333 = vpop.f32.mrb[0].mxu0
        %v1334 = vadd.f32 %v488, %v1333
        %v1335 = vpop.f32.mrb[0].mxu0
        %v1336 = vadd.f32 %v484, %v1335
        %v1337 = vpop.f32.mrb[0].mxu0
        %v1338 = vadd.f32 %v488, %v1337
        %1339 = vmatprep.mubr.bf16.mxu0 0
        %1340 = vmatmul.mubr.bf16.gmra.mrb[0].mxu0 %v568
        %v1341 = vpop.f32.mrb[0].mxu0
        %v1342 = vadd.f32 %v484, %v1341
        %v1343 = vpop.f32.mrb[0].mxu0
        %v1344 = vadd.f32 %v488, %v1343
        %v1345 = vpop.f32.mrb[0].mxu0
        %v1346 = vadd.f32 %v484, %v1345
        %v1347 = vpop.f32.mrb[0].mxu0
        %v1348 = vadd.f32 %v488, %v1347
        %1349 = vmatprep.mubr.bf16.mxu0 0
        %1350 = vmatmul.mubr.bf16.gmra.mrb[0].mxu0 %v569
        %v1351 = vpop.f32.mrb[0].mxu0
        %v1352 = vadd.f32 %v484, %v1351
        %v1353 = vpop.f32.mrb[0].mxu0
        %v1354 = vadd.f32 %v488, %v1353
        %v1355 = vpop.f32.mrb[0].mxu0
        %v1356 = vadd.f32 %v484, %v1355
        %v1357 = vpop.f32.mrb[0].mxu0
        %v1358 = vadd.f32 %v488, %v1357
        %1359 = vmatprep.mubr.bf16.mxu0 0
        %1360 = vmatmul.mubr.bf16.gmra.mrb[0].mxu0 %v570
        %v1361 = vpop.f32.mrb[0].mxu0
        %v1362 = vadd.f32 %v484, %v1361
        %v1363 = vpop.f32.mrb[0].mxu0
        %v1364 = vadd.f32 %v488, %v1363
        %v1365 = vpop.f32.mrb[0].mxu0
        %v1366 = vadd.f32 %v484, %v1365
        %v1367 = vpop.f32.mrb[0].mxu0
        %v1368 = vadd.f32 %v488, %v1367
        %1369 = vmatprep.mubr.bf16.mxu0 0
        %1370 = vmatmul.mubr.bf16.gmra.mrb[0].mxu0 %v571
        %v1371 = vpop.f32.mrb[0].mxu0
        %v1372 = vadd.f32 %v484, %v1371
        %v1373 = vpop.f32.mrb[0].mxu0
        %v1374 = vadd.f32 %v488, %v1373
        %v1375 = vpop.f32.mrb[0].mxu0
        %v1376 = vadd.f32 %v484, %v1375
        %v1377 = vpop.f32.mrb[0].mxu0
        %v1378 = vadd.f32 %v488, %v1377
        %1379 = vmatprep.mubr.bf16.mxu0 0
        %1380 = vmatmul.mubr.bf16.gmra.mrb[0].mxu0 %v572
        %v1381 = vpop.f32.mrb[0].mxu0
        %v1382 = vadd.f32 %v484, %v1381
        %v1383 = vpop.f32.mrb[0].mxu0
        %v1384 = vadd.f32 %v488, %v1383
        %v1385 = vpop.f32.mrb[0].mxu0
        %v1386 = vadd.f32 %v484, %v1385
        %v1387 = vpop.f32.mrb[0].mxu0
        %v1388 = vadd.f32 %v488, %v1387
        %1389 = vmatprep.mubr.bf16.mxu0 0
        %1390 = vmatmul.mubr.bf16.gmra.mrb[0].mxu0 %v573
        %v1391 = vpop.f32.mrb[0].mxu0
        %v1392 = vadd.f32 %v484, %v1391
        %v1393 = vpop.f32.mrb[0].mxu0
        %v1394 = vadd.f32 %v488, %v1393
        %v1395 = vpop.f32.mrb[0].mxu0
        %v1396 = vadd.f32 %v484, %v1395
        %v1397 = vpop.f32.mrb[0].mxu0
        %v1398 = vadd.f32 %v488, %v1397
        %1399 = vmatprep.mubr.bf16.mxu0 0
        %1400 = vmatmul.mubr.bf16.gmra.mrb[0].mxu0 %v574
        %v1401 = vpop.f32.mrb[0].mxu0
        %v1402 = vadd.f32 %v484, %v1401
        %v1403 = vpop.f32.mrb[0].mxu0
        %v1404 = vadd.f32 %v488, %v1403
        %v1405 = vpop.f32.mrb[0].mxu0
        %v1406 = vadd.f32 %v484, %v1405
        %v1407 = vpop.f32.mrb[0].mxu0
        %v1408 = vadd.f32 %v488, %v1407
        %1409 = vdwg.mxu0
        %v1410 = vmul.f32 %v866, %v866
        %v1411 = vmul.f32 %v868, %v868
        %v1412 = vmul.f32 %v1059, %v1059
        %v1413 = vmul.f32 %v1061, %v1061
        %v1414 = vmul.f32 %v1252, %v1252
        %v1415 = vmul.f32 %v1254, %v1254
        %v1416 = vmul.f32 %v870, %v870
        %v1417 = vmul.f32 %v872, %v872
        %v1418 = vmul.f32 %v1063, %v1063
        %v1419 = vmul.f32 %v1065, %v1065
        %v1420 = vmul.f32 %v1256, %v1256
        %v1421 = vmul.f32 %v1258, %v1258
        %v1422 = vmul.f32 %v876, %v876
        %v1423 = vmul.f32 %v878, %v878
        %v1424 = vmul.f32 %v1069, %v1069
        %v1425 = vmul.f32 %v1071, %v1071
        %v1426 = vmul.f32 %v1262, %v1262
        %v1427 = vmul.f32 %v1264, %v1264
        %v1428 = vmul.f32 %v880, %v880
        %v1429 = vmul.f32 %v882, %v882
        %v1430 = vmul.f32 %v1073, %v1073
        %v1431 = vmul.f32 %v1075, %v1075
        %v1432 = vmul.f32 %v1266, %v1266
        %v1433 = vmul.f32 %v1268, %v1268
        %v1434 = vmul.f32 %v886, %v886
        %v1435 = vmul.f32 %v888, %v888
        %v1436 = vmul.f32 %v1079, %v1079
        %v1437 = vmul.f32 %v1081, %v1081
        %v1438 = vmul.f32 %v1272, %v1272
        %v1439 = vmul.f32 %v1274, %v1274
        %v1440 = vmul.f32 %v890, %v890
        %v1441 = vmul.f32 %v892, %v892
        %v1442 = vmul.f32 %v1083, %v1083
        %v1443 = vmul.f32 %v1085, %v1085
        %v1444 = vmul.f32 %v1276, %v1276
        %v1445 = vmul.f32 %v1278, %v1278
        %v1446 = vmul.f32 %v896, %v896
        %v1447 = vmul.f32 %v898, %v898
        %v1448 = vmul.f32 %v1089, %v1089
        %v1449 = vmul.f32 %v1091, %v1091
        %v1450 = vmul.f32 %v1282, %v1282
        %v1451 = vmul.f32 %v1284, %v1284
        %v1452 = vmul.f32 %v900, %v900
        %v1453 = vmul.f32 %v902, %v902
        %v1454 = vmul.f32 %v1093, %v1093
        %v1455 = vmul.f32 %v1095, %v1095
        %v1456 = vmul.f32 %v1286, %v1286
        %v1457 = vmul.f32 %v1288, %v1288
        %v1458 = vmul.f32 %v906, %v906
        %v1459 = vmul.f32 %v908, %v908
        %v1460 = vmul.f32 %v1099, %v1099
        %v1461 = vmul.f32 %v1101, %v1101
        %v1462 = vmul.f32 %v1292, %v1292
        %v1463 = vmul.f32 %v1294, %v1294
        %v1464 = vmul.f32 %v910, %v910
        %v1465 = vmul.f32 %v912, %v912
        %v1466 = vmul.f32 %v1103, %v1103
        %v1467 = vmul.f32 %v1105, %v1105
        %v1468 = vmul.f32 %v1296, %v1296
        %v1469 = vmul.f32 %v1298, %v1298
        %v1470 = vmul.f32 %v916, %v916
        %v1471 = vmul.f32 %v918, %v918
        %v1472 = vmul.f32 %v1109, %v1109
        %v1473 = vmul.f32 %v1111, %v1111
        %v1474 = vmul.f32 %v1302, %v1302
        %v1475 = vmul.f32 %v1304, %v1304
        %v1476 = vmul.f32 %v920, %v920
        %v1477 = vmul.f32 %v922, %v922
        %v1478 = vmul.f32 %v1113, %v1113
        %v1479 = vmul.f32 %v1115, %v1115
        %v1480 = vmul.f32 %v1306, %v1306
        %v1481 = vmul.f32 %v1308, %v1308
        %v1482 = vmul.f32 %v926, %v926
        %v1483 = vmul.f32 %v928, %v928
        %v1484 = vmul.f32 %v1119, %v1119
        %v1485 = vmul.f32 %v1121, %v1121
        %v1486 = vmul.f32 %v1312, %v1312
        %v1487 = vmul.f32 %v1314, %v1314
        %v1488 = vmul.f32 %v930, %v930
        %v1489 = vmul.f32 %v932, %v932
        %v1490 = vmul.f32 %v1123, %v1123
        %v1491 = vmul.f32 %v1125, %v1125
        %v1492 = vmul.f32 %v1316, %v1316
        %v1493 = vmul.f32 %v1318, %v1318
        %v1494 = vmul.f32 %v936, %v936
        %v1495 = vmul.f32 %v938, %v938
        %v1496 = vmul.f32 %v1129, %v1129
        %v1497 = vmul.f32 %v1131, %v1131
        %v1498 = vmul.f32 %v1322, %v1322
        %v1499 = vmul.f32 %v1324, %v1324
        %v1500 = vmul.f32 %v940, %v940
        %v1501 = vmul.f32 %v942, %v942
        %v1502 = vmul.f32 %v1133, %v1133
        %v1503 = vmul.f32 %v1135, %v1135
        %v1504 = vmul.f32 %v1326, %v1326
        %v1505 = vmul.f32 %v1328, %v1328
        %v1506 = vmul.f32 %v946, %v946
        %v1507 = vmul.f32 %v948, %v948
        %v1508 = vmul.f32 %v1139, %v1139
        %v1509 = vmul.f32 %v1141, %v1141
        %v1510 = vmul.f32 %v1332, %v1332
        %v1511 = vmul.f32 %v1334, %v1334
        %v1512 = vmul.f32 %v950, %v950
        %v1513 = vmul.f32 %v952, %v952
        %v1514 = vmul.f32 %v1143, %v1143
        %v1515 = vmul.f32 %v1145, %v1145
        %v1516 = vmul.f32 %v1336, %v1336
        %v1517 = vmul.f32 %v1338, %v1338
        %v1518 = vmul.f32 %v956, %v956
        %v1519 = vmul.f32 %v958, %v958
        %v1520 = vmul.f32 %v1149, %v1149
        %v1521 = vmul.f32 %v1151, %v1151
        %v1522 = vmul.f32 %v1342, %v1342
        %v1523 = vmul.f32 %v1344, %v1344
        %v1524 = vmul.f32 %v960, %v960
        %v1525 = vmul.f32 %v962, %v962
        %v1526 = vmul.f32 %v1153, %v1153
        %v1527 = vmul.f32 %v1155, %v1155
        %v1528 = vmul.f32 %v1346, %v1346
        %v1529 = vmul.f32 %v1348, %v1348
        %v1530 = vmul.f32 %v966, %v966
        %v1531 = vmul.f32 %v968, %v968
        %v1532 = vmul.f32 %v1159, %v1159
        %v1533 = vmul.f32 %v1161, %v1161
        %v1534 = vmul.f32 %v1352, %v1352
        %v1535 = vmul.f32 %v1354, %v1354
        %v1536 = vmul.f32 %v970, %v970
        %v1537 = vmul.f32 %v972, %v972
        %v1538 = vmul.f32 %v1163, %v1163
        %v1539 = vmul.f32 %v1165, %v1165
        %v1540 = vmul.f32 %v1356, %v1356
        %v1541 = vmul.f32 %v1358, %v1358
        %v1542 = vmul.f32 %v976, %v976
        %v1543 = vmul.f32 %v978, %v978
        %v1544 = vmul.f32 %v1169, %v1169
        %v1545 = vmul.f32 %v1171, %v1171
        %v1546 = vmul.f32 %v1362, %v1362
        %v1547 = vmul.f32 %v1364, %v1364
        %v1548 = vmul.f32 %v980, %v980
        %v1549 = vmul.f32 %v982, %v982
        %v1550 = vmul.f32 %v1173, %v1173
        %v1551 = vmul.f32 %v1175, %v1175
        %v1552 = vmul.f32 %v1366, %v1366
        %v1553 = vmul.f32 %v1368, %v1368
        %v1554 = vmul.f32 %v986, %v986
        %v1555 = vmul.f32 %v988, %v988
        %v1556 = vmul.f32 %v1179, %v1179
        %v1557 = vmul.f32 %v1181, %v1181
        %v1558 = vmul.f32 %v1372, %v1372
        %v1559 = vmul.f32 %v1374, %v1374
        %v1560 = vmul.f32 %v990, %v990
        %v1561 = vmul.f32 %v992, %v992
        %v1562 = vmul.f32 %v1183, %v1183
        %v1563 = vmul.f32 %v1185, %v1185
        %v1564 = vmul.f32 %v1376, %v1376
        %v1565 = vmul.f32 %v1378, %v1378
        %v1566 = vmul.f32 %v996, %v996
        %v1567 = vmul.f32 %v998, %v998
        %v1568 = vmul.f32 %v1189, %v1189
        %v1569 = vmul.f32 %v1191, %v1191
        %v1570 = vmul.f32 %v1382, %v1382
        %v1571 = vmul.f32 %v1384, %v1384
        %v1572 = vmul.f32 %v1000, %v1000
        %v1573 = vmul.f32 %v1002, %v1002
        %v1574 = vmul.f32 %v1193, %v1193
        %v1575 = vmul.f32 %v1195, %v1195
        %v1576 = vmul.f32 %v1386, %v1386
        %v1577 = vmul.f32 %v1388, %v1388
        %v1578 = vmul.f32 %v1006, %v1006
        %v1579 = vmul.f32 %v1008, %v1008
        %v1580 = vmul.f32 %v1199, %v1199
        %v1581 = vmul.f32 %v1201, %v1201
        %v1582 = vmul.f32 %v1392, %v1392
        %v1583 = vmul.f32 %v1394, %v1394
        %v1584 = vmul.f32 %v1010, %v1010
        %v1585 = vmul.f32 %v1012, %v1012
        %v1586 = vmul.f32 %v1203, %v1203
        %v1587 = vmul.f32 %v1205, %v1205
        %v1588 = vmul.f32 %v1396, %v1396
        %v1589 = vmul.f32 %v1398, %v1398
        %v1590 = vmul.f32 %v1016, %v1016
        %v1591 = vmul.f32 %v1018, %v1018
        %v1592 = vmul.f32 %v1209, %v1209
        %v1593 = vmul.f32 %v1211, %v1211
        %v1594 = vmul.f32 %v1402, %v1402
        %v1595 = vmul.f32 %v1404, %v1404
        %v1596 = vmul.f32 %v1020, %v1020
        %v1597 = vmul.f32 %v1022, %v1022
        %v1598 = vmul.f32 %v1213, %v1213
        %v1599 = vmul.f32 %v1215, %v1215
        %v1600 = vmul.f32 %v1406, %v1406
        %v1601 = vmul.f32 %v1408, %v1408
        %v1602 = vmul.f32 %v866, %v1410
        %v1603 = vmul.f32 %v868, %v1411
        %v1604 = vmul.f32 %v1059, %v1412
        %v1605 = vmul.f32 %v1061, %v1413
        %v1606 = vmul.f32 %v1252, %v1414
        %v1607 = vmul.f32 %v1254, %v1415
        %v1608 = vmul.f32 %v870, %v1416
        %v1609 = vmul.f32 %v872, %v1417
        %v1610 = vmul.f32 %v1063, %v1418
        %v1611 = vmul.f32 %v1065, %v1419
        %v1612 = vmul.f32 %v1256, %v1420
        %v1613 = vmul.f32 %v1258, %v1421
        %v1614 = vmul.f32 %v876, %v1422
        %v1615 = vmul.f32 %v878, %v1423
        %v1616 = vmul.f32 %v1069, %v1424
        %v1617 = vmul.f32 %v1071, %v1425
        %v1618 = vmul.f32 %v1262, %v1426
        %v1619 = vmul.f32 %v1264, %v1427
        %v1620 = vmul.f32 %v880, %v1428
        %v1621 = vmul.f32 %v882, %v1429
        %v1622 = vmul.f32 %v1073, %v1430
        %v1623 = vmul.f32 %v1075, %v1431
        %v1624 = vmul.f32 %v1266, %v1432
        %v1625 = vmul.f32 %v1268, %v1433
        %v1626 = vmul.f32 %v886, %v1434
        %v1627 = vmul.f32 %v888, %v1435
        %v1628 = vmul.f32 %v1079, %v1436
        %v1629 = vmul.f32 %v1081, %v1437
        %v1630 = vmul.f32 %v1272, %v1438
        %v1631 = vmul.f32 %v1274, %v1439
        %v1632 = vmul.f32 %v890, %v1440
        %v1633 = vmul.f32 %v892, %v1441
        %v1634 = vmul.f32 %v1083, %v1442
        %v1635 = vmul.f32 %v1085, %v1443
        %v1636 = vmul.f32 %v1276, %v1444
        %v1637 = vmul.f32 %v1278, %v1445
        %v1638 = vmul.f32 %v896, %v1446
        %v1639 = vmul.f32 %v898, %v1447
        %v1640 = vmul.f32 %v1089, %v1448
        %v1641 = vmul.f32 %v1091, %v1449
        %v1642 = vmul.f32 %v1282, %v1450
        %v1643 = vmul.f32 %v1284, %v1451
        %v1644 = vmul.f32 %v900, %v1452
        %v1645 = vmul.f32 %v902, %v1453
        %v1646 = vmul.f32 %v1093, %v1454
        %v1647 = vmul.f32 %v1095, %v1455
        %v1648 = vmul.f32 %v1286, %v1456
        %v1649 = vmul.f32 %v1288, %v1457
        %v1650 = vmul.f32 %v906, %v1458
        %v1651 = vmul.f32 %v908, %v1459
        %v1652 = vmul.f32 %v1099, %v1460
        %v1653 = vmul.f32 %v1101, %v1461
        %v1654 = vmul.f32 %v1292, %v1462
        %v1655 = vmul.f32 %v1294, %v1463
        %v1656 = vmul.f32 %v910, %v1464
        %v1657 = vmul.f32 %v912, %v1465
        %v1658 = vmul.f32 %v1103, %v1466
        %v1659 = vmul.f32 %v1105, %v1467
        %v1660 = vmul.f32 %v1296, %v1468
        %v1661 = vmul.f32 %v1298, %v1469
        %v1662 = vmul.f32 %v916, %v1470
        %v1663 = vmul.f32 %v918, %v1471
        %v1664 = vmul.f32 %v1109, %v1472
        %v1665 = vmul.f32 %v1111, %v1473
        %v1666 = vmul.f32 %v1302, %v1474
        %v1667 = vmul.f32 %v1304, %v1475
        %v1668 = vmul.f32 %v920, %v1476
        %v1669 = vmul.f32 %v922, %v1477
        %v1670 = vmul.f32 %v1113, %v1478
        %v1671 = vmul.f32 %v1115, %v1479
        %v1672 = vmul.f32 %v1306, %v1480
        %v1673 = vmul.f32 %v1308, %v1481
        %v1674 = vmul.f32 %v926, %v1482
        %v1675 = vmul.f32 %v928, %v1483
        %v1676 = vmul.f32 %v1119, %v1484
        %v1677 = vmul.f32 %v1121, %v1485
        %v1678 = vmul.f32 %v1312, %v1486
        %v1679 = vmul.f32 %v1314, %v1487
        %v1680 = vmul.f32 %v930, %v1488
        %v1681 = vmul.f32 %v932, %v1489
        %v1682 = vmul.f32 %v1123, %v1490
        %v1683 = vmul.f32 %v1125, %v1491
        %v1684 = vmul.f32 %v1316, %v1492
        %v1685 = vmul.f32 %v1318, %v1493
        %v1686 = vmul.f32 %v936, %v1494
        %v1687 = vmul.f32 %v938, %v1495
        %v1688 = vmul.f32 %v1129, %v1496
        %v1689 = vmul.f32 %v1131, %v1497
        %v1690 = vmul.f32 %v1322, %v1498
        %v1691 = vmul.f32 %v1324, %v1499
        %v1692 = vmul.f32 %v940, %v1500
        %v1693 = vmul.f32 %v942, %v1501
        %v1694 = vmul.f32 %v1133, %v1502
        %v1695 = vmul.f32 %v1135, %v1503
        %v1696 = vmul.f32 %v1326, %v1504
        %v1697 = vmul.f32 %v1328, %v1505
        %v1698 = vmul.f32 %v946, %v1506
        %v1699 = vmul.f32 %v948, %v1507
        %v1700 = vmul.f32 %v1139, %v1508
        %v1701 = vmul.f32 %v1141, %v1509
        %v1702 = vmul.f32 %v1332, %v1510
        %v1703 = vmul.f32 %v1334, %v1511
        %v1704 = vmul.f32 %v950, %v1512
        %v1705 = vmul.f32 %v952, %v1513
        %v1706 = vmul.f32 %v1143, %v1514
        %v1707 = vmul.f32 %v1145, %v1515
        %v1708 = vmul.f32 %v1336, %v1516
        %v1709 = vmul.f32 %v1338, %v1517
        %v1710 = vmul.f32 %v956, %v1518
        %v1711 = vmul.f32 %v958, %v1519
        %v1712 = vmul.f32 %v1149, %v1520
        %v1713 = vmul.f32 %v1151, %v1521
        %v1714 = vmul.f32 %v1342, %v1522
        %v1715 = vmul.f32 %v1344, %v1523
        %v1716 = vmul.f32 %v960, %v1524
        %v1717 = vmul.f32 %v962, %v1525
        %v1718 = vmul.f32 %v1153, %v1526
        %v1719 = vmul.f32 %v1155, %v1527
        %v1720 = vmul.f32 %v1346, %v1528
        %v1721 = vmul.f32 %v1348, %v1529
        %v1722 = vmul.f32 %v966, %v1530
        %v1723 = vmul.f32 %v968, %v1531
        %v1724 = vmul.f32 %v1159, %v1532
        %v1725 = vmul.f32 %v1161, %v1533
        %v1726 = vmul.f32 %v1352, %v1534
        %v1727 = vmul.f32 %v1354, %v1535
        %v1728 = vmul.f32 %v970, %v1536
        %v1729 = vmul.f32 %v972, %v1537
        %v1730 = vmul.f32 %v1163, %v1538
        %v1731 = vmul.f32 %v1165, %v1539
        %v1732 = vmul.f32 %v1356, %v1540
        %v1733 = vmul.f32 %v1358, %v1541
        %v1734 = vmul.f32 %v976, %v1542
        %v1735 = vmul.f32 %v978, %v1543
        %v1736 = vmul.f32 %v1169, %v1544
        %v1737 = vmul.f32 %v1171, %v1545
        %v1738 = vmul.f32 %v1362, %v1546
        %v1739 = vmul.f32 %v1364, %v1547
        %v1740 = vmul.f32 %v980, %v1548
        %v1741 = vmul.f32 %v982, %v1549
        %v1742 = vmul.f32 %v1173, %v1550
        %v1743 = vmul.f32 %v1175, %v1551
        %v1744 = vmul.f32 %v1366, %v1552
        %v1745 = vmul.f32 %v1368, %v1553
        %v1746 = vmul.f32 %v986, %v1554
        %v1747 = vmul.f32 %v988, %v1555
        %v1748 = vmul.f32 %v1179, %v1556
        %v1749 = vmul.f32 %v1181, %v1557
        %v1750 = vmul.f32 %v1372, %v1558
        %v1751 = vmul.f32 %v1374, %v1559
        %v1752 = vmul.f32 %v990, %v1560
        %v1753 = vmul.f32 %v992, %v1561
        %v1754 = vmul.f32 %v1183, %v1562
        %v1755 = vmul.f32 %v1185, %v1563
        %v1756 = vmul.f32 %v1376, %v1564
        %v1757 = vmul.f32 %v1378, %v1565
        %v1758 = vmul.f32 %v996, %v1566
        %v1759 = vmul.f32 %v998, %v1567
        %v1760 = vmul.f32 %v1189, %v1568
        %v1761 = vmul.f32 %v1191, %v1569
        %v1762 = vmul.f32 %v1382, %v1570
        %v1763 = vmul.f32 %v1384, %v1571
        %v1764 = vmul.f32 %v1000, %v1572
        %v1765 = vmul.f32 %v1002, %v1573
        %v1766 = vmul.f32 %v1193, %v1574
        %v1767 = vmul.f32 %v1195, %v1575
        %v1768 = vmul.f32 %v1386, %v1576
        %v1769 = vmul.f32 %v1388, %v1577
        %v1770 = vmul.f32 %v1006, %v1578
        %v1771 = vmul.f32 %v1008, %v1579
        %v1772 = vmul.f32 %v1199, %v1580
        %v1773 = vmul.f32 %v1201, %v1581
        %v1774 = vmul.f32 %v1392, %v1582
        %v1775 = vmul.f32 %v1394, %v1583
        %v1776 = vmul.f32 %v1010, %v1584
        %v1777 = vmul.f32 %v1012, %v1585
        %v1778 = vmul.f32 %v1203, %v1586
        %v1779 = vmul.f32 %v1205, %v1587
        %v1780 = vmul.f32 %v1396, %v1588
        %v1781 = vmul.f32 %v1398, %v1589
        %v1782 = vmul.f32 %v1016, %v1590
        %v1783 = vmul.f32 %v1018, %v1591
        %v1784 = vmul.f32 %v1209, %v1592
        %v1785 = vmul.f32 %v1211, %v1593
        %v1786 = vmul.f32 %v1402, %v1594
        %v1787 = vmul.f32 %v1404, %v1595
        %v1788 = vmul.f32 %v1020, %v1596
        %v1789 = vmul.f32 %v1022, %v1597
        %v1790 = vmul.f32 %v1213, %v1598
        %v1791 = vmul.f32 %v1215, %v1599
        %v1792 = vmul.f32 %v1406, %v1600
        %v1793 = vmul.f32 %v1408, %v1601
        %v1794 = vmul.f32 %v1602, 0.044715
        %v1795 = vmul.f32 %v1603, 0.044715
        %v1796 = vmul.f32 %v1604, 0.044715
        %v1797 = vmul.f32 %v1605, 0.044715
        %v1798 = vmul.f32 %v1606, 0.044715
        %v1799 = vmul.f32 %v1607, 0.044715
        %v1800 = vmul.f32 %v1608, 0.044715
        %v1801 = vmul.f32 %v1609, 0.044715
        %v1802 = vmul.f32 %v1610, 0.044715
        %v1803 = vmul.f32 %v1611, 0.044715
        %v1804 = vmul.f32 %v1612, 0.044715
        %v1805 = vmul.f32 %v1613, 0.044715
        %v1806 = vmul.f32 %v1614, 0.044715
        %v1807 = vmul.f32 %v1615, 0.044715
        %v1808 = vmul.f32 %v1616, 0.044715
        %v1809 = vmul.f32 %v1617, 0.044715
        %v1810 = vmul.f32 %v1618, 0.044715
        %v1811 = vmul.f32 %v1619, 0.044715
        %v1812 = vmul.f32 %v1620, 0.044715
        %v1813 = vmul.f32 %v1621, 0.044715
        %v1814 = vmul.f32 %v1622, 0.044715
        %v1815 = vmul.f32 %v1623, 0.044715
        %v1816 = vmul.f32 %v1624, 0.044715
        %v1817 = vmul.f32 %v1625, 0.044715
        %v1818 = vmul.f32 %v1626, 0.044715
        %v1819 = vmul.f32 %v1627, 0.044715
        %v1820 = vmul.f32 %v1628, 0.044715
        %v1821 = vmul.f32 %v1629, 0.044715
        %v1822 = vmul.f32 %v1630, 0.044715
        %v1823 = vmul.f32 %v1631, 0.044715
        %v1824 = vmul.f32 %v1632, 0.044715
        %v1825 = vmul.f32 %v1633, 0.044715
        %v1826 = vmul.f32 %v1634, 0.044715
        %v1827 = vmul.f32 %v1635, 0.044715
        %v1828 = vmul.f32 %v1636, 0.044715
        %v1829 = vmul.f32 %v1637, 0.044715
        %v1830 = vmul.f32 %v1638, 0.044715
        %v1831 = vmul.f32 %v1639, 0.044715
        %v1832 = vmul.f32 %v1640, 0.044715
        %v1833 = vmul.f32 %v1641, 0.044715
        %v1834 = vmul.f32 %v1642, 0.044715
        %v1835 = vmul.f32 %v1643, 0.044715
        %v1836 = vmul.f32 %v1644, 0.044715
        %v1837 = vmul.f32 %v1645, 0.044715
        %v1838 = vmul.f32 %v1646, 0.044715
        %v1839 = vmul.f32 %v1647, 0.044715
        %v1840 = vmul.f32 %v1648, 0.044715
        %v1841 = vmul.f32 %v1649, 0.044715
        %v1842 = vmul.f32 %v1650, 0.044715
        %v1843 = vmul.f32 %v1651, 0.044715
        %v1844 = vmul.f32 %v1652, 0.044715
        %v1845 = vmul.f32 %v1653, 0.044715
        %v1846 = vmul.f32 %v1654, 0.044715
        %v1847 = vmul.f32 %v1655, 0.044715
        %v1848 = vmul.f32 %v1656, 0.044715
        %v1849 = vmul.f32 %v1657, 0.044715
        %v1850 = vmul.f32 %v1658, 0.044715
        %v1851 = vmul.f32 %v1659, 0.044715
        %v1852 = vmul.f32 %v1660, 0.044715
        %v1853 = vmul.f32 %v1661, 0.044715
        %v1854 = vmul.f32 %v1662, 0.044715
        %v1855 = vmul.f32 %v1663, 0.044715
        %v1856 = vmul.f32 %v1664, 0.044715
        %v1857 = vmul.f32 %v1665, 0.044715
        %v1858 = vmul.f32 %v1666, 0.044715
        %v1859 = vmul.f32 %v1667, 0.044715
        %v1860 = vmul.f32 %v1668, 0.044715
        %v1861 = vmul.f32 %v1669, 0.044715
        %v1862 = vmul.f32 %v1670, 0.044715
        %v1863 = vmul.f32 %v1671, 0.044715
        %v1864 = vmul.f32 %v1672, 0.044715
        %v1865 = vmul.f32 %v1673, 0.044715
        %v1866 = vmul.f32 %v1674, 0.044715
        %v1867 = vmul.f32 %v1675, 0.044715
        %v1868 = vmul.f32 %v1676, 0.044715
        %v1869 = vmul.f32 %v1677, 0.044715
        %v1870 = vmul.f32 %v1678, 0.044715
        %v1871 = vmul.f32 %v1679, 0.044715
        %v1872 = vmul.f32 %v1680, 0.044715
        %v1873 = vmul.f32 %v1681, 0.044715
        %v1874 = vmul.f32 %v1682, 0.044715
        %v1875 = vmul.f32 %v1683, 0.044715
        %v1876 = vmul.f32 %v1684, 0.044715
        %v1877 = vmul.f32 %v1685, 0.044715
        %v1878 = vmul.f32 %v1686, 0.044715
        %v1879 = vmul.f32 %v1687, 0.044715
        %v1880 = vmul.f32 %v1688, 0.044715
        %v1881 = vmul.f32 %v1689, 0.044715
        %v1882 = vmul.f32 %v1690, 0.044715
        %v1883 = vmul.f32 %v1691, 0.044715
        %v1884 = vmul.f32 %v1692, 0.044715
        %v1885 = vmul.f32 %v1693, 0.044715
        %v1886 = vmul.f32 %v1694, 0.044715
        %v1887 = vmul.f32 %v1695, 0.044715
        %v1888 = vmul.f32 %v1696, 0.044715
        %v1889 = vmul.f32 %v1697, 0.044715
        %v1890 = vmul.f32 %v1698, 0.044715
        %v1891 = vmul.f32 %v1699, 0.044715
        %v1892 = vmul.f32 %v1700, 0.044715
        %v1893 = vmul.f32 %v1701, 0.044715
        %v1894 = vmul.f32 %v1702, 0.044715
        %v1895 = vmul.f32 %v1703, 0.044715
        %v1896 = vmul.f32 %v1704, 0.044715
        %v1897 = vmul.f32 %v1705, 0.044715
        %v1898 = vmul.f32 %v1706, 0.044715
        %v1899 = vmul.f32 %v1707, 0.044715
        %v1900 = vmul.f32 %v1708, 0.044715
        %v1901 = vmul.f32 %v1709, 0.044715
        %v1902 = vmul.f32 %v1710, 0.044715
        %v1903 = vmul.f32 %v1711, 0.044715
        %v1904 = vmul.f32 %v1712, 0.044715
        %v1905 = vmul.f32 %v1713, 0.044715
        %v1906 = vmul.f32 %v1714, 0.044715
        %v1907 = vmul.f32 %v1715, 0.044715
        %v1908 = vmul.f32 %v1716, 0.044715
        %v1909 = vmul.f32 %v1717, 0.044715
        %v1910 = vmul.f32 %v1718, 0.044715
        %v1911 = vmul.f32 %v1719, 0.044715
        %v1912 = vmul.f32 %v1720, 0.044715
        %v1913 = vmul.f32 %v1721, 0.044715
        %v1914 = vmul.f32 %v1722, 0.044715
        %v1915 = vmul.f32 %v1723, 0.044715
        %v1916 = vmul.f32 %v1724, 0.044715
        %v1917 = vmul.f32 %v1725, 0.044715
        %v1918 = vmul.f32 %v1726, 0.044715
        %v1919 = vmul.f32 %v1727, 0.044715
        %v1920 = vmul.f32 %v1728, 0.044715
        %v1921 = vmul.f32 %v1729, 0.044715
        %v1922 = vmul.f32 %v1730, 0.044715
        %v1923 = vmul.f32 %v1731, 0.044715
        %v1924 = vmul.f32 %v1732, 0.044715
        %v1925 = vmul.f32 %v1733, 0.044715
        %v1926 = vmul.f32 %v1734, 0.044715
        %v1927 = vmul.f32 %v1735, 0.044715
        %v1928 = vmul.f32 %v1736, 0.044715
        %v1929 = vmul.f32 %v1737, 0.044715
        %v1930 = vmul.f32 %v1738, 0.044715
        %v1931 = vmul.f32 %v1739, 0.044715
        %v1932 = vmul.f32 %v1740, 0.044715
        %v1933 = vmul.f32 %v1741, 0.044715
        %v1934 = vmul.f32 %v1742, 0.044715
        %v1935 = vmul.f32 %v1743, 0.044715
        %v1936 = vmul.f32 %v1744, 0.044715
        %v1937 = vmul.f32 %v1745, 0.044715
        %v1938 = vmul.f32 %v1746, 0.044715
        %v1939 = vmul.f32 %v1747, 0.044715
        %v1940 = vmul.f32 %v1748, 0.044715
        %v1941 = vmul.f32 %v1749, 0.044715
        %v1942 = vmul.f32 %v1750, 0.044715
        %v1943 = vmul.f32 %v1751, 0.044715
        %v1944 = vmul.f32 %v1752, 0.044715
        %v1945 = vmul.f32 %v1753, 0.044715
        %v1946 = vmul.f32 %v1754, 0.044715
        %v1947 = vmul.f32 %v1755, 0.044715
        %v1948 = vmul.f32 %v1756, 0.044715
        %v1949 = vmul.f32 %v1757, 0.044715
        %v1950 = vmul.f32 %v1758, 0.044715
        %v1951 = vmul.f32 %v1759, 0.044715
        %v1952 = vmul.f32 %v1760, 0.044715
        %v1953 = vmul.f32 %v1761, 0.044715
        %v1954 = vmul.f32 %v1762, 0.044715
        %v1955 = vmul.f32 %v1763, 0.044715
        %v1956 = vmul.f32 %v1764, 0.044715
        %v1957 = vmul.f32 %v1765, 0.044715
        %v1958 = vmul.f32 %v1766, 0.044715
        %v1959 = vmul.f32 %v1767, 0.044715
        %v1960 = vmul.f32 %v1768, 0.044715
        %v1961 = vmul.f32 %v1769, 0.044715
        %v1962 = vmul.f32 %v1770, 0.044715
        %v1963 = vmul.f32 %v1771, 0.044715
        %v1964 = vmul.f32 %v1772, 0.044715
        %v1965 = vmul.f32 %v1773, 0.044715
        %v1966 = vmul.f32 %v1774, 0.044715
        %v1967 = vmul.f32 %v1775, 0.044715
        %v1968 = vmul.f32 %v1776, 0.044715
        %v1969 = vmul.f32 %v1777, 0.044715
        %v1970 = vmul.f32 %v1778, 0.044715
        %v1971 = vmul.f32 %v1779, 0.044715
        %v1972 = vmul.f32 %v1780, 0.044715
        %v1973 = vmul.f32 %v1781, 0.044715
        %v1974 = vmul.f32 %v1782, 0.044715
        %v1975 = vmul.f32 %v1783, 0.044715
        %v1976 = vmul.f32 %v1784, 0.044715
        %v1977 = vmul.f32 %v1785, 0.044715
        %v1978 = vmul.f32 %v1786, 0.044715
        %v1979 = vmul.f32 %v1787, 0.044715
        %v1980 = vmul.f32 %v1788, 0.044715
        %v1981 = vmul.f32 %v1789, 0.044715
        %v1982 = vmul.f32 %v1790, 0.044715
        %v1983 = vmul.f32 %v1791, 0.044715
        %v1984 = vmul.f32 %v1792, 0.044715
        %v1985 = vmul.f32 %v1793, 0.044715
        %v1986 = vadd.f32 %v866, %v1794
        %v1987 = vadd.f32 %v868, %v1795
        %v1988 = vadd.f32 %v1059, %v1796
        %v1989 = vadd.f32 %v1061, %v1797
        %v1990 = vadd.f32 %v1252, %v1798
        %v1991 = vadd.f32 %v1254, %v1799
        %v1992 = vadd.f32 %v870, %v1800
        %v1993 = vadd.f32 %v872, %v1801
        %v1994 = vadd.f32 %v1063, %v1802
        %v1995 = vadd.f32 %v1065, %v1803
        %v1996 = vadd.f32 %v1256, %v1804
        %v1997 = vadd.f32 %v1258, %v1805
        %v1998 = vadd.f32 %v876, %v1806
        %v1999 = vadd.f32 %v878, %v1807
        %v2000 = vadd.f32 %v1069, %v1808
        %v2001 = vadd.f32 %v1071, %v1809
        %v2002 = vadd.f32 %v1262, %v1810
        %v2003 = vadd.f32 %v1264, %v1811
        %v2004 = vadd.f32 %v880, %v1812
        %v2005 = vadd.f32 %v882, %v1813
        %v2006 = vadd.f32 %v1073, %v1814
        %v2007 = vadd.f32 %v1075, %v1815
        %v2008 = vadd.f32 %v1266, %v1816
        %v2009 = vadd.f32 %v1268, %v1817
        %v2010 = vadd.f32 %v886, %v1818
        %v2011 = vadd.f32 %v888, %v1819
        %v2012 = vadd.f32 %v1079, %v1820
        %v2013 = vadd.f32 %v1081, %v1821
        %v2014 = vadd.f32 %v1272, %v1822
        %v2015 = vadd.f32 %v1274, %v1823
        %v2016 = vadd.f32 %v890, %v1824
        %v2017 = vadd.f32 %v892, %v1825
        %v2018 = vadd.f32 %v1083, %v1826
        %v2019 = vadd.f32 %v1085, %v1827
        %v2020 = vadd.f32 %v1276, %v1828
        %v2021 = vadd.f32 %v1278, %v1829
        %v2022 = vadd.f32 %v896, %v1830
        %v2023 = vadd.f32 %v898, %v1831
        %v2024 = vadd.f32 %v1089, %v1832
        %v2025 = vadd.f32 %v1091, %v1833
        %v2026 = vadd.f32 %v1282, %v1834
        %v2027 = vadd.f32 %v1284, %v1835
        %v2028 = vadd.f32 %v900, %v1836
        %v2029 = vadd.f32 %v902, %v1837
        %v2030 = vadd.f32 %v1093, %v1838
        %v2031 = vadd.f32 %v1095, %v1839
        %v2032 = vadd.f32 %v1286, %v1840
        %v2033 = vadd.f32 %v1288, %v1841
        %v2034 = vadd.f32 %v906, %v1842
        %v2035 = vadd.f32 %v908, %v1843
        %v2036 = vadd.f32 %v1099, %v1844
        %v2037 = vadd.f32 %v1101, %v1845
        %v2038 = vadd.f32 %v1292, %v1846
        %v2039 = vadd.f32 %v1294, %v1847
        %v2040 = vadd.f32 %v910, %v1848
        %v2041 = vadd.f32 %v912, %v1849
        %v2042 = vadd.f32 %v1103, %v1850
        %v2043 = vadd.f32 %v1105, %v1851
        %v2044 = vadd.f32 %v1296, %v1852
        %v2045 = vadd.f32 %v1298, %v1853
        %v2046 = vadd.f32 %v916, %v1854
        %v2047 = vadd.f32 %v918, %v1855
        %v2048 = vadd.f32 %v1109, %v1856
        %v2049 = vadd.f32 %v1111, %v1857
        %v2050 = vadd.f32 %v1302, %v1858
        %v2051 = vadd.f32 %v1304, %v1859
        %v2052 = vadd.f32 %v920, %v1860
        %v2053 = vadd.f32 %v922, %v1861
        %v2054 = vadd.f32 %v1113, %v1862
        %v2055 = vadd.f32 %v1115, %v1863
        %v2056 = vadd.f32 %v1306, %v1864
        %v2057 = vadd.f32 %v1308, %v1865
        %v2058 = vadd.f32 %v926, %v1866
        %v2059 = vadd.f32 %v928, %v1867
        %v2060 = vadd.f32 %v1119, %v1868
        %v2061 = vadd.f32 %v1121, %v1869
        %v2062 = vadd.f32 %v1312, %v1870
        %v2063 = vadd.f32 %v1314, %v1871
        %v2064 = vadd.f32 %v930, %v1872
        %v2065 = vadd.f32 %v932, %v1873
        %v2066 = vadd.f32 %v1123, %v1874
        %v2067 = vadd.f32 %v1125, %v1875
        %v2068 = vadd.f32 %v1316, %v1876
        %v2069 = vadd.f32 %v1318, %v1877
        %v2070 = vadd.f32 %v936, %v1878
        %v2071 = vadd.f32 %v938, %v1879
        %v2072 = vadd.f32 %v1129, %v1880
        %v2073 = vadd.f32 %v1131, %v1881
        %v2074 = vadd.f32 %v1322, %v1882
        %v2075 = vadd.f32 %v1324, %v1883
        %v2076 = vadd.f32 %v940, %v1884
        %v2077 = vadd.f32 %v942, %v1885
        %v2078 = vadd.f32 %v1133, %v1886
        %v2079 = vadd.f32 %v1135, %v1887
        %v2080 = vadd.f32 %v1326, %v1888
        %v2081 = vadd.f32 %v1328, %v1889
        %v2082 = vadd.f32 %v946, %v1890
        %v2083 = vadd.f32 %v948, %v1891
        %v2084 = vadd.f32 %v1139, %v1892
        %v2085 = vadd.f32 %v1141, %v1893
        %v2086 = vadd.f32 %v1332, %v1894
        %v2087 = vadd.f32 %v1334, %v1895
        %v2088 = vadd.f32 %v950, %v1896
        %v2089 = vadd.f32 %v952, %v1897
        %v2090 = vadd.f32 %v1143, %v1898
        %v2091 = vadd.f32 %v1145, %v1899
        %v2092 = vadd.f32 %v1336, %v1900
        %v2093 = vadd.f32 %v1338, %v1901
        %v2094 = vadd.f32 %v956, %v1902
        %v2095 = vadd.f32 %v958, %v1903
        %v2096 = vadd.f32 %v1149, %v1904
        %v2097 = vadd.f32 %v1151, %v1905
        %v2098 = vadd.f32 %v1342, %v1906
        %v2099 = vadd.f32 %v1344, %v1907
        %v2100 = vadd.f32 %v960, %v1908
        %v2101 = vadd.f32 %v962, %v1909
        %v2102 = vadd.f32 %v1153, %v1910
        %v2103 = vadd.f32 %v1155, %v1911
        %v2104 = vadd.f32 %v1346, %v1912
        %v2105 = vadd.f32 %v1348, %v1913
        %v2106 = vadd.f32 %v966, %v1914
        %v2107 = vadd.f32 %v968, %v1915
        %v2108 = vadd.f32 %v1159, %v1916
        %v2109 = vadd.f32 %v1161, %v1917
        %v2110 = vadd.f32 %v1352, %v1918
        %v2111 = vadd.f32 %v1354, %v1919
        %v2112 = vadd.f32 %v970, %v1920
        %v2113 = vadd.f32 %v972, %v1921
        %v2114 = vadd.f32 %v1163, %v1922
        %v2115 = vadd.f32 %v1165, %v1923
        %v2116 = vadd.f32 %v1356, %v1924
        %v2117 = vadd.f32 %v1358, %v1925
        %v2118 = vadd.f32 %v976, %v1926
        %v2119 = vadd.f32 %v978, %v1927
        %v2120 = vadd.f32 %v1169, %v1928
        %v2121 = vadd.f32 %v1171, %v1929
        %v2122 = vadd.f32 %v1362, %v1930
        %v2123 = vadd.f32 %v1364, %v1931
        %v2124 = vadd.f32 %v980, %v1932
        %v2125 = vadd.f32 %v982, %v1933
        %v2126 = vadd.f32 %v1173, %v1934
        %v2127 = vadd.f32 %v1175, %v1935
        %v2128 = vadd.f32 %v1366, %v1936
        %v2129 = vadd.f32 %v1368, %v1937
        %v2130 = vadd.f32 %v986, %v1938
        %v2131 = vadd.f32 %v988, %v1939
        %v2132 = vadd.f32 %v1179, %v1940
        %v2133 = vadd.f32 %v1181, %v1941
        %v2134 = vadd.f32 %v1372, %v1942
        %v2135 = vadd.f32 %v1374, %v1943
        %v2136 = vadd.f32 %v990, %v1944
        %v2137 = vadd.f32 %v992, %v1945
        %v2138 = vadd.f32 %v1183, %v1946
        %v2139 = vadd.f32 %v1185, %v1947
        %v2140 = vadd.f32 %v1376, %v1948
        %v2141 = vadd.f32 %v1378, %v1949
        %v2142 = vadd.f32 %v996, %v1950
        %v2143 = vadd.f32 %v998, %v1951
        %v2144 = vadd.f32 %v1189, %v1952
        %v2145 = vadd.f32 %v1191, %v1953
        %v2146 = vadd.f32 %v1382, %v1954
        %v2147 = vadd.f32 %v1384, %v1955
        %v2148 = vadd.f32 %v1000, %v1956
        %v2149 = vadd.f32 %v1002, %v1957
        %v2150 = vadd.f32 %v1193, %v1958
        %v2151 = vadd.f32 %v1195, %v1959
        %v2152 = vadd.f32 %v1386, %v1960
        %v2153 = vadd.f32 %v1388, %v1961
        %v2154 = vadd.f32 %v1006, %v1962
        %v2155 = vadd.f32 %v1008, %v1963
        %v2156 = vadd.f32 %v1199, %v1964
        %v2157 = vadd.f32 %v1201, %v1965
        %v2158 = vadd.f32 %v1392, %v1966
        %v2159 = vadd.f32 %v1394, %v1967
        %v2160 = vadd.f32 %v1010, %v1968
        %v2161 = vadd.f32 %v1012, %v1969
        %v2162 = vadd.f32 %v1203, %v1970
        %v2163 = vadd.f32 %v1205, %v1971
        %v2164 = vadd.f32 %v1396, %v1972
        %v2165 = vadd.f32 %v1398, %v1973
        %v2166 = vadd.f32 %v1016, %v1974
        %v2167 = vadd.f32 %v1018, %v1975
        %v2168 = vadd.f32 %v1209, %v1976
        %v2169 = vadd.f32 %v1211, %v1977
        %v2170 = vadd.f32 %v1402, %v1978
        %v2171 = vadd.f32 %v1404, %v1979
        %v2172 = vadd.f32 %v1020, %v1980
        %v2173 = vadd.f32 %v1022, %v1981
        %v2174 = vadd.f32 %v1213, %v1982
        %v2175 = vadd.f32 %v1215, %v1983
        %v2176 = vadd.f32 %v1406, %v1984
        %v2177 = vadd.f32 %v1408, %v1985
        %v2178 = vmul.f32 %v1986, 0.7978846
        %v2179 = vmul.f32 %v1987, 0.7978846
        %v2180 = vmul.f32 %v1988, 0.7978846
        %v2181 = vmul.f32 %v1989, 0.7978846
        %v2182 = vmul.f32 %v1990, 0.7978846
        %v2183 = vmul.f32 %v1991, 0.7978846
        %v2184 = vmul.f32 %v1992, 0.7978846
        %v2185 = vmul.f32 %v1993, 0.7978846
        %v2186 = vmul.f32 %v1994, 0.7978846
        %v2187 = vmul.f32 %v1995, 0.7978846
        %v2188 = vmul.f32 %v1996, 0.7978846
        %v2189 = vmul.f32 %v1997, 0.7978846
        %v2190 = vmul.f32 %v1998, 0.7978846
        %v2191 = vmul.f32 %v1999, 0.7978846
        %v2192 = vmul.f32 %v2000, 0.7978846
        %v2193 = vmul.f32 %v2001, 0.7978846
        %v2194 = vmul.f32 %v2002, 0.7978846
        %v2195 = vmul.f32 %v2003, 0.7978846
        %v2196 = vmul.f32 %v2004, 0.7978846
        %v2197 = vmul.f32 %v2005, 0.7978846
        %v2198 = vmul.f32 %v2006, 0.7978846
        %v2199 = vmul.f32 %v2007, 0.7978846
        %v2200 = vmul.f32 %v2008, 0.7978846
        %v2201 = vmul.f32 %v2009, 0.7978846
        %v2202 = vmul.f32 %v2010, 0.7978846
        %v2203 = vmul.f32 %v2011, 0.7978846
        %v2204 = vmul.f32 %v2012, 0.7978846
        %v2205 = vmul.f32 %v2013, 0.7978846
        %v2206 = vmul.f32 %v2014, 0.7978846
        %v2207 = vmul.f32 %v2015, 0.7978846
        %v2208 = vmul.f32 %v2016, 0.7978846
        %v2209 = vmul.f32 %v2017, 0.7978846
        %v2210 = vmul.f32 %v2018, 0.7978846
        %v2211 = vmul.f32 %v2019, 0.7978846
        %v2212 = vmul.f32 %v2020, 0.7978846
        %v2213 = vmul.f32 %v2021, 0.7978846
        %v2214 = vmul.f32 %v2022, 0.7978846
        %v2215 = vmul.f32 %v2023, 0.7978846
        %v2216 = vmul.f32 %v2024, 0.7978846
        %v2217 = vmul.f32 %v2025, 0.7978846
        %v2218 = vmul.f32 %v2026, 0.7978846
        %v2219 = vmul.f32 %v2027, 0.7978846
        %v2220 = vmul.f32 %v2028, 0.7978846
        %v2221 = vmul.f32 %v2029, 0.7978846
        %v2222 = vmul.f32 %v2030, 0.7978846
        %v2223 = vmul.f32 %v2031, 0.7978846
        %v2224 = vmul.f32 %v2032, 0.7978846
        %v2225 = vmul.f32 %v2033, 0.7978846
        %v2226 = vmul.f32 %v2034, 0.7978846
        %v2227 = vmul.f32 %v2035, 0.7978846
        %v2228 = vmul.f32 %v2036, 0.7978846
        %v2229 = vmul.f32 %v2037, 0.7978846
        %v2230 = vmul.f32 %v2038, 0.7978846
        %v2231 = vmul.f32 %v2039, 0.7978846
        %v2232 = vmul.f32 %v2040, 0.7978846
        %v2233 = vmul.f32 %v2041, 0.7978846
        %v2234 = vmul.f32 %v2042, 0.7978846
        %v2235 = vmul.f32 %v2043, 0.7978846
        %v2236 = vmul.f32 %v2044, 0.7978846
        %v2237 = vmul.f32 %v2045, 0.7978846
        %v2238 = vmul.f32 %v2046, 0.7978846
        %v2239 = vmul.f32 %v2047, 0.7978846
        %v2240 = vmul.f32 %v2048, 0.7978846
        %v2241 = vmul.f32 %v2049, 0.7978846
        %v2242 = vmul.f32 %v2050, 0.7978846
        %v2243 = vmul.f32 %v2051, 0.7978846
        %v2244 = vmul.f32 %v2052, 0.7978846
        %v2245 = vmul.f32 %v2053, 0.7978846
        %v2246 = vmul.f32 %v2054, 0.7978846
        %v2247 = vmul.f32 %v2055, 0.7978846
        %v2248 = vmul.f32 %v2056, 0.7978846
        %v2249 = vmul.f32 %v2057, 0.7978846
        %v2250 = vmul.f32 %v2058, 0.7978846
        %v2251 = vmul.f32 %v2059, 0.7978846
        %v2252 = vmul.f32 %v2060, 0.7978846
        %v2253 = vmul.f32 %v2061, 0.7978846
        %v2254 = vmul.f32 %v2062, 0.7978846
        %v2255 = vmul.f32 %v2063, 0.7978846
        %v2256 = vmul.f32 %v2064, 0.7978846
        %v2257 = vmul.f32 %v2065, 0.7978846
        %v2258 = vmul.f32 %v2066, 0.7978846
        %v2259 = vmul.f32 %v2067, 0.7978846
        %v2260 = vmul.f32 %v2068, 0.7978846
        %v2261 = vmul.f32 %v2069, 0.7978846
        %v2262 = vmul.f32 %v2070, 0.7978846
        %v2263 = vmul.f32 %v2071, 0.7978846
        %v2264 = vmul.f32 %v2072, 0.7978846
        %v2265 = vmul.f32 %v2073, 0.7978846
        %v2266 = vmul.f32 %v2074, 0.7978846
        %v2267 = vmul.f32 %v2075, 0.7978846
        %v2268 = vmul.f32 %v2076, 0.7978846
        %v2269 = vmul.f32 %v2077, 0.7978846
        %v2270 = vmul.f32 %v2078, 0.7978846
        %v2271 = vmul.f32 %v2079, 0.7978846
        %v2272 = vmul.f32 %v2080, 0.7978846
        %v2273 = vmul.f32 %v2081, 0.7978846
        %v2274 = vmul.f32 %v2082, 0.7978846
        %v2275 = vmul.f32 %v2083, 0.7978846
        %v2276 = vmul.f32 %v2084, 0.7978846
        %v2277 = vmul.f32 %v2085, 0.7978846
        %v2278 = vmul.f32 %v2086, 0.7978846
        %v2279 = vmul.f32 %v2087, 0.7978846
        %v2280 = vmul.f32 %v2088, 0.7978846
        %v2281 = vmul.f32 %v2089, 0.7978846
        %v2282 = vmul.f32 %v2090, 0.7978846
        %v2283 = vmul.f32 %v2091, 0.7978846
        %v2284 = vmul.f32 %v2092, 0.7978846
        %v2285 = vmul.f32 %v2093, 0.7978846
        %v2286 = vmul.f32 %v2094, 0.7978846
        %v2287 = vmul.f32 %v2095, 0.7978846
        %v2288 = vmul.f32 %v2096, 0.7978846
        %v2289 = vmul.f32 %v2097, 0.7978846
        %v2290 = vmul.f32 %v2098, 0.7978846
        %v2291 = vmul.f32 %v2099, 0.7978846
        %v2292 = vmul.f32 %v2100, 0.7978846
        %v2293 = vmul.f32 %v2101, 0.7978846
        %v2294 = vmul.f32 %v2102, 0.7978846
        %v2295 = vmul.f32 %v2103, 0.7978846
        %v2296 = vmul.f32 %v2104, 0.7978846
        %v2297 = vmul.f32 %v2105, 0.7978846
        %v2298 = vmul.f32 %v2106, 0.7978846
        %v2299 = vmul.f32 %v2107, 0.7978846
        %v2300 = vmul.f32 %v2108, 0.7978846
        %v2301 = vmul.f32 %v2109, 0.7978846
        %v2302 = vmul.f32 %v2110, 0.7978846
        %v2303 = vmul.f32 %v2111, 0.7978846
        %v2304 = vmul.f32 %v2112, 0.7978846
        %v2305 = vmul.f32 %v2113, 0.7978846
        %v2306 = vmul.f32 %v2114, 0.7978846
        %v2307 = vmul.f32 %v2115, 0.7978846
        %v2308 = vmul.f32 %v2116, 0.7978846
        %v2309 = vmul.f32 %v2117, 0.7978846
        %v2310 = vmul.f32 %v2118, 0.7978846
        %v2311 = vmul.f32 %v2119, 0.7978846
        %v2312 = vmul.f32 %v2120, 0.7978846
        %v2313 = vmul.f32 %v2121, 0.7978846
        %v2314 = vmul.f32 %v2122, 0.7978846
        %v2315 = vmul.f32 %v2123, 0.7978846
        %v2316 = vmul.f32 %v2124, 0.7978846
        %v2317 = vmul.f32 %v2125, 0.7978846
        %v2318 = vmul.f32 %v2126, 0.7978846
        %v2319 = vmul.f32 %v2127, 0.7978846
        %v2320 = vmul.f32 %v2128, 0.7978846
        %v2321 = vmul.f32 %v2129, 0.7978846
        %v2322 = vmul.f32 %v2130, 0.7978846
        %v2323 = vmul.f32 %v2131, 0.7978846
        %v2324 = vmul.f32 %v2132, 0.7978846
        %v2325 = vmul.f32 %v2133, 0.7978846
        %v2326 = vmul.f32 %v2134, 0.7978846
        %v2327 = vmul.f32 %v2135, 0.7978846
        %v2328 = vmul.f32 %v2136, 0.7978846
        %v2329 = vmul.f32 %v2137, 0.7978846
        %v2330 = vmul.f32 %v2138, 0.7978846
        %v2331 = vmul.f32 %v2139, 0.7978846
        %v2332 = vmul.f32 %v2140, 0.7978846
        %v2333 = vmul.f32 %v2141, 0.7978846
        %v2334 = vmul.f32 %v2142, 0.7978846
        %v2335 = vmul.f32 %v2143, 0.7978846
        %v2336 = vmul.f32 %v2144, 0.7978846
        %v2337 = vmul.f32 %v2145, 0.7978846
        %v2338 = vmul.f32 %v2146, 0.7978846
        %v2339 = vmul.f32 %v2147, 0.7978846
        %v2340 = vmul.f32 %v2148, 0.7978846
        %v2341 = vmul.f32 %v2149, 0.7978846
        %v2342 = vmul.f32 %v2150, 0.7978846
        %v2343 = vmul.f32 %v2151, 0.7978846
        %v2344 = vmul.f32 %v2152, 0.7978846
        %v2345 = vmul.f32 %v2153, 0.7978846
        %v2346 = vmul.f32 %v2154, 0.7978846
        %v2347 = vmul.f32 %v2155, 0.7978846
        %v2348 = vmul.f32 %v2156, 0.7978846
        %v2349 = vmul.f32 %v2157, 0.7978846
        %v2350 = vmul.f32 %v2158, 0.7978846
        %v2351 = vmul.f32 %v2159, 0.7978846
        %v2352 = vmul.f32 %v2160, 0.7978846
        %v2353 = vmul.f32 %v2161, 0.7978846
        %v2354 = vmul.f32 %v2162, 0.7978846
        %v2355 = vmul.f32 %v2163, 0.7978846
        %v2356 = vmul.f32 %v2164, 0.7978846
        %v2357 = vmul.f32 %v2165, 0.7978846
        %v2358 = vmul.f32 %v2166, 0.7978846
        %v2359 = vmul.f32 %v2167, 0.7978846
        %v2360 = vmul.f32 %v2168, 0.7978846
        %v2361 = vmul.f32 %v2169, 0.7978846
        %v2362 = vmul.f32 %v2170, 0.7978846
        %v2363 = vmul.f32 %v2171, 0.7978846
        %v2364 = vmul.f32 %v2172, 0.7978846
        %v2365 = vmul.f32 %v2173, 0.7978846
        %v2366 = vmul.f32 %v2174, 0.7978846
        %v2367 = vmul.f32 %v2175, 0.7978846
        %v2368 = vmul.f32 %v2176, 0.7978846
        %v2369 = vmul.f32 %v2177, 0.7978846
        %v2370 = vtanh.pop %v2178
        %v2371 = vtanh.pop %v2179
        %v2372 = vtanh.pop %v2180
        %v2373 = vtanh.pop %v2181
        %v2374 = vtanh.pop %v2182
        %v2375 = vtanh.pop %v2183
        %v2376 = vtanh.pop %v2184
        %v2377 = vtanh.pop %v2185
        %v2378 = vtanh.pop %v2186
        %v2379 = vtanh.pop %v2187
        %v2380 = vtanh.pop %v2188
        %v2381 = vtanh.pop %v2189
        %v2382 = vtanh.pop %v2190
        %v2383 = vtanh.pop %v2191
        %v2384 = vtanh.pop %v2192
        %v2385 = vtanh.pop %v2193
        %v2386 = vtanh.pop %v2194
        %v2387 = vtanh.pop %v2195
        %v2388 = vtanh.pop %v2196
        %v2389 = vtanh.pop %v2197
        %v2390 = vtanh.pop %v2198
        %v2391 = vtanh.pop %v2199
        %v2392 = vtanh.pop %v2200
        %v2393 = vtanh.pop %v2201
        %v2394 = vtanh.pop %v2202
        %v2395 = vtanh.pop %v2203
        %v2396 = vtanh.pop %v2204
        %v2397 = vtanh.pop %v2205
        %v2398 = vtanh.pop %v2206
        %v2399 = vtanh.pop %v2207
        %v2400 = vtanh.pop %v2208
        %v2401 = vtanh.pop %v2209
        %v2402 = vtanh.pop %v2210
        %v2403 = vtanh.pop %v2211
        %v2404 = vtanh.pop %v2212
        %v2405 = vtanh.pop %v2213
        %v2406 = vtanh.pop %v2214
        %v2407 = vtanh.pop %v2215
        %v2408 = vtanh.pop %v2216
        %v2409 = vtanh.pop %v2217
        %v2410 = vtanh.pop %v2218
        %v2411 = vtanh.pop %v2219
        %v2412 = vtanh.pop %v2220
        %v2413 = vtanh.pop %v2221
        %v2414 = vtanh.pop %v2222
        %v2415 = vtanh.pop %v2223
        %v2416 = vtanh.pop %v2224
        %v2417 = vtanh.pop %v2225
        %v2418 = vtanh.pop %v2226
        %v2419 = vtanh.pop %v2227
        %v2420 = vtanh.pop %v2228
        %v2421 = vtanh.pop %v2229
        %v2422 = vtanh.pop %v2230
        %v2423 = vtanh.pop %v2231
        %v2424 = vtanh.pop %v2232
        %v2425 = vtanh.pop %v2233
        %v2426 = vtanh.pop %v2234
        %v2427 = vtanh.pop %v2235
        %v2428 = vtanh.pop %v2236
        %v2429 = vtanh.pop %v2237
        %v2430 = vtanh.pop %v2238
        %v2431 = vtanh.pop %v2239
        %v2432 = vtanh.pop %v2240
        %v2433 = vtanh.pop %v2241
        %v2434 = vtanh.pop %v2242
        %v2435 = vtanh.pop %v2243
        %v2436 = vtanh.pop %v2244
        %v2437 = vtanh.pop %v2245
        %v2438 = vtanh.pop %v2246
        %v2439 = vtanh.pop %v2247
        %v2440 = vtanh.pop %v2248
        %v2441 = vtanh.pop %v2249
        %v2442 = vtanh.pop %v2250
        %v2443 = vtanh.pop %v2251
        %v2444 = vtanh.pop %v2252
        %v2445 = vtanh.pop %v2253
        %v2446 = vtanh.pop %v2254
        %v2447 = vtanh.pop %v2255
        %v2448 = vtanh.pop %v2256
        %v2449 = vtanh.pop %v2257
        %v2450 = vtanh.pop %v2258
        %v2451 = vtanh.pop %v2259
        %v2452 = vtanh.pop %v2260
        %v2453 = vtanh.pop %v2261
        %v2454 = vtanh.pop %v2262
        %v2455 = vtanh.pop %v2263
        %v2456 = vtanh.pop %v2264
        %v2457 = vtanh.pop %v2265
        %v2458 = vtanh.pop %v2266
        %v2459 = vtanh.pop %v2267
        %v2460 = vtanh.pop %v2268
        %v2461 = vtanh.pop %v2269
        %v2462 = vtanh.pop %v2270
        %v2463 = vtanh.pop %v2271
        %v2464 = vtanh.pop %v2272
        %v2465 = vtanh.pop %v2273
        %v2466 = vtanh.pop %v2274
        %v2467 = vtanh.pop %v2275
        %v2468 = vtanh.pop %v2276
        %v2469 = vtanh.pop %v2277
        %v2470 = vtanh.pop %v2278
        %v2471 = vtanh.pop %v2279
        %v2472 = vtanh.pop %v2280
        %v2473 = vtanh.pop %v2281
        %v2474 = vtanh.pop %v2282
        %v2475 = vtanh.pop %v2283
        %v2476 = vtanh.pop %v2284
        %v2477 = vtanh.pop %v2285
        %v2478 = vtanh.pop %v2286
        %v2479 = vtanh.pop %v2287
        %v2480 = vtanh.pop %v2288
        %v2481 = vtanh.pop %v2289
        %v2482 = vtanh.pop %v2290
        %v2483 = vtanh.pop %v2291
        %v2484 = vtanh.pop %v2292
        %v2485 = vtanh.pop %v2293
        %v2486 = vtanh.pop %v2294
        %v2487 = vtanh.pop %v2295
        %v2488 = vtanh.pop %v2296
        %v2489 = vtanh.pop %v2297
        %v2490 = vtanh.pop %v2298
        %v2491 = vtanh.pop %v2299
        %v2492 = vtanh.pop %v2300
        %v2493 = vtanh.pop %v2301
        %v2494 = vtanh.pop %v2302
        %v2495 = vtanh.pop %v2303
        %v2496 = vtanh.pop %v2304
        %v2497 = vtanh.pop %v2305
        %v2498 = vtanh.pop %v2306
        %v2499 = vtanh.pop %v2307
        %v2500 = vtanh.pop %v2308
        %v2501 = vtanh.pop %v2309
        %v2502 = vtanh.pop %v2310
        %v2503 = vtanh.pop %v2311
        %v2504 = vtanh.pop %v2312
        %v2505 = vtanh.pop %v2313
        %v2506 = vtanh.pop %v2314
        %v2507 = vtanh.pop %v2315
        %v2508 = vtanh.pop %v2316
        %v2509 = vtanh.pop %v2317
        %v2510 = vtanh.pop %v2318
        %v2511 = vtanh.pop %v2319
        %v2512 = vtanh.pop %v2320
        %v2513 = vtanh.pop %v2321
        %v2514 = vtanh.pop %v2322
        %v2515 = vtanh.pop %v2323
        %v2516 = vtanh.pop %v2324
        %v2517 = vtanh.pop %v2325
        %v2518 = vtanh.pop %v2326
        %v2519 = vtanh.pop %v2327
        %v2520 = vtanh.pop %v2328
        %v2521 = vtanh.pop %v2329
        %v2522 = vtanh.pop %v2330
        %v2523 = vtanh.pop %v2331
        %v2524 = vtanh.pop %v2332
        %v2525 = vtanh.pop %v2333
        %v2526 = vtanh.pop %v2334
        %v2527 = vtanh.pop %v2335
        %v2528 = vtanh.pop %v2336
        %v2529 = vtanh.pop %v2337
        %v2530 = vtanh.pop %v2338
        %v2531 = vtanh.pop %v2339
        %v2532 = vtanh.pop %v2340
        %v2533 = vtanh.pop %v2341
        %v2534 = vtanh.pop %v2342
        %v2535 = vtanh.pop %v2343
        %v2536 = vtanh.pop %v2344
        %v2537 = vtanh.pop %v2345
        %v2538 = vtanh.pop %v2346
        %v2539 = vtanh.pop %v2347
        %v2540 = vtanh.pop %v2348
        %v2541 = vtanh.pop %v2349
        %v2542 = vtanh.pop %v2350
        %v2543 = vtanh.pop %v2351
        %v2544 = vtanh.pop %v2352
        %v2545 = vtanh.pop %v2353
        %v2546 = vtanh.pop %v2354
        %v2547 = vtanh.pop %v2355
        %v2548 = vtanh.pop %v2356
        %v2549 = vtanh.pop %v2357
        %v2550 = vtanh.pop %v2358
        %v2551 = vtanh.pop %v2359
        %v2552 = vtanh.pop %v2360
        %v2553 = vtanh.pop %v2361
        %v2554 = vtanh.pop %v2362
        %v2555 = vtanh.pop %v2363
        %v2556 = vtanh.pop %v2364
        %v2557 = vtanh.pop %v2365
        %v2558 = vtanh.pop %v2366
        %v2559 = vtanh.pop %v2367
        %v2560 = vtanh.pop %v2368
        %v2561 = vtanh.pop %v2369
        %v2562 = vadd.f32 %v2370, 1.0
        %v2563 = vadd.f32 %v2371, 1.0
        %v2564 = vadd.f32 %v2372, 1.0
        %v2565 = vadd.f32 %v2373, 1.0
        %v2566 = vadd.f32 %v2374, 1.0
        %v2567 = vadd.f32 %v2375, 1.0
        %v2568 = vadd.f32 %v2376, 1.0
        %v2569 = vadd.f32 %v2377, 1.0
        %v2570 = vadd.f32 %v2378, 1.0
        %v2571 = vadd.f32 %v2379, 1.0
        %v2572 = vadd.f32 %v2380, 1.0
        %v2573 = vadd.f32 %v2381, 1.0
        %v2574 = vadd.f32 %v2382, 1.0
        %v2575 = vadd.f32 %v2383, 1.0
        %v2576 = vadd.f32 %v2384, 1.0
        %v2577 = vadd.f32 %v2385, 1.0
        %v2578 = vadd.f32 %v2386, 1.0
        %v2579 = vadd.f32 %v2387, 1.0
        %v2580 = vadd.f32 %v2388, 1.0
        %v2581 = vadd.f32 %v2389, 1.0
        %v2582 = vadd.f32 %v2390, 1.0
        %v2583 = vadd.f32 %v2391, 1.0
        %v2584 = vadd.f32 %v2392, 1.0
        %v2585 = vadd.f32 %v2393, 1.0
        %v2586 = vadd.f32 %v2394, 1.0
        %v2587 = vadd.f32 %v2395, 1.0
        %v2588 = vadd.f32 %v2396, 1.0
        %v2589 = vadd.f32 %v2397, 1.0
        %v2590 = vadd.f32 %v2398, 1.0
        %v2591 = vadd.f32 %v2399, 1.0
        %v2592 = vadd.f32 %v2400, 1.0
        %v2593 = vadd.f32 %v2401, 1.0
        %v2594 = vadd.f32 %v2402, 1.0
        %v2595 = vadd.f32 %v2403, 1.0
        %v2596 = vadd.f32 %v2404, 1.0
        %v2597 = vadd.f32 %v2405, 1.0
        %v2598 = vadd.f32 %v2406, 1.0
        %v2599 = vadd.f32 %v2407, 1.0
        %v2600 = vadd.f32 %v2408, 1.0
        %v2601 = vadd.f32 %v2409, 1.0
        %v2602 = vadd.f32 %v2410, 1.0
        %v2603 = vadd.f32 %v2411, 1.0
        %v2604 = vadd.f32 %v2412, 1.0
        %v2605 = vadd.f32 %v2413, 1.0
        %v2606 = vadd.f32 %v2414, 1.0
        %v2607 = vadd.f32 %v2415, 1.0
        %v2608 = vadd.f32 %v2416, 1.0
        %v2609 = vadd.f32 %v2417, 1.0
        %v2610 = vadd.f32 %v2418, 1.0
        %v2611 = vadd.f32 %v2419, 1.0
        %v2612 = vadd.f32 %v2420, 1.0
        %v2613 = vadd.f32 %v2421, 1.0
        %v2614 = vadd.f32 %v2422, 1.0
        %v2615 = vadd.f32 %v2423, 1.0
        %v2616 = vadd.f32 %v2424, 1.0
        %v2617 = vadd.f32 %v2425, 1.0
        %v2618 = vadd.f32 %v2426, 1.0
        %v2619 = vadd.f32 %v2427, 1.0
        %v2620 = vadd.f32 %v2428, 1.0
        %v2621 = vadd.f32 %v2429, 1.0
        %v2622 = vadd.f32 %v2430, 1.0
        %v2623 = vadd.f32 %v2431, 1.0
        %v2624 = vadd.f32 %v2432, 1.0
        %v2625 = vadd.f32 %v2433, 1.0
        %v2626 = vadd.f32 %v2434, 1.0
        %v2627 = vadd.f32 %v2435, 1.0
        %v2628 = vadd.f32 %v2436, 1.0
        %v2629 = vadd.f32 %v2437, 1.0
        %v2630 = vadd.f32 %v2438, 1.0
        %v2631 = vadd.f32 %v2439, 1.0
        %v2632 = vadd.f32 %v2440, 1.0
        %v2633 = vadd.f32 %v2441, 1.0
        %v2634 = vadd.f32 %v2442, 1.0
        %v2635 = vadd.f32 %v2443, 1.0
        %v2636 = vadd.f32 %v2444, 1.0
        %v2637 = vadd.f32 %v2445, 1.0
        %v2638 = vadd.f32 %v2446, 1.0
        %v2639 = vadd.f32 %v2447, 1.0
        %v2640 = vadd.f32 %v2448, 1.0
        %v2641 = vadd.f32 %v2449, 1.0
        %v2642 = vadd.f32 %v2450, 1.0
        %v2643 = vadd.f32 %v2451, 1.0
        %v2644 = vadd.f32 %v2452, 1.0
        %v2645 = vadd.f32 %v2453, 1.0
        %v2646 = vadd.f32 %v2454, 1.0
        %v2647 = vadd.f32 %v2455, 1.0
        %v2648 = vadd.f32 %v2456, 1.0
        %v2649 = vadd.f32 %v2457, 1.0
        %v2650 = vadd.f32 %v2458, 1.0
        %v2651 = vadd.f32 %v2459, 1.0
        %v2652 = vadd.f32 %v2460, 1.0
        %v2653 = vadd.f32 %v2461, 1.0
        %v2654 = vadd.f32 %v2462, 1.0
        %v2655 = vadd.f32 %v2463, 1.0
        %v2656 = vadd.f32 %v2464, 1.0
        %v2657 = vadd.f32 %v2465, 1.0
        %v2658 = vadd.f32 %v2466, 1.0
        %v2659 = vadd.f32 %v2467, 1.0
        %v2660 = vadd.f32 %v2468, 1.0
        %v2661 = vadd.f32 %v2469, 1.0
        %v2662 = vadd.f32 %v2470, 1.0
        %v2663 = vadd.f32 %v2471, 1.0
        %v2664 = vadd.f32 %v2472, 1.0
        %v2665 = vadd.f32 %v2473, 1.0
        %v2666 = vadd.f32 %v2474, 1.0
        %v2667 = vadd.f32 %v2475, 1.0
        %v2668 = vadd.f32 %v2476, 1.0
        %v2669 = vadd.f32 %v2477, 1.0
        %v2670 = vadd.f32 %v2478, 1.0
        %v2671 = vadd.f32 %v2479, 1.0
        %v2672 = vadd.f32 %v2480, 1.0
        %v2673 = vadd.f32 %v2481, 1.0
        %v2674 = vadd.f32 %v2482, 1.0
        %v2675 = vadd.f32 %v2483, 1.0
        %v2676 = vadd.f32 %v2484, 1.0
        %v2677 = vadd.f32 %v2485, 1.0
        %v2678 = vadd.f32 %v2486, 1.0
        %v2679 = vadd.f32 %v2487, 1.0
        %v2680 = vadd.f32 %v2488, 1.0
        %v2681 = vadd.f32 %v2489, 1.0
        %v2682 = vadd.f32 %v2490, 1.0
        %v2683 = vadd.f32 %v2491, 1.0
        %v2684 = vadd.f32 %v2492, 1.0
        %v2685 = vadd.f32 %v2493, 1.0
        %v2686 = vadd.f32 %v2494, 1.0
        %v2687 = vadd.f32 %v2495, 1.0
        %v2688 = vadd.f32 %v2496, 1.0
        %v2689 = vadd.f32 %v2497, 1.0
        %v2690 = vadd.f32 %v2498, 1.0
        %v2691 = vadd.f32 %v2499, 1.0
        %v2692 = vadd.f32 %v2500, 1.0
        %v2693 = vadd.f32 %v2501, 1.0
        %v2694 = vadd.f32 %v2502, 1.0
        %v2695 = vadd.f32 %v2503, 1.0
        %v2696 = vadd.f32 %v2504, 1.0
        %v2697 = vadd.f32 %v2505, 1.0
        %v2698 = vadd.f32 %v2506, 1.0
        %v2699 = vadd.f32 %v2507, 1.0
        %v2700 = vadd.f32 %v2508, 1.0
        %v2701 = vadd.f32 %v2509, 1.0
        %v2702 = vadd.f32 %v2510, 1.0
        %v2703 = vadd.f32 %v2511, 1.0
        %v2704 = vadd.f32 %v2512, 1.0
        %v2705 = vadd.f32 %v2513, 1.0
        %v2706 = vadd.f32 %v2514, 1.0
        %v2707 = vadd.f32 %v2515, 1.0
        %v2708 = vadd.f32 %v2516, 1.0
        %v2709 = vadd.f32 %v2517, 1.0
        %v2710 = vadd.f32 %v2518, 1.0
        %v2711 = vadd.f32 %v2519, 1.0
        %v2712 = vadd.f32 %v2520, 1.0
        %v2713 = vadd.f32 %v2521, 1.0
        %v2714 = vadd.f32 %v2522, 1.0
        %v2715 = vadd.f32 %v2523, 1.0
        %v2716 = vadd.f32 %v2524, 1.0
        %v2717 = vadd.f32 %v2525, 1.0
        %v2718 = vadd.f32 %v2526, 1.0
        %v2719 = vadd.f32 %v2527, 1.0
        %v2720 = vadd.f32 %v2528, 1.0
        %v2721 = vadd.f32 %v2529, 1.0
        %v2722 = vadd.f32 %v2530, 1.0
        %v2723 = vadd.f32 %v2531, 1.0
        %v2724 = vadd.f32 %v2532, 1.0
        %v2725 = vadd.f32 %v2533, 1.0
        %v2726 = vadd.f32 %v2534, 1.0
        %v2727 = vadd.f32 %v2535, 1.0
        %v2728 = vadd.f32 %v2536, 1.0
        %v2729 = vadd.f32 %v2537, 1.0
        %v2730 = vadd.f32 %v2538, 1.0
        %v2731 = vadd.f32 %v2539, 1.0
        %v2732 = vadd.f32 %v2540, 1.0
        %v2733 = vadd.f32 %v2541, 1.0
        %v2734 = vadd.f32 %v2542, 1.0
        %v2735 = vadd.f32 %v2543, 1.0
        %v2736 = vadd.f32 %v2544, 1.0
        %v2737 = vadd.f32 %v2545, 1.0
        %v2738 = vadd.f32 %v2546, 1.0
        %v2739 = vadd.f32 %v2547, 1.0
        %v2740 = vadd.f32 %v2548, 1.0
        %v2741 = vadd.f32 %v2549, 1.0
        %v2742 = vadd.f32 %v2550, 1.0
        %v2743 = vadd.f32 %v2551, 1.0
        %v2744 = vadd.f32 %v2552, 1.0
        %v2745 = vadd.f32 %v2553, 1.0
        %v2746 = vadd.f32 %v2554, 1.0
        %v2747 = vadd.f32 %v2555, 1.0
        %v2748 = vadd.f32 %v2556, 1.0
        %v2749 = vadd.f32 %v2557, 1.0
        %v2750 = vadd.f32 %v2558, 1.0
        %v2751 = vadd.f32 %v2559, 1.0
        %v2752 = vadd.f32 %v2560, 1.0
        %v2753 = vadd.f32 %v2561, 1.0
        %v2754 = vmul.f32 %v2562, 0.5
        %v2755 = vmul.f32 %v2563, 0.5
        %v2756 = vmul.f32 %v2564, 0.5
        %v2757 = vmul.f32 %v2565, 0.5
        %v2758 = vmul.f32 %v2566, 0.5
        %v2759 = vmul.f32 %v2567, 0.5
        %v2760 = vmul.f32 %v2568, 0.5
        %v2761 = vmul.f32 %v2569, 0.5
        %v2762 = vmul.f32 %v2570, 0.5
        %v2763 = vmul.f32 %v2571, 0.5
        %v2764 = vmul.f32 %v2572, 0.5
        %v2765 = vmul.f32 %v2573, 0.5
        %v2766 = vmul.f32 %v2574, 0.5
        %v2767 = vmul.f32 %v2575, 0.5
        %v2768 = vmul.f32 %v2576, 0.5
        %v2769 = vmul.f32 %v2577, 0.5
        %v2770 = vmul.f32 %v2578, 0.5
        %v2771 = vmul.f32 %v2579, 0.5
        %v2772 = vmul.f32 %v2580, 0.5
        %v2773 = vmul.f32 %v2581, 0.5
        %v2774 = vmul.f32 %v2582, 0.5
        %v2775 = vmul.f32 %v2583, 0.5
        %v2776 = vmul.f32 %v2584, 0.5
        %v2777 = vmul.f32 %v2585, 0.5
        %v2778 = vmul.f32 %v2586, 0.5
        %v2779 = vmul.f32 %v2587, 0.5
        %v2780 = vmul.f32 %v2588, 0.5
        %v2781 = vmul.f32 %v2589, 0.5
        %v2782 = vmul.f32 %v2590, 0.5
        %v2783 = vmul.f32 %v2591, 0.5
        %v2784 = vmul.f32 %v2592, 0.5
        %v2785 = vmul.f32 %v2593, 0.5
        %v2786 = vmul.f32 %v2594, 0.5
        %v2787 = vmul.f32 %v2595, 0.5
        %v2788 = vmul.f32 %v2596, 0.5
        %v2789 = vmul.f32 %v2597, 0.5
        %v2790 = vmul.f32 %v2598, 0.5
        %v2791 = vmul.f32 %v2599, 0.5
        %v2792 = vmul.f32 %v2600, 0.5
        %v2793 = vmul.f32 %v2601, 0.5
        %v2794 = vmul.f32 %v2602, 0.5
        %v2795 = vmul.f32 %v2603, 0.5
        %v2796 = vmul.f32 %v2604, 0.5
        %v2797 = vmul.f32 %v2605, 0.5
        %v2798 = vmul.f32 %v2606, 0.5
        %v2799 = vmul.f32 %v2607, 0.5
        %v2800 = vmul.f32 %v2608, 0.5
        %v2801 = vmul.f32 %v2609, 0.5
        %v2802 = vmul.f32 %v2610, 0.5
        %v2803 = vmul.f32 %v2611, 0.5
        %v2804 = vmul.f32 %v2612, 0.5
        %v2805 = vmul.f32 %v2613, 0.5
        %v2806 = vmul.f32 %v2614, 0.5
        %v2807 = vmul.f32 %v2615, 0.5
        %v2808 = vmul.f32 %v2616, 0.5
        %v2809 = vmul.f32 %v2617, 0.5
        %v2810 = vmul.f32 %v2618, 0.5
        %v2811 = vmul.f32 %v2619, 0.5
        %v2812 = vmul.f32 %v2620, 0.5
        %v2813 = vmul.f32 %v2621, 0.5
        %v2814 = vmul.f32 %v2622, 0.5
        %v2815 = vmul.f32 %v2623, 0.5
        %v2816 = vmul.f32 %v2624, 0.5
        %v2817 = vmul.f32 %v2625, 0.5
        %v2818 = vmul.f32 %v2626, 0.5
        %v2819 = vmul.f32 %v2627, 0.5
        %v2820 = vmul.f32 %v2628, 0.5
        %v2821 = vmul.f32 %v2629, 0.5
        %v2822 = vmul.f32 %v2630, 0.5
        %v2823 = vmul.f32 %v2631, 0.5
        %v2824 = vmul.f32 %v2632, 0.5
        %v2825 = vmul.f32 %v2633, 0.5
        %v2826 = vmul.f32 %v2634, 0.5
        %v2827 = vmul.f32 %v2635, 0.5
        %v2828 = vmul.f32 %v2636, 0.5
        %v2829 = vmul.f32 %v2637, 0.5
        %v2830 = vmul.f32 %v2638, 0.5
        %v2831 = vmul.f32 %v2639, 0.5
        %v2832 = vmul.f32 %v2640, 0.5
        %v2833 = vmul.f32 %v2641, 0.5
        %v2834 = vmul.f32 %v2642, 0.5
        %v2835 = vmul.f32 %v2643, 0.5
        %v2836 = vmul.f32 %v2644, 0.5
        %v2837 = vmul.f32 %v2645, 0.5
        %v2838 = vmul.f32 %v2646, 0.5
        %v2839 = vmul.f32 %v2647, 0.5
        %v2840 = vmul.f32 %v2648, 0.5
        %v2841 = vmul.f32 %v2649, 0.5
        %v2842 = vmul.f32 %v2650, 0.5
        %v2843 = vmul.f32 %v2651, 0.5
        %v2844 = vmul.f32 %v2652, 0.5
        %v2845 = vmul.f32 %v2653, 0.5
        %v2846 = vmul.f32 %v2654, 0.5
        %v2847 = vmul.f32 %v2655, 0.5
        %v2848 = vmul.f32 %v2656, 0.5
        %v2849 = vmul.f32 %v2657, 0.5
        %v2850 = vmul.f32 %v2658, 0.5
        %v2851 = vmul.f32 %v2659, 0.5
        %v2852 = vmul.f32 %v2660, 0.5
        %v2853 = vmul.f32 %v2661, 0.5
        %v2854 = vmul.f32 %v2662, 0.5
        %v2855 = vmul.f32 %v2663, 0.5
        %v2856 = vmul.f32 %v2664, 0.5
        %v2857 = vmul.f32 %v2665, 0.5
        %v2858 = vmul.f32 %v2666, 0.5
        %v2859 = vmul.f32 %v2667, 0.5
        %v2860 = vmul.f32 %v2668, 0.5
        %v2861 = vmul.f32 %v2669, 0.5
        %v2862 = vmul.f32 %v2670, 0.5
        %v2863 = vmul.f32 %v2671, 0.5
        %v2864 = vmul.f32 %v2672, 0.5
        %v2865 = vmul.f32 %v2673, 0.5
        %v2866 = vmul.f32 %v2674, 0.5
        %v2867 = vmul.f32 %v2675, 0.5
        %v2868 = vmul.f32 %v2676, 0.5
        %v2869 = vmul.f32 %v2677, 0.5
        %v2870 = vmul.f32 %v2678, 0.5
        %v2871 = vmul.f32 %v2679, 0.5
        %v2872 = vmul.f32 %v2680, 0.5
        %v2873 = vmul.f32 %v2681, 0.5
        %v2874 = vmul.f32 %v2682, 0.5
        %v2875 = vmul.f32 %v2683, 0.5
        %v2876 = vmul.f32 %v2684, 0.5
        %v2877 = vmul.f32 %v2685, 0.5
        %v2878 = vmul.f32 %v2686, 0.5
        %v2879 = vmul.f32 %v2687, 0.5
        %v2880 = vmul.f32 %v2688, 0.5
        %v2881 = vmul.f32 %v2689, 0.5
        %v2882 = vmul.f32 %v2690, 0.5
        %v2883 = vmul.f32 %v2691, 0.5
        %v2884 = vmul.f32 %v2692, 0.5
        %v2885 = vmul.f32 %v2693, 0.5
        %v2886 = vmul.f32 %v2694, 0.5
        %v2887 = vmul.f32 %v2695, 0.5
        %v2888 = vmul.f32 %v2696, 0.5
        %v2889 = vmul.f32 %v2697, 0.5
        %v2890 = vmul.f32 %v2698, 0.5
        %v2891 = vmul.f32 %v2699, 0.5
        %v2892 = vmul.f32 %v2700, 0.5
        %v2893 = vmul.f32 %v2701, 0.5
        %v2894 = vmul.f32 %v2702, 0.5
        %v2895 = vmul.f32 %v2703, 0.5
        %v2896 = vmul.f32 %v2704, 0.5
        %v2897 = vmul.f32 %v2705, 0.5
        %v2898 = vmul.f32 %v2706, 0.5
        %v2899 = vmul.f32 %v2707, 0.5
        %v2900 = vmul.f32 %v2708, 0.5
        %v2901 = vmul.f32 %v2709, 0.5
        %v2902 = vmul.f32 %v2710, 0.5
        %v2903 = vmul.f32 %v2711, 0.5
        %v2904 = vmul.f32 %v2712, 0.5
        %v2905 = vmul.f32 %v2713, 0.5
        %v2906 = vmul.f32 %v2714, 0.5
        %v2907 = vmul.f32 %v2715, 0.5
        %v2908 = vmul.f32 %v2716, 0.5
        %v2909 = vmul.f32 %v2717, 0.5
        %v2910 = vmul.f32 %v2718, 0.5
        %v2911 = vmul.f32 %v2719, 0.5
        %v2912 = vmul.f32 %v2720, 0.5
        %v2913 = vmul.f32 %v2721, 0.5
        %v2914 = vmul.f32 %v2722, 0.5
        %v2915 = vmul.f32 %v2723, 0.5
        %v2916 = vmul.f32 %v2724, 0.5
        %v2917 = vmul.f32 %v2725, 0.5
        %v2918 = vmul.f32 %v2726, 0.5
        %v2919 = vmul.f32 %v2727, 0.5
        %v2920 = vmul.f32 %v2728, 0.5
        %v2921 = vmul.f32 %v2729, 0.5
        %v2922 = vmul.f32 %v2730, 0.5
        %v2923 = vmul.f32 %v2731, 0.5
        %v2924 = vmul.f32 %v2732, 0.5
        %v2925 = vmul.f32 %v2733, 0.5
        %v2926 = vmul.f32 %v2734, 0.5
        %v2927 = vmul.f32 %v2735, 0.5
        %v2928 = vmul.f32 %v2736, 0.5
        %v2929 = vmul.f32 %v2737, 0.5
        %v2930 = vmul.f32 %v2738, 0.5
        %v2931 = vmul.f32 %v2739, 0.5
        %v2932 = vmul.f32 %v2740, 0.5
        %v2933 = vmul.f32 %v2741, 0.5
        %v2934 = vmul.f32 %v2742, 0.5
        %v2935 = vmul.f32 %v2743, 0.5
        %v2936 = vmul.f32 %v2744, 0.5
        %v2937 = vmul.f32 %v2745, 0.5
        %v2938 = vmul.f32 %v2746, 0.5
        %v2939 = vmul.f32 %v2747, 0.5
        %v2940 = vmul.f32 %v2748, 0.5
        %v2941 = vmul.f32 %v2749, 0.5
        %v2942 = vmul.f32 %v2750, 0.5
        %v2943 = vmul.f32 %v2751, 0.5
        %v2944 = vmul.f32 %v2752, 0.5
        %v2945 = vmul.f32 %v2753, 0.5
        %v2946 = vmul.f32 %v866, %v2754
        %v2947 = vmul.f32 %v868, %v2755
        %v2948 = vmul.f32 %v1059, %v2756
        %v2949 = vmul.f32 %v1061, %v2757
        %v2950 = vmul.f32 %v1252, %v2758
        %v2951 = vmul.f32 %v1254, %v2759
        %v2952 = vmul.f32 %v870, %v2760
        %v2953 = vmul.f32 %v872, %v2761
        %v2954 = vmul.f32 %v1063, %v2762
        %v2955 = vmul.f32 %v1065, %v2763
        %v2956 = vmul.f32 %v1256, %v2764
        %v2957 = vmul.f32 %v1258, %v2765
        %v2958 = vmul.f32 %v876, %v2766
        %v2959 = vmul.f32 %v878, %v2767
        %v2960 = vmul.f32 %v1069, %v2768
        %v2961 = vmul.f32 %v1071, %v2769
        %v2962 = vmul.f32 %v1262, %v2770
        %v2963 = vmul.f32 %v1264, %v2771
        %v2964 = vmul.f32 %v880, %v2772
        %v2965 = vmul.f32 %v882, %v2773
        %v2966 = vmul.f32 %v1073, %v2774
        %v2967 = vmul.f32 %v1075, %v2775
        %v2968 = vmul.f32 %v1266, %v2776
        %v2969 = vmul.f32 %v1268, %v2777
        %v2970 = vmul.f32 %v886, %v2778
        %v2971 = vmul.f32 %v888, %v2779
        %v2972 = vmul.f32 %v1079, %v2780
        %v2973 = vmul.f32 %v1081, %v2781
        %v2974 = vmul.f32 %v1272, %v2782
        %v2975 = vmul.f32 %v1274, %v2783
        %v2976 = vmul.f32 %v890, %v2784
        %v2977 = vmul.f32 %v892, %v2785
        %v2978 = vmul.f32 %v1083, %v2786
        %v2979 = vmul.f32 %v1085, %v2787
        %v2980 = vmul.f32 %v1276, %v2788
        %v2981 = vmul.f32 %v1278, %v2789
        %v2982 = vmul.f32 %v896, %v2790
        %v2983 = vmul.f32 %v898, %v2791
        %v2984 = vmul.f32 %v1089, %v2792
        %v2985 = vmul.f32 %v1091, %v2793
        %v2986 = vmul.f32 %v1282, %v2794
        %v2987 = vmul.f32 %v1284, %v2795
        %v2988 = vmul.f32 %v900, %v2796
        %v2989 = vmul.f32 %v902, %v2797
        %v2990 = vmul.f32 %v1093, %v2798
        %v2991 = vmul.f32 %v1095, %v2799
        %v2992 = vmul.f32 %v1286, %v2800
        %v2993 = vmul.f32 %v1288, %v2801
        %v2994 = vmul.f32 %v906, %v2802
        %v2995 = vmul.f32 %v908, %v2803
        %v2996 = vmul.f32 %v1099, %v2804
        %v2997 = vmul.f32 %v1101, %v2805
        %v2998 = vmul.f32 %v1292, %v2806
        %v2999 = vmul.f32 %v1294, %v2807
        %v3000 = vmul.f32 %v910, %v2808
        %v3001 = vmul.f32 %v912, %v2809
        %v3002 = vmul.f32 %v1103, %v2810
        %v3003 = vmul.f32 %v1105, %v2811
        %v3004 = vmul.f32 %v1296, %v2812
        %v3005 = vmul.f32 %v1298, %v2813
        %v3006 = vmul.f32 %v916, %v2814
        %v3007 = vmul.f32 %v918, %v2815
        %v3008 = vmul.f32 %v1109, %v2816
        %v3009 = vmul.f32 %v1111, %v2817
        %v3010 = vmul.f32 %v1302, %v2818
        %v3011 = vmul.f32 %v1304, %v2819
        %v3012 = vmul.f32 %v920, %v2820
        %v3013 = vmul.f32 %v922, %v2821
        %v3014 = vmul.f32 %v1113, %v2822
        %v3015 = vmul.f32 %v1115, %v2823
        %v3016 = vmul.f32 %v1306, %v2824
        %v3017 = vmul.f32 %v1308, %v2825
        %v3018 = vmul.f32 %v926, %v2826
        %v3019 = vmul.f32 %v928, %v2827
        %v3020 = vmul.f32 %v1119, %v2828
        %v3021 = vmul.f32 %v1121, %v2829
        %v3022 = vmul.f32 %v1312, %v2830
        %v3023 = vmul.f32 %v1314, %v2831
        %v3024 = vmul.f32 %v930, %v2832
        %v3025 = vmul.f32 %v932, %v2833
        %v3026 = vmul.f32 %v1123, %v2834
        %v3027 = vmul.f32 %v1125, %v2835
        %v3028 = vmul.f32 %v1316, %v2836
        %v3029 = vmul.f32 %v1318, %v2837
        %v3030 = vmul.f32 %v936, %v2838
        %v3031 = vmul.f32 %v938, %v2839
        %v3032 = vmul.f32 %v1129, %v2840
        %v3033 = vmul.f32 %v1131, %v2841
        %v3034 = vmul.f32 %v1322, %v2842
        %v3035 = vmul.f32 %v1324, %v2843
        %v3036 = vmul.f32 %v940, %v2844
        %v3037 = vmul.f32 %v942, %v2845
        %v3038 = vmul.f32 %v1133, %v2846
        %v3039 = vmul.f32 %v1135, %v2847
        %v3040 = vmul.f32 %v1326, %v2848
        %v3041 = vmul.f32 %v1328, %v2849
        %v3042 = vmul.f32 %v946, %v2850
        %v3043 = vmul.f32 %v948, %v2851
        %v3044 = vmul.f32 %v1139, %v2852
        %v3045 = vmul.f32 %v1141, %v2853
        %v3046 = vmul.f32 %v1332, %v2854
        %v3047 = vmul.f32 %v1334, %v2855
        %v3048 = vmul.f32 %v950, %v2856
        %v3049 = vmul.f32 %v952, %v2857
        %v3050 = vmul.f32 %v1143, %v2858
        %v3051 = vmul.f32 %v1145, %v2859
        %v3052 = vmul.f32 %v1336, %v2860
        %v3053 = vmul.f32 %v1338, %v2861
        %v3054 = vmul.f32 %v956, %v2862
        %v3055 = vmul.f32 %v958, %v2863
        %v3056 = vmul.f32 %v1149, %v2864
        %v3057 = vmul.f32 %v1151, %v2865
        %v3058 = vmul.f32 %v1342, %v2866
        %v3059 = vmul.f32 %v1344, %v2867
        %v3060 = vmul.f32 %v960, %v2868
        %v3061 = vmul.f32 %v962, %v2869
        %v3062 = vmul.f32 %v1153, %v2870
        %v3063 = vmul.f32 %v1155, %v2871
        %v3064 = vmul.f32 %v1346, %v2872
        %v3065 = vmul.f32 %v1348, %v2873
        %v3066 = vmul.f32 %v966, %v2874
        %v3067 = vmul.f32 %v968, %v2875
        %v3068 = vmul.f32 %v1159, %v2876
        %v3069 = vmul.f32 %v1161, %v2877
        %v3070 = vmul.f32 %v1352, %v2878
        %v3071 = vmul.f32 %v1354, %v2879
        %v3072 = vmul.f32 %v970, %v2880
        %v3073 = vmul.f32 %v972, %v2881
        %v3074 = vmul.f32 %v1163, %v2882
        %v3075 = vmul.f32 %v1165, %v2883
        %v3076 = vmul.f32 %v1356, %v2884
        %v3077 = vmul.f32 %v1358, %v2885
        %v3078 = vmul.f32 %v976, %v2886
        %v3079 = vmul.f32 %v978, %v2887
        %v3080 = vmul.f32 %v1169, %v2888
        %v3081 = vmul.f32 %v1171, %v2889
        %v3082 = vmul.f32 %v1362, %v2890
        %v3083 = vmul.f32 %v1364, %v2891
        %v3084 = vmul.f32 %v980, %v2892
        %v3085 = vmul.f32 %v982, %v2893
        %v3086 = vmul.f32 %v1173, %v2894
        %v3087 = vmul.f32 %v1175, %v2895
        %v3088 = vmul.f32 %v1366, %v2896
        %v3089 = vmul.f32 %v1368, %v2897
        %v3090 = vmul.f32 %v986, %v2898
        %v3091 = vmul.f32 %v988, %v2899
        %v3092 = vmul.f32 %v1179, %v2900
        %v3093 = vmul.f32 %v1181, %v2901
        %v3094 = vmul.f32 %v1372, %v2902
        %v3095 = vmul.f32 %v1374, %v2903
        %v3096 = vmul.f32 %v990, %v2904
        %v3097 = vmul.f32 %v992, %v2905
        %v3098 = vmul.f32 %v1183, %v2906
        %v3099 = vmul.f32 %v1185, %v2907
        %v3100 = vmul.f32 %v1376, %v2908
        %v3101 = vmul.f32 %v1378, %v2909
        %v3102 = vmul.f32 %v996, %v2910
        %v3103 = vmul.f32 %v998, %v2911
        %v3104 = vmul.f32 %v1189, %v2912
        %v3105 = vmul.f32 %v1191, %v2913
        %v3106 = vmul.f32 %v1382, %v2914
        %v3107 = vmul.f32 %v1384, %v2915
        %v3108 = vmul.f32 %v1000, %v2916
        %v3109 = vmul.f32 %v1002, %v2917
        %v3110 = vmul.f32 %v1193, %v2918
        %v3111 = vmul.f32 %v1195, %v2919
        %v3112 = vmul.f32 %v1386, %v2920
        %v3113 = vmul.f32 %v1388, %v2921
        %v3114 = vmul.f32 %v1006, %v2922
        %v3115 = vmul.f32 %v1008, %v2923
        %v3116 = vmul.f32 %v1199, %v2924
        %v3117 = vmul.f32 %v1201, %v2925
        %v3118 = vmul.f32 %v1392, %v2926
        %v3119 = vmul.f32 %v1394, %v2927
        %v3120 = vmul.f32 %v1010, %v2928
        %v3121 = vmul.f32 %v1012, %v2929
        %v3122 = vmul.f32 %v1203, %v2930
        %v3123 = vmul.f32 %v1205, %v2931
        %v3124 = vmul.f32 %v1396, %v2932
        %v3125 = vmul.f32 %v1398, %v2933
        %v3126 = vmul.f32 %v1016, %v2934
        %v3127 = vmul.f32 %v1018, %v2935
        %v3128 = vmul.f32 %v1209, %v2936
        %v3129 = vmul.f32 %v1211, %v2937
        %v3130 = vmul.f32 %v1402, %v2938
        %v3131 = vmul.f32 %v1404, %v2939
        %v3132 = vmul.f32 %v1020, %v2940
        %v3133 = vmul.f32 %v1022, %v2941
        %v3134 = vmul.f32 %v1213, %v2942
        %v3135 = vmul.f32 %v1215, %v2943
        %v3136 = vmul.f32 %v1406, %v2944
        %v3137 = vmul.f32 %v1408, %v2945
        %v3138 = vpack.c.bf16 %v2952, %v2946
        %v3139 = vpack.c.bf16 %v2953, %v2947
        %v3140 = vpack.c.bf16 %v2954, %v2948
        %v3141 = vpack.c.bf16 %v2955, %v2949
        %v3142 = vpack.c.bf16 %v2956, %v2950
        %v3143 = vpack.c.bf16 %v2957, %v2951
        %v3144 = vpack.c.bf16 %v2964, %v2958
        %v3145 = vpack.c.bf16 %v2965, %v2959
        %v3146 = vpack.c.bf16 %v2966, %v2960
        %v3147 = vpack.c.bf16 %v2967, %v2961
        %v3148 = vpack.c.bf16 %v2968, %v2962
        %v3149 = vpack.c.bf16 %v2969, %v2963
        %v3150 = vpack.c.bf16 %v2976, %v2970
        %v3151 = vpack.c.bf16 %v2977, %v2971
        %v3152 = vpack.c.bf16 %v2978, %v2972
        %v3153 = vpack.c.bf16 %v2979, %v2973
        %v3154 = vpack.c.bf16 %v2980, %v2974
        %v3155 = vpack.c.bf16 %v2981, %v2975
        %v3156 = vpack.c.bf16 %v2988, %v2982
        %v3157 = vpack.c.bf16 %v2989, %v2983
        %v3158 = vpack.c.bf16 %v2990, %v2984
        %v3159 = vpack.c.bf16 %v2991, %v2985
        %v3160 = vpack.c.bf16 %v2992, %v2986
        %v3161 = vpack.c.bf16 %v2993, %v2987
        %v3162 = vpack.c.bf16 %v3000, %v2994
        %v3163 = vpack.c.bf16 %v3001, %v2995
        %v3164 = vpack.c.bf16 %v3002, %v2996
        %v3165 = vpack.c.bf16 %v3003, %v2997
        %v3166 = vpack.c.bf16 %v3004, %v2998
        %v3167 = vpack.c.bf16 %v3005, %v2999
        %v3168 = vpack.c.bf16 %v3012, %v3006
        %v3169 = vpack.c.bf16 %v3013, %v3007
        %v3170 = vpack.c.bf16 %v3014, %v3008
        %v3171 = vpack.c.bf16 %v3015, %v3009
        %v3172 = vpack.c.bf16 %v3016, %v3010
        %v3173 = vpack.c.bf16 %v3017, %v3011
        %v3174 = vpack.c.bf16 %v3024, %v3018
        %v3175 = vpack.c.bf16 %v3025, %v3019
        %v3176 = vpack.c.bf16 %v3026, %v3020
        %v3177 = vpack.c.bf16 %v3027, %v3021
        %v3178 = vpack.c.bf16 %v3028, %v3022
        %v3179 = vpack.c.bf16 %v3029, %v3023
        %v3180 = vpack.c.bf16 %v3036, %v3030
        %v3181 = vpack.c.bf16 %v3037, %v3031
        %v3182 = vpack.c.bf16 %v3038, %v3032
        %v3183 = vpack.c.bf16 %v3039, %v3033
        %v3184 = vpack.c.bf16 %v3040, %v3034
        %v3185 = vpack.c.bf16 %v3041, %v3035
        %v3186 = vpack.c.bf16 %v3048, %v3042
        %v3187 = vpack.c.bf16 %v3049, %v3043
        %v3188 = vpack.c.bf16 %v3050, %v3044
        %v3189 = vpack.c.bf16 %v3051, %v3045
        %v3190 = vpack.c.bf16 %v3052, %v3046
        %v3191 = vpack.c.bf16 %v3053, %v3047
        %v3192 = vpack.c.bf16 %v3060, %v3054
        %v3193 = vpack.c.bf16 %v3061, %v3055
        %v3194 = vpack.c.bf16 %v3062, %v3056
        %v3195 = vpack.c.bf16 %v3063, %v3057
        %v3196 = vpack.c.bf16 %v3064, %v3058
        %v3197 = vpack.c.bf16 %v3065, %v3059
        %v3198 = vpack.c.bf16 %v3072, %v3066
        %v3199 = vpack.c.bf16 %v3073, %v3067
        %v3200 = vpack.c.bf16 %v3074, %v3068
        %v3201 = vpack.c.bf16 %v3075, %v3069
        %v3202 = vpack.c.bf16 %v3076, %v3070
        %v3203 = vpack.c.bf16 %v3077, %v3071
        %v3204 = vpack.c.bf16 %v3084, %v3078
        %v3205 = vpack.c.bf16 %v3085, %v3079
        %v3206 = vpack.c.bf16 %v3086, %v3080
        %v3207 = vpack.c.bf16 %v3087, %v3081
        %v3208 = vpack.c.bf16 %v3088, %v3082
        %v3209 = vpack.c.bf16 %v3089, %v3083
        %v3210 = vpack.c.bf16 %v3096, %v3090
        %v3211 = vpack.c.bf16 %v3097, %v3091
        %v3212 = vpack.c.bf16 %v3098, %v3092
        %v3213 = vpack.c.bf16 %v3099, %v3093
        %v3214 = vpack.c.bf16 %v3100, %v3094
        %v3215 = vpack.c.bf16 %v3101, %v3095
        %v3216 = vpack.c.bf16 %v3108, %v3102
        %v3217 = vpack.c.bf16 %v3109, %v3103
        %v3218 = vpack.c.bf16 %v3110, %v3104
        %v3219 = vpack.c.bf16 %v3111, %v3105
        %v3220 = vpack.c.bf16 %v3112, %v3106
        %v3221 = vpack.c.bf16 %v3113, %v3107
        %v3222 = vpack.c.bf16 %v3120, %v3114
        %v3223 = vpack.c.bf16 %v3121, %v3115
        %v3224 = vpack.c.bf16 %v3122, %v3116
        %v3225 = vpack.c.bf16 %v3123, %v3117
        %v3226 = vpack.c.bf16 %v3124, %v3118
        %v3227 = vpack.c.bf16 %v3125, %v3119
        %v3228 = vpack.c.bf16 %v3132, %v3126
        %v3229 = vpack.c.bf16 %v3133, %v3127
        %v3230 = vpack.c.bf16 %v3134, %v3128
        %v3231 = vpack.c.bf16 %v3135, %v3129
        %v3232 = vpack.c.bf16 %v3136, %v3130
        %v3233 = vpack.c.bf16 %v3137, %v3131
        %v3234 = vld [vmem:[#allocation7] sm:$0xf]
        %v3235 = vld [vmem:[#allocation7 + $0x4] sm:$0xf]
        %v3236 = vld [vmem:[#allocation7 + $0x8] sm:$0xf]
        %v3237 = vld [vmem:[#allocation7 + $0xc] sm:$0xf]
        %v3238 = vld [vmem:[#allocation7 + $0x10] sm:$0xf]
        %v3239 = vld [vmem:[#allocation7 + $0x14] sm:$0xf]
        %v3240 = vld [vmem:[#allocation7 + $0x18] sm:$0xf]
        %v3241 = vld [vmem:[#allocation7 + $0x1c] sm:$0xf]
        %v3242 = vld [vmem:[#allocation7 + $0x20] sm:$0xf]
        %v3243 = vld [vmem:[#allocation7 + $0x24] sm:$0xf]
        %v3244 = vld [vmem:[#allocation7 + $0x28] sm:$0xf]
        %v3245 = vld [vmem:[#allocation7 + $0x2c] sm:$0xf]
        %v3246 = vld [vmem:[#allocation7 + $0x30] sm:$0xf]
        %v3247 = vld [vmem:[#allocation7 + $0x34] sm:$0xf]
        %v3248 = vld [vmem:[#allocation7 + $0x38] sm:$0xf]
        %v3249 = vld [vmem:[#allocation7 + $0x3c] sm:$0xf]
        %v3250 = vld [vmem:[#allocation7 + $0x40] sm:$0xf]
        %v3251 = vld [vmem:[#allocation7 + $0x44] sm:$0xf]
        %v3252 = vld [vmem:[#allocation7 + $0x48] sm:$0xf]
        %v3253 = vld [vmem:[#allocation7 + $0x4c] sm:$0xf]
        %v3254 = vld [vmem:[#allocation7 + $0x50] sm:$0xf]
        %v3255 = vld [vmem:[#allocation7 + $0x54] sm:$0xf]
        %v3256 = vld [vmem:[#allocation7 + $0x58] sm:$0xf]
        %v3257 = vld [vmem:[#allocation7 + $0x5c] sm:$0xf]
        %v3258 = vld [vmem:[#allocation7 + $0x60] sm:$0xf]
        %v3259 = vld [vmem:[#allocation7 + $0x64] sm:$0xf]
        %v3260 = vld [vmem:[#allocation7 + $0x68] sm:$0xf]
        %v3261 = vld [vmem:[#allocation7 + $0x6c] sm:$0xf]
        %v3262 = vld [vmem:[#allocation7 + $0x70] sm:$0xf]
        %v3263 = vld [vmem:[#allocation7 + $0x74] sm:$0xf]
        %v3264 = vld [vmem:[#allocation7 + $0x78] sm:$0xf]
        %v3265 = vld [vmem:[#allocation7 + $0x7c] sm:$0xf]
        %v3266 = vld [vmem:[%s4] sm:$0x1]
        %v3268 = vlaneseq
        %v3269 = vshrl.u32 %v3268, 7
        %v3270 = vsub.s32 0, %v3269
        %v3271 = vrot.slane %v3266, %v3270
        %v3305 = vunpack.c.l.b16 %v3234
        %v3306 = vunpack.c.l.b16 %v3235
        %v3307 = vunpack.c.l.b16 %v3236
        %v3308 = vunpack.c.l.b16 %v3237
        %v3309 = vunpack.c.l.b16 %v3238
        %v3310 = vunpack.c.l.b16 %v3239
        %v3311 = vunpack.c.l.b16 %v3240
        %v3312 = vunpack.c.l.b16 %v3241
        %v3313 = vunpack.c.l.b16 %v3242
        %v3314 = vunpack.c.l.b16 %v3243
        %v3315 = vunpack.c.l.b16 %v3244
        %v3316 = vunpack.c.l.b16 %v3245
        %v3317 = vunpack.c.l.b16 %v3246
        %v3318 = vunpack.c.l.b16 %v3247
        %v3319 = vunpack.c.l.b16 %v3248
        %v3320 = vunpack.c.l.b16 %v3249
        %v3321 = vunpack.c.l.b16 %v3250
        %v3322 = vunpack.c.l.b16 %v3251
        %v3323 = vunpack.c.l.b16 %v3252
        %v3324 = vunpack.c.l.b16 %v3253
        %v3325 = vunpack.c.l.b16 %v3254
        %v3326 = vunpack.c.l.b16 %v3255
        %v3327 = vunpack.c.l.b16 %v3256
        %v3328 = vunpack.c.l.b16 %v3257
        %v3329 = vunpack.c.l.b16 %v3258
        %v3330 = vunpack.c.l.b16 %v3259
        %v3331 = vunpack.c.l.b16 %v3260
        %v3332 = vunpack.c.l.b16 %v3261
        %v3333 = vunpack.c.l.b16 %v3262
        %v3334 = vunpack.c.l.b16 %v3263
        %v3335 = vunpack.c.l.b16 %v3264
        %v3336 = vunpack.c.l.b16 %v3265
        %v3337 = vpack.c.b16 %v3306, %v3305
        %v3338 = vpack.c.b16 %v3308, %v3307
        %v3339 = vpack.c.b16 %v3310, %v3309
        %v3340 = vpack.c.b16 %v3312, %v3311
        %v3341 = vpack.c.b16 %v3314, %v3313
        %v3342 = vpack.c.b16 %v3316, %v3315
        %v3343 = vpack.c.b16 %v3318, %v3317
        %v3344 = vpack.c.b16 %v3320, %v3319
        %v3345 = vpack.c.b16 %v3322, %v3321
        %v3346 = vpack.c.b16 %v3324, %v3323
        %v3347 = vpack.c.b16 %v3326, %v3325
        %v3348 = vpack.c.b16 %v3328, %v3327
        %v3349 = vpack.c.b16 %v3330, %v3329
        %v3350 = vpack.c.b16 %v3332, %v3331
        %v3351 = vpack.c.b16 %v3334, %v3333
        %v3352 = vpack.c.b16 %v3336, %v3335
        %3369 = vmatprep.subr.bf16.mxu0 0
        %3370 = vmatpush1.bf16.msra.mxu0 %v3337
        %3371 = vmatprep.subr.bf16.mxu0 0
        %3372 = vmatpush1.bf16.msra.mxu0 %v3338
        %3373 = vmatprep.subr.bf16.mxu0 0
        %3374 = vmatpush1.bf16.msra.mxu0 %v3339
        %3375 = vmatprep.subr.bf16.mxu0 0
        %3376 = vmatpush1.bf16.msra.mxu0 %v3340
        %3377 = vmatprep.subr.bf16.mxu0 0
        %3378 = vmatpush1.bf16.msra.mxu0 %v3341
        %3379 = vmatprep.subr.bf16.mxu0 0
        %3380 = vmatpush1.bf16.msra.mxu0 %v3342
        %3381 = vmatprep.subr.bf16.mxu0 0
        %3382 = vmatpush1.bf16.msra.mxu0 %v3343
        %3383 = vmatprep.subr.bf16.mxu0 0
        %3384 = vmatpush1.bf16.msra.mxu0 %v3344
        %3385 = vmatprep.subr.bf16.mxu0 0
        %3386 = vmatpush1.bf16.msra.mxu0 %v3345
        %3387 = vmatprep.subr.bf16.mxu0 0
        %3388 = vmatpush1.bf16.msra.mxu0 %v3346
        %3389 = vmatprep.subr.bf16.mxu0 0
        %3390 = vmatpush1.bf16.msra.mxu0 %v3347
        %3391 = vmatprep.subr.bf16.mxu0 0
        %3392 = vmatpush1.bf16.msra.mxu0 %v3348
        %3393 = vmatprep.subr.bf16.mxu0 0
        %3394 = vmatpush1.bf16.msra.mxu0 %v3349
        %3395 = vmatprep.subr.bf16.mxu0 0
        %3396 = vmatpush1.bf16.msra.mxu0 %v3350
        %3397 = vmatprep.subr.bf16.mxu0 0
        %3398 = vmatpush1.bf16.msra.mxu0 %v3351
        %3399 = vmatprep.subr.bf16.mxu0 0
        %3400 = vmatpush1.bf16.msra.mxu0 %v3352
        %3401 = vmatprep.mubr.bf16.mxu0 %v3139
        %3402 = vmatmul.mubr.bf16.gmra.mrb[0].mxu0 %v3138
        %v3403 = vpop.f32.mrb[0].mxu0
        %v3404 = vadd.f32 %v3271, %v3403
        %v3405 = vpop.f32.mrb[0].mxu0
        %v3406 = vpop.f32.mrb[0].mxu0
        %v3407 = vadd.f32 %v3271, %v3406
        %v3408 = vpop.f32.mrb[0].mxu0
        %3409 = vmatprep.mubr.bf16.mxu0 %v3145
        %3410 = vmatmul.mubr.bf16.gmra.mrb[0].mxu0 %v3144
        %v3411 = vpop.f32.mrb[0].mxu0
        %v3412 = vadd.f32 %v3271, %v3411
        %v3413 = vpop.f32.mrb[0].mxu0
        %v3414 = vpop.f32.mrb[0].mxu0
        %v3415 = vadd.f32 %v3271, %v3414
        %v3416 = vpop.f32.mrb[0].mxu0
        %3417 = vmatprep.mubr.bf16.mxu0 %v3151
        %3418 = vmatmul.mubr.bf16.gmra.mrb[0].mxu0 %v3150
        %v3419 = vpop.f32.mrb[0].mxu0
        %v3420 = vadd.f32 %v3271, %v3419
        %v3421 = vpop.f32.mrb[0].mxu0
        %v3422 = vpop.f32.mrb[0].mxu0
        %v3423 = vadd.f32 %v3271, %v3422
        %v3424 = vpop.f32.mrb[0].mxu0
        %3425 = vmatprep.mubr.bf16.mxu0 %v3157
        %3426 = vmatmul.mubr.bf16.gmra.mrb[0].mxu0 %v3156
        %v3427 = vpop.f32.mrb[0].mxu0
        %v3428 = vadd.f32 %v3271, %v3427
        %v3429 = vpop.f32.mrb[0].mxu0
        %v3430 = vpop.f32.mrb[0].mxu0
        %v3431 = vadd.f32 %v3271, %v3430
        %v3432 = vpop.f32.mrb[0].mxu0
        %3433 = vmatprep.mubr.bf16.mxu0 %v3163
        %3434 = vmatmul.mubr.bf16.gmra.mrb[0].mxu0 %v3162
        %v3435 = vpop.f32.mrb[0].mxu0
        %v3436 = vadd.f32 %v3271, %v3435
        %v3437 = vpop.f32.mrb[0].mxu0
        %v3438 = vpop.f32.mrb[0].mxu0
        %v3439 = vadd.f32 %v3271, %v3438
        %v3440 = vpop.f32.mrb[0].mxu0
        %3441 = vmatprep.mubr.bf16.mxu0 %v3169
        %3442 = vmatmul.mubr.bf16.gmra.mrb[0].mxu0 %v3168
        %v3443 = vpop.f32.mrb[0].mxu0
        %v3444 = vadd.f32 %v3271, %v3443
        %v3445 = vpop.f32.mrb[0].mxu0
        %v3446 = vpop.f32.mrb[0].mxu0
        %v3447 = vadd.f32 %v3271, %v3446
        %v3448 = vpop.f32.mrb[0].mxu0
        %3449 = vmatprep.mubr.bf16.mxu0 %v3175
        %3450 = vmatmul.mubr.bf16.gmra.mrb[0].mxu0 %v3174
        %v3451 = vpop.f32.mrb[0].mxu0
        %v3452 = vadd.f32 %v3271, %v3451
        %v3453 = vpop.f32.mrb[0].mxu0
        %v3454 = vpop.f32.mrb[0].mxu0
        %v3455 = vadd.f32 %v3271, %v3454
        %v3456 = vpop.f32.mrb[0].mxu0
        %3457 = vmatprep.mubr.bf16.mxu0 %v3181
        %3458 = vmatmul.mubr.bf16.gmra.mrb[0].mxu0 %v3180
        %v3459 = vpop.f32.mrb[0].mxu0
        %v3460 = vadd.f32 %v3271, %v3459
        %v3461 = vpop.f32.mrb[0].mxu0
        %v3462 = vpop.f32.mrb[0].mxu0
        %v3463 = vadd.f32 %v3271, %v3462
        %v3464 = vpop.f32.mrb[0].mxu0
        %3465 = vmatprep.mubr.bf16.mxu0 %v3187
        %3466 = vmatmul.mubr.bf16.gmra.mrb[0].mxu0 %v3186
        %v3467 = vpop.f32.mrb[0].mxu0
        %v3468 = vadd.f32 %v3271, %v3467
        %v3469 = vpop.f32.mrb[0].mxu0
        %v3470 = vpop.f32.mrb[0].mxu0
        %v3471 = vadd.f32 %v3271, %v3470
        %v3472 = vpop.f32.mrb[0].mxu0
        %3473 = vmatprep.mubr.bf16.mxu0 %v3193
        %3474 = vmatmul.mubr.bf16.gmra.mrb[0].mxu0 %v3192
        %v3475 = vpop.f32.mrb[0].mxu0
        %v3476 = vadd.f32 %v3271, %v3475
        %v3477 = vpop.f32.mrb[0].mxu0
        %v3478 = vpop.f32.mrb[0].mxu0
        %v3479 = vadd.f32 %v3271, %v3478
        %v3480 = vpop.f32.mrb[0].mxu0
        %3481 = vmatprep.mubr.bf16.mxu0 %v3199
        %3482 = vmatmul.mubr.bf16.gmra.mrb[0].mxu0 %v3198
        %v3483 = vpop.f32.mrb[0].mxu0
        %v3484 = vadd.f32 %v3271, %v3483
        %v3485 = vpop.f32.mrb[0].mxu0
        %v3486 = vpop.f32.mrb[0].mxu0
        %v3487 = vadd.f32 %v3271, %v3486
        %v3488 = vpop.f32.mrb[0].mxu0
        %3489 = vmatprep.mubr.bf16.mxu0 %v3205
        %3490 = vmatmul.mubr.bf16.gmra.mrb[0].mxu0 %v3204
        %v3491 = vpop.f32.mrb[0].mxu0
        %v3492 = vadd.f32 %v3271, %v3491
        %v3493 = vpop.f32.mrb[0].mxu0
        %v3494 = vpop.f32.mrb[0].mxu0
        %v3495 = vadd.f32 %v3271, %v3494
        %v3496 = vpop.f32.mrb[0].mxu0
        %3497 = vmatprep.mubr.bf16.mxu0 %v3211
        %3498 = vmatmul.mubr.bf16.gmra.mrb[0].mxu0 %v3210
        %v3499 = vpop.f32.mrb[0].mxu0
        %v3500 = vadd.f32 %v3271, %v3499
        %v3501 = vpop.f32.mrb[0].mxu0
        %v3502 = vpop.f32.mrb[0].mxu0
        %v3503 = vadd.f32 %v3271, %v3502
        %v3504 = vpop.f32.mrb[0].mxu0
        %3505 = vmatprep.mubr.bf16.mxu0 %v3217
        %3506 = vmatmul.mubr.bf16.gmra.mrb[0].mxu0 %v3216
        %v3507 = vpop.f32.mrb[0].mxu0
        %v3508 = vadd.f32 %v3271, %v3507
        %v3509 = vpop.f32.mrb[0].mxu0
        %v3510 = vpop.f32.mrb[0].mxu0
        %v3511 = vadd.f32 %v3271, %v3510
        %v3512 = vpop.f32.mrb[0].mxu0
        %3513 = vmatprep.mubr.bf16.mxu0 %v3223
        %3514 = vmatmul.mubr.bf16.gmra.mrb[0].mxu0 %v3222
        %v3515 = vpop.f32.mrb[0].mxu0
        %v3516 = vadd.f32 %v3271, %v3515
        %v3517 = vpop.f32.mrb[0].mxu0
        %v3518 = vpop.f32.mrb[0].mxu0
        %v3519 = vadd.f32 %v3271, %v3518
        %v3520 = vpop.f32.mrb[0].mxu0
        %3521 = vmatprep.mubr.bf16.mxu0 %v3229
        %3522 = vmatmul.mubr.bf16.gmra.mrb[0].mxu0 %v3228
        %v3523 = vpop.f32.mrb[0].mxu0
        %v3524 = vadd.f32 %v3271, %v3523
        %v3525 = vpop.f32.mrb[0].mxu0
        %v3526 = vpop.f32.mrb[0].mxu0
        %v3527 = vadd.f32 %v3271, %v3526
        %v3528 = vpop.f32.mrb[0].mxu0
        %3529 = vdwg.mxu0
        %v3530 = vld [vmem:[#allocation8] sm:$0xf]
        %v3531 = vld [vmem:[#allocation8 + $0x4] sm:$0xf]
        %v3532 = vld [vmem:[#allocation8 + $0x8] sm:$0xf]
        %v3533 = vld [vmem:[#allocation8 + $0xc] sm:$0xf]
        %v3534 = vld [vmem:[#allocation8 + $0x10] sm:$0xf]
        %v3535 = vld [vmem:[#allocation8 + $0x14] sm:$0xf]
        %v3536 = vld [vmem:[#allocation8 + $0x18] sm:$0xf]
        %v3537 = vld [vmem:[#allocation8 + $0x1c] sm:$0xf]
        %v3538 = vld [vmem:[#allocation8 + $0x20] sm:$0xf]
        %v3539 = vld [vmem:[#allocation8 + $0x24] sm:$0xf]
        %v3540 = vld [vmem:[#allocation8 + $0x28] sm:$0xf]
        %v3541 = vld [vmem:[#allocation8 + $0x2c] sm:$0xf]
        %v3542 = vld [vmem:[#allocation8 + $0x30] sm:$0xf]
        %v3543 = vld [vmem:[#allocation8 + $0x34] sm:$0xf]
        %v3544 = vld [vmem:[#allocation8 + $0x38] sm:$0xf]
        %v3545 = vld [vmem:[#allocation8 + $0x3c] sm:$0xf]
        %v3546 = vld [vmem:[#allocation8 + $0x40] sm:$0xf]
        %v3547 = vld [vmem:[#allocation8 + $0x44] sm:$0xf]
        %v3548 = vld [vmem:[#allocation8 + $0x48] sm:$0xf]
        %v3549 = vld [vmem:[#allocation8 + $0x4c] sm:$0xf]
        %v3550 = vld [vmem:[#allocation8 + $0x50] sm:$0xf]
        %v3551 = vld [vmem:[#allocation8 + $0x54] sm:$0xf]
        %v3552 = vld [vmem:[#allocation8 + $0x58] sm:$0xf]
        %v3553 = vld [vmem:[#allocation8 + $0x5c] sm:$0xf]
        %v3554 = vld [vmem:[#allocation8 + $0x60] sm:$0xf]
        %v3555 = vld [vmem:[#allocation8 + $0x64] sm:$0xf]
        %v3556 = vld [vmem:[#allocation8 + $0x68] sm:$0xf]
        %v3557 = vld [vmem:[#allocation8 + $0x6c] sm:$0xf]
        %v3558 = vld [vmem:[#allocation8 + $0x70] sm:$0xf]
        %v3559 = vld [vmem:[#allocation8 + $0x74] sm:$0xf]
        %v3560 = vld [vmem:[#allocation8 + $0x78] sm:$0xf]
        %v3561 = vld [vmem:[#allocation8 + $0x7c] sm:$0xf]
        %v3562 = vld [vmem:[#allocation8 + $0x80] sm:$0xf]
        %v3563 = vld [vmem:[#allocation8 + $0x84] sm:$0xf]
        %v3564 = vld [vmem:[#allocation8 + $0x88] sm:$0xf]
        %v3565 = vld [vmem:[#allocation8 + $0x8c] sm:$0xf]
        %v3566 = vld [vmem:[#allocation8 + $0x90] sm:$0xf]
        %v3567 = vld [vmem:[#allocation8 + $0x94] sm:$0xf]
        %v3568 = vld [vmem:[#allocation8 + $0x98] sm:$0xf]
        %v3569 = vld [vmem:[#allocation8 + $0x9c] sm:$0xf]
        %v3570 = vld [vmem:[#allocation8 + $0xa0] sm:$0xf]
        %v3571 = vld [vmem:[#allocation8 + $0xa4] sm:$0xf]
        %v3572 = vld [vmem:[#allocation8 + $0xa8] sm:$0xf]
        %v3573 = vld [vmem:[#allocation8 + $0xac] sm:$0xf]
        %v3574 = vld [vmem:[#allocation8 + $0xb0] sm:$0xf]
        %v3575 = vld [vmem:[#allocation8 + $0xb4] sm:$0xf]
        %v3576 = vld [vmem:[#allocation8 + $0xb8] sm:$0xf]
        %v3577 = vld [vmem:[#allocation8 + $0xbc] sm:$0xf]
        %v3578 = vld [vmem:[#allocation8 + $0xc0] sm:$0xf]
        %v3579 = vld [vmem:[#allocation8 + $0xc4] sm:$0xf]
        %v3580 = vld [vmem:[#allocation8 + $0xc8] sm:$0xf]
        %v3581 = vld [vmem:[#allocation8 + $0xcc] sm:$0xf]
        %v3582 = vld [vmem:[#allocation8 + $0xd0] sm:$0xf]
        %v3583 = vld [vmem:[#allocation8 + $0xd4] sm:$0xf]
        %v3584 = vld [vmem:[#allocation8 + $0xd8] sm:$0xf]
        %v3585 = vld [vmem:[#allocation8 + $0xdc] sm:$0xf]
        %v3586 = vld [vmem:[#allocation8 + $0xe0] sm:$0xf]
        %v3587 = vld [vmem:[#allocation8 + $0xe4] sm:$0xf]
        %v3588 = vld [vmem:[#allocation8 + $0xe8] sm:$0xf]
        %v3589 = vld [vmem:[#allocation8 + $0xec] sm:$0xf]
        %v3590 = vld [vmem:[#allocation8 + $0xf0] sm:$0xf]
        %v3591 = vld [vmem:[#allocation8 + $0xf4] sm:$0xf]
        %v3592 = vld [vmem:[#allocation8 + $0xf8] sm:$0xf]
        %v3593 = vld [vmem:[#allocation8 + $0xfc] sm:$0xf]
        %v3594 = vld [vmem:[%s6] sm:$0x1]
        %v3596 = vlaneseq
        %v3597 = vshrl.u32 %v3596, 7
        %v3598 = vsub.s32 0, %v3597
        %v3599 = vrot.slane %v3594, %v3598
        %v3665 = vunpack.c.l.b16 %v3530
        %v3666 = vunpack.c.l.b16 %v3531
        %v3667 = vunpack.c.l.b16 %v3532
        %v3668 = vunpack.c.l.b16 %v3533
        %v3669 = vunpack.c.l.b16 %v3534
        %v3670 = vunpack.c.l.b16 %v3535
        %v3671 = vunpack.c.l.b16 %v3536
        %v3672 = vunpack.c.l.b16 %v3537
        %v3673 = vunpack.c.l.b16 %v3538
        %v3674 = vunpack.c.l.b16 %v3539
        %v3675 = vunpack.c.l.b16 %v3540
        %v3676 = vunpack.c.l.b16 %v3541
        %v3677 = vunpack.c.l.b16 %v3542
        %v3678 = vunpack.c.l.b16 %v3543
        %v3679 = vunpack.c.l.b16 %v3544
        %v3680 = vunpack.c.l.b16 %v3545
        %v3681 = vunpack.c.l.b16 %v3546
        %v3682 = vunpack.c.l.b16 %v3547
        %v3683 = vunpack.c.l.b16 %v3548
        %v3684 = vunpack.c.l.b16 %v3549
        %v3685 = vunpack.c.l.b16 %v3550
        %v3686 = vunpack.c.l.b16 %v3551
        %v3687 = vunpack.c.l.b16 %v3552
        %v3688 = vunpack.c.l.b16 %v3553
        %v3689 = vunpack.c.l.b16 %v3554
        %v3690 = vunpack.c.l.b16 %v3555
        %v3691 = vunpack.c.l.b16 %v3556
        %v3692 = vunpack.c.l.b16 %v3557
        %v3693 = vunpack.c.l.b16 %v3558
        %v3694 = vunpack.c.l.b16 %v3559
        %v3695 = vunpack.c.l.b16 %v3560
        %v3696 = vunpack.c.l.b16 %v3561
        %v3697 = vunpack.c.l.b16 %v3562
        %v3698 = vunpack.c.l.b16 %v3563
        %v3699 = vunpack.c.l.b16 %v3564
        %v3700 = vunpack.c.l.b16 %v3565
        %v3701 = vunpack.c.l.b16 %v3566
        %v3702 = vunpack.c.l.b16 %v3567
        %v3703 = vunpack.c.l.b16 %v3568
        %v3704 = vunpack.c.l.b16 %v3569
        %v3705 = vunpack.c.l.b16 %v3570
        %v3706 = vunpack.c.l.b16 %v3571
        %v3707 = vunpack.c.l.b16 %v3572
        %v3708 = vunpack.c.l.b16 %v3573
        %v3709 = vunpack.c.l.b16 %v3574
        %v3710 = vunpack.c.l.b16 %v3575
        %v3711 = vunpack.c.l.b16 %v3576
        %v3712 = vunpack.c.l.b16 %v3577
        %v3713 = vunpack.c.l.b16 %v3578
        %v3714 = vunpack.c.l.b16 %v3579
        %v3715 = vunpack.c.l.b16 %v3580
        %v3716 = vunpack.c.l.b16 %v3581
        %v3717 = vunpack.c.l.b16 %v3582
        %v3718 = vunpack.c.l.b16 %v3583
        %v3719 = vunpack.c.l.b16 %v3584
        %v3720 = vunpack.c.l.b16 %v3585
        %v3721 = vunpack.c.l.b16 %v3586
        %v3722 = vunpack.c.l.b16 %v3587
        %v3723 = vunpack.c.l.b16 %v3588
        %v3724 = vunpack.c.l.b16 %v3589
        %v3725 = vunpack.c.l.b16 %v3590
        %v3726 = vunpack.c.l.b16 %v3591
        %v3727 = vunpack.c.l.b16 %v3592
        %v3728 = vunpack.c.l.b16 %v3593
        %v3729 = vpack.c.b16 %v3666, %v3665
        %v3730 = vpack.c.b16 %v3668, %v3667
        %v3731 = vpack.c.b16 %v3670, %v3669
        %v3732 = vpack.c.b16 %v3672, %v3671
        %v3733 = vpack.c.b16 %v3674, %v3673
        %v3734 = vpack.c.b16 %v3676, %v3675
        %v3735 = vpack.c.b16 %v3678, %v3677
        %v3736 = vpack.c.b16 %v3680, %v3679
        %v3737 = vpack.c.b16 %v3682, %v3681
        %v3738 = vpack.c.b16 %v3684, %v3683
        %v3739 = vpack.c.b16 %v3686, %v3685
        %v3740 = vpack.c.b16 %v3688, %v3687
        %v3741 = vpack.c.b16 %v3690, %v3689
        %v3742 = vpack.c.b16 %v3692, %v3691
        %v3743 = vpack.c.b16 %v3694, %v3693
        %v3744 = vpack.c.b16 %v3696, %v3695
        %v3745 = vpack.c.b16 %v3698, %v3697
        %v3746 = vpack.c.b16 %v3700, %v3699
        %v3747 = vpack.c.b16 %v3702, %v3701
        %v3748 = vpack.c.b16 %v3704, %v3703
        %v3749 = vpack.c.b16 %v3706, %v3705
        %v3750 = vpack.c.b16 %v3708, %v3707
        %v3751 = vpack.c.b16 %v3710, %v3709
        %v3752 = vpack.c.b16 %v3712, %v3711
        %v3753 = vpack.c.b16 %v3714, %v3713
        %v3754 = vpack.c.b16 %v3716, %v3715
        %v3755 = vpack.c.b16 %v3718, %v3717
        %v3756 = vpack.c.b16 %v3720, %v3719
        %v3757 = vpack.c.b16 %v3722, %v3721
        %v3758 = vpack.c.b16 %v3724, %v3723
        %v3759 = vpack.c.b16 %v3726, %v3725
        %v3760 = vpack.c.b16 %v3728, %v3727
        %3793 = vmatprep.subr.bf16.mxu0 0
        %3794 = vmatpush1.bf16.msra.mxu0 %v3729
        %3795 = vmatprep.subr.bf16.mxu0 0
        %3796 = vmatpush1.bf16.msra.mxu0 %v3730
        %3797 = vmatprep.subr.bf16.mxu0 0
        %3798 = vmatpush1.bf16.msra.mxu0 %v3731
        %3799 = vmatprep.subr.bf16.mxu0 0
        %3800 = vmatpush1.bf16.msra.mxu0 %v3732
        %3801 = vmatprep.subr.bf16.mxu0 0
        %3802 = vmatpush1.bf16.msra.mxu0 %v3733
        %3803 = vmatprep.subr.bf16.mxu0 0
        %3804 = vmatpush1.bf16.msra.mxu0 %v3734
        %3805 = vmatprep.subr.bf16.mxu0 0
        %3806 = vmatpush1.bf16.msra.mxu0 %v3735
        %3807 = vmatprep.subr.bf16.mxu0 0
        %3808 = vmatpush1.bf16.msra.mxu0 %v3736
        %3809 = vmatprep.subr.bf16.mxu0 0
        %3810 = vmatpush1.bf16.msra.mxu0 %v3737
        %3811 = vmatprep.subr.bf16.mxu0 0
        %3812 = vmatpush1.bf16.msra.mxu0 %v3738
        %3813 = vmatprep.subr.bf16.mxu0 0
        %3814 = vmatpush1.bf16.msra.mxu0 %v3739
        %3815 = vmatprep.subr.bf16.mxu0 0
        %3816 = vmatpush1.bf16.msra.mxu0 %v3740
        %3817 = vmatprep.subr.bf16.mxu0 0
        %3818 = vmatpush1.bf16.msra.mxu0 %v3741
        %3819 = vmatprep.subr.bf16.mxu0 0
        %3820 = vmatpush1.bf16.msra.mxu0 %v3742
        %3821 = vmatprep.subr.bf16.mxu0 0
        %3822 = vmatpush1.bf16.msra.mxu0 %v3743
        %3823 = vmatprep.subr.bf16.mxu0 0
        %3824 = vmatpush1.bf16.msra.mxu0 %v3744
        %3825 = vmatprep.mubr.bf16.mxu0 %v3141
        %3826 = vmatmul.mubr.bf16.gmra.mrb[0].mxu0 %v3140
        %v3827 = vpop.f32.mrb[0].mxu0
        %v3828 = vadd.f32 %v3599, %v3827
        %v3829 = vpop.f32.mrb[0].mxu0
        %v3830 = vpop.f32.mrb[0].mxu0
        %v3831 = vadd.f32 %v3599, %v3830
        %v3832 = vpop.f32.mrb[0].mxu0
        %3833 = vmatprep.mubr.bf16.mxu0 %v3147
        %3834 = vmatmul.mubr.bf16.gmra.mrb[0].mxu0 %v3146
        %v3835 = vpop.f32.mrb[0].mxu0
        %v3836 = vadd.f32 %v3599, %v3835
        %v3837 = vpop.f32.mrb[0].mxu0
        %v3838 = vpop.f32.mrb[0].mxu0
        %v3839 = vadd.f32 %v3599, %v3838
        %v3840 = vpop.f32.mrb[0].mxu0
        %3841 = vmatprep.mubr.bf16.mxu0 %v3153
        %3842 = vmatmul.mubr.bf16.gmra.mrb[0].mxu0 %v3152
        %v3843 = vpop.f32.mrb[0].mxu0
        %v3844 = vadd.f32 %v3599, %v3843
        %v3845 = vpop.f32.mrb[0].mxu0
        %v3846 = vpop.f32.mrb[0].mxu0
        %v3847 = vadd.f32 %v3599, %v3846
        %v3848 = vpop.f32.mrb[0].mxu0
        %3849 = vmatprep.mubr.bf16.mxu0 %v3159
        %3850 = vmatmul.mubr.bf16.gmra.mrb[0].mxu0 %v3158
        %v3851 = vpop.f32.mrb[0].mxu0
        %v3852 = vadd.f32 %v3599, %v3851
        %v3853 = vpop.f32.mrb[0].mxu0
        %v3854 = vpop.f32.mrb[0].mxu0
        %v3855 = vadd.f32 %v3599, %v3854
        %v3856 = vpop.f32.mrb[0].mxu0
        %3857 = vmatprep.mubr.bf16.mxu0 %v3165
        %3858 = vmatmul.mubr.bf16.gmra.mrb[0].mxu0 %v3164
        %v3859 = vpop.f32.mrb[0].mxu0
        %v3860 = vadd.f32 %v3599, %v3859
        %v3861 = vpop.f32.mrb[0].mxu0
        %v3862 = vpop.f32.mrb[0].mxu0
        %v3863 = vadd.f32 %v3599, %v3862
        %v3864 = vpop.f32.mrb[0].mxu0
        %3865 = vmatprep.mubr.bf16.mxu0 %v3171
        %3866 = vmatmul.mubr.bf16.gmra.mrb[0].mxu0 %v3170
        %v3867 = vpop.f32.mrb[0].mxu0
        %v3868 = vadd.f32 %v3599, %v3867
        %v3869 = vpop.f32.mrb[0].mxu0
        %v3870 = vpop.f32.mrb[0].mxu0
        %v3871 = vadd.f32 %v3599, %v3870
        %v3872 = vpop.f32.mrb[0].mxu0
        %3873 = vmatprep.mubr.bf16.mxu0 %v3177
        %3874 = vmatmul.mubr.bf16.gmra.mrb[0].mxu0 %v3176
        %v3875 = vpop.f32.mrb[0].mxu0
        %v3876 = vadd.f32 %v3599, %v3875
        %v3877 = vpop.f32.mrb[0].mxu0
        %v3878 = vpop.f32.mrb[0].mxu0
        %v3879 = vadd.f32 %v3599, %v3878
        %v3880 = vpop.f32.mrb[0].mxu0
        %3881 = vmatprep.mubr.bf16.mxu0 %v3183
        %3882 = vmatmul.mubr.bf16.gmra.mrb[0].mxu0 %v3182
        %v3883 = vpop.f32.mrb[0].mxu0
        %v3884 = vadd.f32 %v3599, %v3883
        %v3885 = vpop.f32.mrb[0].mxu0
        %v3886 = vpop.f32.mrb[0].mxu0
        %v3887 = vadd.f32 %v3599, %v3886
        %v3888 = vpop.f32.mrb[0].mxu0
        %3889 = vmatprep.mubr.bf16.mxu0 %v3189
        %3890 = vmatmul.mubr.bf16.gmra.mrb[0].mxu0 %v3188
        %v3891 = vpop.f32.mrb[0].mxu0
        %v3892 = vadd.f32 %v3599, %v3891
        %v3893 = vpop.f32.mrb[0].mxu0
        %v3894 = vpop.f32.mrb[0].mxu0
        %v3895 = vadd.f32 %v3599, %v3894
        %v3896 = vpop.f32.mrb[0].mxu0
        %3897 = vmatprep.mubr.bf16.mxu0 %v3195
        %3898 = vmatmul.mubr.bf16.gmra.mrb[0].mxu0 %v3194
        %v3899 = vpop.f32.mrb[0].mxu0
        %v3900 = vadd.f32 %v3599, %v3899
        %v3901 = vpop.f32.mrb[0].mxu0
        %v3902 = vpop.f32.mrb[0].mxu0
        %v3903 = vadd.f32 %v3599, %v3902
        %v3904 = vpop.f32.mrb[0].mxu0
        %3905 = vmatprep.mubr.bf16.mxu0 %v3201
        %3906 = vmatmul.mubr.bf16.gmra.mrb[0].mxu0 %v3200
        %v3907 = vpop.f32.mrb[0].mxu0
        %v3908 = vadd.f32 %v3599, %v3907
        %v3909 = vpop.f32.mrb[0].mxu0
        %v3910 = vpop.f32.mrb[0].mxu0
        %v3911 = vadd.f32 %v3599, %v3910
        %v3912 = vpop.f32.mrb[0].mxu0
        %3913 = vmatprep.mubr.bf16.mxu0 %v3207
        %3914 = vmatmul.mubr.bf16.gmra.mrb[0].mxu0 %v3206
        %v3915 = vpop.f32.mrb[0].mxu0
        %v3916 = vadd.f32 %v3599, %v3915
        %v3917 = vpop.f32.mrb[0].mxu0
        %v3918 = vpop.f32.mrb[0].mxu0
        %v3919 = vadd.f32 %v3599, %v3918
        %v3920 = vpop.f32.mrb[0].mxu0
        %3921 = vmatprep.mubr.bf16.mxu0 %v3213
        %3922 = vmatmul.mubr.bf16.gmra.mrb[0].mxu0 %v3212
        %v3923 = vpop.f32.mrb[0].mxu0
        %v3924 = vadd.f32 %v3599, %v3923
        %v3925 = vpop.f32.mrb[0].mxu0
        %v3926 = vpop.f32.mrb[0].mxu0
        %v3927 = vadd.f32 %v3599, %v3926
        %v3928 = vpop.f32.mrb[0].mxu0
        %3929 = vmatprep.mubr.bf16.mxu0 %v3219
        %3930 = vmatmul.mubr.bf16.gmra.mrb[0].mxu0 %v3218
        %v3931 = vpop.f32.mrb[0].mxu0
        %v3932 = vadd.f32 %v3599, %v3931
        %v3933 = vpop.f32.mrb[0].mxu0
        %v3934 = vpop.f32.mrb[0].mxu0
        %v3935 = vadd.f32 %v3599, %v3934
        %v3936 = vpop.f32.mrb[0].mxu0
        %3937 = vmatprep.mubr.bf16.mxu0 %v3225
        %3938 = vmatmul.mubr.bf16.gmra.mrb[0].mxu0 %v3224
        %v3939 = vpop.f32.mrb[0].mxu0
        %v3940 = vadd.f32 %v3599, %v3939
        %v3941 = vpop.f32.mrb[0].mxu0
        %v3942 = vpop.f32.mrb[0].mxu0
        %v3943 = vadd.f32 %v3599, %v3942
        %v3944 = vpop.f32.mrb[0].mxu0
        %3945 = vmatprep.mubr.bf16.mxu0 %v3231
        %3946 = vmatmul.mubr.bf16.gmra.mrb[0].mxu0 %v3230
        %v3947 = vpop.f32.mrb[0].mxu0
        %v3948 = vadd.f32 %v3599, %v3947
        %v3949 = vpop.f32.mrb[0].mxu0
        %v3950 = vpop.f32.mrb[0].mxu0
        %v3951 = vadd.f32 %v3599, %v3950
        %v3952 = vpop.f32.mrb[0].mxu0
        %3953 = vdwg.mxu0
        %3954 = vmatprep.subr.bf16.mxu0 0
        %3955 = vmatpush1.bf16.msra.mxu0 %v3745
        %3956 = vmatprep.subr.bf16.mxu0 0
        %3957 = vmatpush1.bf16.msra.mxu0 %v3746
        %3958 = vmatprep.subr.bf16.mxu0 0
        %3959 = vmatpush1.bf16.msra.mxu0 %v3747
        %3960 = vmatprep.subr.bf16.mxu0 0
        %3961 = vmatpush1.bf16.msra.mxu0 %v3748
        %3962 = vmatprep.subr.bf16.mxu0 0
        %3963 = vmatpush1.bf16.msra.mxu0 %v3749
        %3964 = vmatprep.subr.bf16.mxu0 0
        %3965 = vmatpush1.bf16.msra.mxu0 %v3750
        %3966 = vmatprep.subr.bf16.mxu0 0
        %3967 = vmatpush1.bf16.msra.mxu0 %v3751
        %3968 = vmatprep.subr.bf16.mxu0 0
        %3969 = vmatpush1.bf16.msra.mxu0 %v3752
        %3970 = vmatprep.subr.bf16.mxu0 0
        %3971 = vmatpush1.bf16.msra.mxu0 %v3753
        %3972 = vmatprep.subr.bf16.mxu0 0
        %3973 = vmatpush1.bf16.msra.mxu0 %v3754
        %3974 = vmatprep.subr.bf16.mxu0 0
        %3975 = vmatpush1.bf16.msra.mxu0 %v3755
        %3976 = vmatprep.subr.bf16.mxu0 0
        %3977 = vmatpush1.bf16.msra.mxu0 %v3756
        %3978 = vmatprep.subr.bf16.mxu0 0
        %3979 = vmatpush1.bf16.msra.mxu0 %v3757
        %3980 = vmatprep.subr.bf16.mxu0 0
        %3981 = vmatpush1.bf16.msra.mxu0 %v3758
        %3982 = vmatprep.subr.bf16.mxu0 0
        %3983 = vmatpush1.bf16.msra.mxu0 %v3759
        %3984 = vmatprep.subr.bf16.mxu0 0
        %3985 = vmatpush1.bf16.msra.mxu0 %v3760
        %3986 = vmatprep.mubr.bf16.mxu0 %v3143
        %3987 = vmatmul.mubr.bf16.gmra.mrb[0].mxu0 %v3142
        %v3988 = vpop.f32.mrb[0].mxu0
        %v3989 = vadd.f32 %v3828, %v3988
        %v3990 = vpop.f32.mrb[0].mxu0
        %v3991 = vpop.f32.mrb[0].mxu0
        %v3992 = vadd.f32 %v3831, %v3991
        %v3993 = vpop.f32.mrb[0].mxu0
        %3994 = vmatprep.mubr.bf16.mxu0 %v3149
        %3995 = vmatmul.mubr.bf16.gmra.mrb[0].mxu0 %v3148
        %v3996 = vpop.f32.mrb[0].mxu0
        %v3997 = vadd.f32 %v3836, %v3996
        %v3998 = vpop.f32.mrb[0].mxu0
        %v3999 = vpop.f32.mrb[0].mxu0
        %v4000 = vadd.f32 %v3839, %v3999
        %v4001 = vpop.f32.mrb[0].mxu0
        %4002 = vmatprep.mubr.bf16.mxu0 %v3155
        %4003 = vmatmul.mubr.bf16.gmra.mrb[0].mxu0 %v3154
        %v4004 = vpop.f32.mrb[0].mxu0
        %v4005 = vadd.f32 %v3844, %v4004
        %v4006 = vpop.f32.mrb[0].mxu0
        %v4007 = vpop.f32.mrb[0].mxu0
        %v4008 = vadd.f32 %v3847, %v4007
        %v4009 = vpop.f32.mrb[0].mxu0
        %4010 = vmatprep.mubr.bf16.mxu0 %v3161
        %4011 = vmatmul.mubr.bf16.gmra.mrb[0].mxu0 %v3160
        %v4012 = vpop.f32.mrb[0].mxu0
        %v4013 = vadd.f32 %v3852, %v4012
        %v4014 = vpop.f32.mrb[0].mxu0
        %v4015 = vpop.f32.mrb[0].mxu0
        %v4016 = vadd.f32 %v3855, %v4015
        %v4017 = vpop.f32.mrb[0].mxu0
        %4018 = vmatprep.mubr.bf16.mxu0 %v3167
        %4019 = vmatmul.mubr.bf16.gmra.mrb[0].mxu0 %v3166
        %v4020 = vpop.f32.mrb[0].mxu0
        %v4021 = vadd.f32 %v3860, %v4020
        %v4022 = vpop.f32.mrb[0].mxu0
        %v4023 = vpop.f32.mrb[0].mxu0
        %v4024 = vadd.f32 %v3863, %v4023
        %v4025 = vpop.f32.mrb[0].mxu0
        %4026 = vmatprep.mubr.bf16.mxu0 %v3173
        %4027 = vmatmul.mubr.bf16.gmra.mrb[0].mxu0 %v3172
        %v4028 = vpop.f32.mrb[0].mxu0
        %v4029 = vadd.f32 %v3868, %v4028
        %v4030 = vpop.f32.mrb[0].mxu0
        %v4031 = vpop.f32.mrb[0].mxu0
        %v4032 = vadd.f32 %v3871, %v4031
        %v4033 = vpop.f32.mrb[0].mxu0
        %4034 = vmatprep.mubr.bf16.mxu0 %v3179
        %4035 = vmatmul.mubr.bf16.gmra.mrb[0].mxu0 %v3178
        %v4036 = vpop.f32.mrb[0].mxu0
        %v4037 = vadd.f32 %v3876, %v4036
        %v4038 = vpop.f32.mrb[0].mxu0
        %v4039 = vpop.f32.mrb[0].mxu0
        %v4040 = vadd.f32 %v3879, %v4039
        %v4041 = vpop.f32.mrb[0].mxu0
        %4042 = vmatprep.mubr.bf16.mxu0 %v3185
        %4043 = vmatmul.mubr.bf16.gmra.mrb[0].mxu0 %v3184
        %v4044 = vpop.f32.mrb[0].mxu0
        %v4045 = vadd.f32 %v3884, %v4044
        %v4046 = vpop.f32.mrb[0].mxu0
        %v4047 = vpop.f32.mrb[0].mxu0
        %v4048 = vadd.f32 %v3887, %v4047
        %v4049 = vpop.f32.mrb[0].mxu0
        %4050 = vmatprep.mubr.bf16.mxu0 %v3191
        %4051 = vmatmul.mubr.bf16.gmra.mrb[0].mxu0 %v3190
        %v4052 = vpop.f32.mrb[0].mxu0
        %v4053 = vadd.f32 %v3892, %v4052
        %v4054 = vpop.f32.mrb[0].mxu0
        %v4055 = vpop.f32.mrb[0].mxu0
        %v4056 = vadd.f32 %v3895, %v4055
        %v4057 = vpop.f32.mrb[0].mxu0
        %4058 = vmatprep.mubr.bf16.mxu0 %v3197
        %4059 = vmatmul.mubr.bf16.gmra.mrb[0].mxu0 %v3196
        %v4060 = vpop.f32.mrb[0].mxu0
        %v4061 = vadd.f32 %v3900, %v4060
        %v4062 = vpop.f32.mrb[0].mxu0
        %v4063 = vpop.f32.mrb[0].mxu0
        %v4064 = vadd.f32 %v3903, %v4063
        %v4065 = vpop.f32.mrb[0].mxu0
        %4066 = vmatprep.mubr.bf16.mxu0 %v3203
        %4067 = vmatmul.mubr.bf16.gmra.mrb[0].mxu0 %v3202
        %v4068 = vpop.f32.mrb[0].mxu0
        %v4069 = vadd.f32 %v3908, %v4068
        %v4070 = vpop.f32.mrb[0].mxu0
        %v4071 = vpop.f32.mrb[0].mxu0
        %v4072 = vadd.f32 %v3911, %v4071
        %v4073 = vpop.f32.mrb[0].mxu0
        %4074 = vmatprep.mubr.bf16.mxu0 %v3209
        %4075 = vmatmul.mubr.bf16.gmra.mrb[0].mxu0 %v3208
        %v4076 = vpop.f32.mrb[0].mxu0
        %v4077 = vadd.f32 %v3916, %v4076
        %v4078 = vpop.f32.mrb[0].mxu0
        %v4079 = vpop.f32.mrb[0].mxu0
        %v4080 = vadd.f32 %v3919, %v4079
        %v4081 = vpop.f32.mrb[0].mxu0
        %4082 = vmatprep.mubr.bf16.mxu0 %v3215
        %4083 = vmatmul.mubr.bf16.gmra.mrb[0].mxu0 %v3214
        %v4084 = vpop.f32.mrb[0].mxu0
        %v4085 = vadd.f32 %v3924, %v4084
        %v4086 = vpop.f32.mrb[0].mxu0
        %v4087 = vpop.f32.mrb[0].mxu0
        %v4088 = vadd.f32 %v3927, %v4087
        %v4089 = vpop.f32.mrb[0].mxu0
        %4090 = vmatprep.mubr.bf16.mxu0 %v3221
        %4091 = vmatmul.mubr.bf16.gmra.mrb[0].mxu0 %v3220
        %v4092 = vpop.f32.mrb[0].mxu0
        %v4093 = vadd.f32 %v3932, %v4092
        %v4094 = vpop.f32.mrb[0].mxu0
        %v4095 = vpop.f32.mrb[0].mxu0
        %v4096 = vadd.f32 %v3935, %v4095
        %v4097 = vpop.f32.mrb[0].mxu0
        %4098 = vmatprep.mubr.bf16.mxu0 %v3227
        %4099 = vmatmul.mubr.bf16.gmra.mrb[0].mxu0 %v3226
        %v4100 = vpop.f32.mrb[0].mxu0
        %v4101 = vadd.f32 %v3940, %v4100
        %v4102 = vpop.f32.mrb[0].mxu0
        %v4103 = vpop.f32.mrb[0].mxu0
        %v4104 = vadd.f32 %v3943, %v4103
        %v4105 = vpop.f32.mrb[0].mxu0
        %4106 = vmatprep.mubr.bf16.mxu0 %v3233
        %4107 = vmatmul.mubr.bf16.gmra.mrb[0].mxu0 %v3232
        %v4108 = vpop.f32.mrb[0].mxu0
        %v4109 = vadd.f32 %v3948, %v4108
        %v4110 = vpop.f32.mrb[0].mxu0
        %v4111 = vpop.f32.mrb[0].mxu0
        %v4112 = vadd.f32 %v3951, %v4111
        %v4113 = vpop.f32.mrb[0].mxu0
        %4114 = vdwg.mxu0
        %4115 = vst [vmem:[%s371] sm:$0xff] %v3404
        %4116 = vst [vmem:[%s371 + $0x8] sm:$0xff] %v3407
        %4117 = vst [vmem:[%s371 + $0x10] sm:$0xff] %v3412
        %4118 = vst [vmem:[%s371 + $0x18] sm:$0xff] %v3415
        %4119 = vst [vmem:[%s371 + $0x20] sm:$0xff] %v3420
        %4120 = vst [vmem:[%s371 + $0x28] sm:$0xff] %v3423
        %4121 = vst [vmem:[%s371 + $0x30] sm:$0xff] %v3428
        %4122 = vst [vmem:[%s371 + $0x38] sm:$0xff] %v3431
        %4123 = vst [vmem:[%s371 + $0x40] sm:$0xff] %v3436
        %4124 = vst [vmem:[%s371 + $0x48] sm:$0xff] %v3439
        %4125 = vst [vmem:[%s371 + $0x50] sm:$0xff] %v3444
        %4126 = vst [vmem:[%s371 + $0x58] sm:$0xff] %v3447
        %4127 = vst [vmem:[%s371 + $0x60] sm:$0xff] %v3452
        %4128 = vst [vmem:[%s371 + $0x68] sm:$0xff] %v3455
        %4129 = vst [vmem:[%s371 + $0x70] sm:$0xff] %v3460
        %4130 = vst [vmem:[%s371 + $0x78] sm:$0xff] %v3463
        %4131 = vst [vmem:[%s371 + $0x80] sm:$0xff] %v3468
        %4132 = vst [vmem:[%s371 + $0x88] sm:$0xff] %v3471
        %4133 = vst [vmem:[%s371 + $0x90] sm:$0xff] %v3476
        %4134 = vst [vmem:[%s371 + $0x98] sm:$0xff] %v3479
        %4135 = vst [vmem:[%s371 + $0xa0] sm:$0xff] %v3484
        %4136 = vst [vmem:[%s371 + $0xa8] sm:$0xff] %v3487
        %4137 = vst [vmem:[%s371 + $0xb0] sm:$0xff] %v3492
        %4138 = vst [vmem:[%s371 + $0xb8] sm:$0xff] %v3495
        %4139 = vst [vmem:[%s371 + $0xc0] sm:$0xff] %v3500
        %4140 = vst [vmem:[%s371 + $0xc8] sm:$0xff] %v3503
        %4141 = vst [vmem:[%s371 + $0xd0] sm:$0xff] %v3508
        %4142 = vst [vmem:[%s371 + $0xd8] sm:$0xff] %v3511
        %4143 = vst [vmem:[%s371 + $0xe0] sm:$0xff] %v3516
        %4144 = vst [vmem:[%s371 + $0xe8] sm:$0xff] %v3519
        %4145 = vst [vmem:[%s371 + $0xf0] sm:$0xff] %v3524
        %4146 = vst [vmem:[%s371 + $0xf8] sm:$0xff] %v3527
        %4147 = vst [vmem:[%s378] sm:$0xff] %v3989
        %4148 = vst [vmem:[%s378 + $0x8] sm:$0xff] %v3992
        %4149 = vst [vmem:[%s378 + $0x10] sm:$0xff] %v3997
        %4150 = vst [vmem:[%s378 + $0x18] sm:$0xff] %v4000
        %4151 = vst [vmem:[%s378 + $0x20] sm:$0xff] %v4005
        %4152 = vst [vmem:[%s378 + $0x28] sm:$0xff] %v4008
        %4153 = vst [vmem:[%s378 + $0x30] sm:$0xff] %v4013
        %4154 = vst [vmem:[%s378 + $0x38] sm:$0xff] %v4016
        %4155 = vst [vmem:[%s378 + $0x40] sm:$0xff] %v4021
        %4156 = vst [vmem:[%s378 + $0x48] sm:$0xff] %v4024
        %4157 = vst [vmem:[%s378 + $0x50] sm:$0xff] %v4029
        %4158 = vst [vmem:[%s378 + $0x58] sm:$0xff] %v4032
        %4159 = vst [vmem:[%s378 + $0x60] sm:$0xff] %v4037
        %4160 = vst [vmem:[%s378 + $0x68] sm:$0xff] %v4040
        %4161 = vst [vmem:[%s378 + $0x70] sm:$0xff] %v4045
        %4162 = vst [vmem:[%s378 + $0x78] sm:$0xff] %v4048
        %4163 = vst [vmem:[%s378 + $0x80] sm:$0xff] %v4053
        %4164 = vst [vmem:[%s378 + $0x88] sm:$0xff] %v4056
        %4165 = vst [vmem:[%s378 + $0x90] sm:$0xff] %v4061
        %4166 = vst [vmem:[%s378 + $0x98] sm:$0xff] %v4064
        %4167 = vst [vmem:[%s378 + $0xa0] sm:$0xff] %v4069
        %4168 = vst [vmem:[%s378 + $0xa8] sm:$0xff] %v4072
        %4169 = vst [vmem:[%s378 + $0xb0] sm:$0xff] %v4077
        %4170 = vst [vmem:[%s378 + $0xb8] sm:$0xff] %v4080
        %4171 = vst [vmem:[%s378 + $0xc0] sm:$0xff] %v4085
        %4172 = vst [vmem:[%s378 + $0xc8] sm:$0xff] %v4088
        %4173 = vst [vmem:[%s378 + $0xd0] sm:$0xff] %v4093
        %4174 = vst [vmem:[%s378 + $0xd8] sm:$0xff] %v4096
        %4175 = vst [vmem:[%s378 + $0xe0] sm:$0xff] %v4101
        %4176 = vst [vmem:[%s378 + $0xe8] sm:$0xff] %v4104
        %4177 = vst [vmem:[%s378 + $0xf0] sm:$0xff] %v4109
        %4178 = vst [vmem:[%s378 + $0xf8] sm:$0xff] %v4112
        %s4179 = sand.u32 %s191, 1
        %s4180 = scalar_lea.sflag [#allocation4], %s4179
        %s4181 = sand.u32 %s191, 1
        %s4182 = smul.addr %s4181, 256
        %s4183 = scalar_lea.vmem [#allocation10], %s4182
        %s4184 = sand.u32 %s217, 1
        %s4185 = scalar_lea.sflag [#allocation12], %s4184
        %s4186 = sand.u32 %s217, 1
        %s4187 = smul.addr %s4186, 256
        %s4188 = scalar_lea.vmem [#allocation11], %s4187
        // Predicated region
        $region65: #{tpu_custom_call.1} parent=47 // pred_check
          %p4189 = pneg %p201
        $region66: #{tpu_custom_call.1} parent=47 // pred_check_branch
          %4191 = sbr.rel (%p4189) target = $region68
        $region67: #{tpu_custom_call.1} parent=47 // pred_region
          %s4192 = smul.u32 32, %s31
          %s4194 = ssub.s32 4096, 4096
          %4195 = vsyncadd %s4180, %s4194
          %s4196 = smul.addr %s4192, 128
          %s4197 = scalar_lea.hbm %s7, %s4196
          %s4198 = sshll.u32 %s4183, 4
          %s4199 = int_to_ptr.vmem [resolvable:$true] %s4198
          %4204 = dma.vmem_to_hbm [thread:$0]  %s4199, 4096, %s4197, %s4180, 128, 128, 8
        $region68: #{tpu_custom_call.1} parent=47 // pred_fallthru
          _
        // Predicated region
        $region69: #{tpu_custom_call.1} parent=47 // pred_check
          %p4205 = pneg %p227
        $region70: #{tpu_custom_call.1} parent=47 // pred_check_branch
          %4207 = sbr.rel (%p4205) target = $region72
        $region71: #{tpu_custom_call.1} parent=47 // pred_region
          %s4208 = smul.u32 32, %s31
          %s4210 = ssub.s32 4096, 4096
          %4211 = vsyncadd %s4185, %s4210
          %s4212 = smul.addr %s4208, 128
          %s4213 = scalar_lea.hbm %s8, %s4212
          %s4214 = sshll.u32 %s4188, 4
          %s4215 = int_to_ptr.vmem [resolvable:$true] %s4214
          %4220 = dma.vmem_to_hbm [thread:$0]  %s4215, 4096, %s4213, %s4185, 128, 128, 8
        $region72: #{tpu_custom_call.1} parent=47 // pred_fallthru
          _
      $region48: #{tpu_custom_call.1} parent=5 // pred_fallthru
        _
      %p4221 = scmp.le.s32.totalorder 2, %s26
      // Predicated region
      $region73: #{tpu_custom_call.1} parent=5 // pred_check
        %p4222 = pneg %p4221
      $region74: #{tpu_custom_call.1} parent=5 // pred_check_branch
        %4224 = sbr.rel (%p4222) target = $region76
      $region75: #{tpu_custom_call.1} parent=5 // pred_region
        %s4225 = ssub.s32 %s26, 2
        // Predicated region
        $region77: #{tpu_custom_call.1} parent=75 // pred_check
          %p4226 = pneg %p207
        $region78: #{tpu_custom_call.1} parent=75 // pred_check_branch
          %4228 = sbr.rel (%p4226) target = $region80
        $region79: #{tpu_custom_call.1} parent=75 // pred_region
          %s4229 = sand.u32 %s192, 1
          %s4230 = scalar_lea.sflag [#allocation4], %s4229
          %s4231 = sand.u32 %s192, 1
          %s4232 = smul.addr %s4231, 256
          %s4233 = scalar_lea.vmem [#allocation10], %s4232
          %4234 = dma.done %s4230, 4096
        $region80: #{tpu_custom_call.1} parent=75 // pred_fallthru
          _
        // Predicated region
        $region81: #{tpu_custom_call.1} parent=75 // pred_check
          %p4235 = pneg %p233
        $region82: #{tpu_custom_call.1} parent=75 // pred_check_branch
          %4237 = sbr.rel (%p4235) target = $region84
        $region83: #{tpu_custom_call.1} parent=75 // pred_region
          %s4238 = sand.u32 %s218, 1
          %s4239 = scalar_lea.sflag [#allocation12], %s4238
          %s4240 = sand.u32 %s218, 1
          %s4241 = smul.addr %s4240, 256
          %s4242 = scalar_lea.vmem [#allocation11], %s4241
          %4243 = dma.done %s4239, 4096
        $region84: #{tpu_custom_call.1} parent=75 // pred_fallthru
          _
      $region76: #{tpu_custom_call.1} parent=5 // pred_fallthru
        _
    $region6: #{tpu_custom_call.1} parent=1 // loop_footer
      %s30 = sadd.s32 1, %s26
    $region7: #{tpu_custom_call.1} parent=1 // loop_footer_branch
      %25 = sbr.rel target = $region3
    $region8: #{tpu_custom_call.1} parent=1 // loop_exit
      _
    %4244 = vsyncpa [#allocation3], 1
    %s4245 = scalar_lea.sflag [#allocation3], 1
    %4246 = vsyncpa %s4245, 1
    %4247 = vsyncpa [#allocation6], 1
    %4248 = vsyncpa [#allocation9], 1
    %4249 = vsyncpa [#allocation4], 1
    %s4250 = scalar_lea.sflag [#allocation4], 1
    %4251 = vsyncpa %s4250, 1
    %4252 = vsyncpa [#allocation12], 1
    %s4253 = scalar_lea.sflag [#allocation12], 1
    %4254 = vsyncpa %s4253, 1

</llo_original>
